<compile_context>
chip_gen: v7x
topology: tpu7x:2x2x1
jax: 0.10.0
libtpu: 0.0.40
codegen_flags: <defaults>
</compile_context>

<pallas_src>
import jax
import jax.numpy as jnp
from jax import lax
from jax.experimental import pallas as pl
from jax.experimental.pallas import tpu as pltpu


# ----------------------------------------------------------------------------
# Kernel: encoder GRU step + full unrolled decoder loop (embedding, GRU, linear,
# greedy argmax, teacher-forcing mix, EOS early-stop masking, batched log_softmax).
# ----------------------------------------------------------------------------
def seq2seq_kernel(
    meta_ref,    # SMEM int32 (2 + 2T,): [sos, eos, targets(T), tf_flags(T)]
    src_ref,     # (1, IN)        last source frame
    e_w_ref,     # (IN, 3*BW)     encoder W_ih, gate blocks [r|z|n] each 128-lane wide
    d_w_ref,     # (2, H, 3*BW)   [0]=decoder W_ih [r|z|n_i], [1]=decoder W_hh [r|z|n_h]
    b_ref,       # (4, 3*BW)      rows: enc_i, enc_h, dec_i, dec_h bias vectors
    emb_ref,     # (V, BW)        decoder embedding table (lane padded)
    out_p_ref,   # (H+1, V)       rows 0..H-1 = out weight, row H = out bias
    out_ref,     # (Tp, V)        output log-probabilities (row-padded)
):
    f32 = jnp.float32
    BW = b_ref.shape[1] // 3          # 128-lane-aligned gate block width
    H = d_w_ref.shape[1]              # true hidden size
    V = out_ref.shape[1]
    Tp = out_ref.shape[0]
    T = (meta_ref.shape[0] - 2) // 2

    sos = meta_ref[0]
    eos = meta_ref[1]

    # small constants / weights hoisted out of the unrolled loop (stay in vregs)
    ow = out_p_ref[0:H, :]                                               # (H, V)
    ob = out_p_ref[H:H + 1, :]                                           # (1, V)
    b_di = b_ref[2:3, :]                                                 # (1, 3BW)
    b_dh = b_ref[3:4, :]                                                 # (1, 3BW)
    neg_iota = -lax.broadcasted_iota(jnp.int32, (1, V), 1).astype(f32)   # 0,-1,-2,...

    def gru_combine(gi, gh, h_prev):
        # gi/gh: (1, 3BW) packed pre-activations, gate blocks [r | z | n], biases folded.
        # r = sig(gi_r+gh_r), z = sig(gi_z+gh_z), n = tanh(gi_n + r*gh_n)
        r = jax.nn.sigmoid(gi[:, 0:BW] + gh[:, 0:BW])                    # (1, BW)
        z = jax.nn.sigmoid(gi[:, BW:2 * BW] + gh[:, BW:2 * BW])[:, 0:H]  # (1, H)
        n = jnp.tanh(gi[:, 2 * BW:3 * BW] + r * gh[:, 2 * BW:3 * BW])[:, 0:H]
        return (1.0 - z) * n + z * h_prev                                # (1, H)

    # ---------------- Encoder: one GRU step on the last frame, h0 == 0 -------
    gi_e = (jnp.dot(src_ref[...], e_w_ref[...], preferred_element_type=f32)
            + b_ref[0:1, :])
    h0 = gru_combine(gi_e, b_ref[1:2, :], jnp.zeros((1, H), f32))        # gh == bias only

    out_ref[...] = jnp.zeros((Tp, V), f32)

    # ---------------- Decoder: fully unrolled greedy / teacher-forced loop ---
    def body(t, carry):
        h, inp, done, n_valid = carry        # (1,H) f32, i32, i32, i32

        # embedding row gather + relu  (DecoderRNN.forward)
        xe = jnp.maximum(emb_ref[pl.ds(inp, 1), :][:, 0:H], 0.0)         # (1, H)

        # token-dependent i-side gates (on the serial critical path)
        gi = jnp.dot(xe, d_w_ref[0], preferred_element_type=f32) + b_di  # (1, 3BW)
        # h-dependent side: independent of the token, overlaps the previous step's
        # argmax -> scalar extract -> gather chain in the unrolled schedule.
        gh = jnp.dot(h, d_w_ref[1], preferred_element_type=f32) + b_dh   # (1, 3BW)
        h_new = gru_combine(gi, gh, h)                                   # (1, H)

        # output projection; raw logits stored now, log_softmax deferred to epilogue
        logits = jnp.dot(h_new, ow, preferred_element_type=f32) + ob     # (1, V)
        out_ref[pl.ds(t, 1), :] = logits

        # greedy token == first argmax (torch.topk(1) tie-break); lane-max only
        m = jnp.max(logits, axis=-1, keepdims=True)
        neg_best = jnp.max(jnp.where(logits >= m, neg_iota, -jnp.float32(V)),
                           axis=-1, keepdims=True)                       # (1,1)
        greedy = (-neg_best[0, 0]).astype(jnp.int32)                     # scalar

        tf = meta_ref[2 + T + t]             # teacher-force flag (0/1) for step t
        tgt = meta_ref[2 + t]                # target token id for step t
        nxt = jnp.where(tf == 1, tgt, greedy)
        n_valid = n_valid + (done == 0).astype(jnp.int32)                # row t valid?
        hit_eos = jnp.logical_and(tf == 0, greedy == eos)
        done = jnp.where(hit_eos, jnp.int32(1), done)
        return (h_new, nxt, done, n_valid)

    _, _, _, n_valid = lax.fori_loop(
        0, T, body, (h0, sos, jnp.int32(0), jnp.int32(0)), unroll=True)

    # ---------------- Epilogue: batched log_softmax + EOS-break zero mask ----
    logits_all = out_ref[...]                                            # (Tp, V)
    m = jnp.max(logits_all, axis=-1, keepdims=True)
    lse = m + jnp.log(jnp.sum(jnp.exp(logits_all - m), axis=-1, keepdims=True))
    rows = lax.broadcasted_iota(jnp.int32, (Tp, V), 0)
    out_ref[...] = jnp.where(rows < n_valid, logits_all - lse, 0.0)


# ----------------------------------------------------------------------------
# Wrapper: parameter packing (gate blocks, bias folding) in plain JAX.
# ----------------------------------------------------------------------------
def _pad_cols(a, width):
    return jnp.pad(a, ((0, 0), (0, width - a.shape[1])))


def seq2seq_forward(source_tensor, target_tensor, params, tf_flags,
                    sos_token, eos_token):
    L, B, IN = source_tensor.shape
    T = target_tensor.shape[0]
    H = params["emb"].shape[1]
    V = params["outw"].shape[1]
    assert B == 1, "PyTorch code implies batch_size == 1 (decoder_input = [SOS])"
    f32 = jnp.float32

    BW = ((H + 127) // 128) * 128          # 128-lane aligned gate block width
    Tp = ((T + 7) // 8) * 8                # pad output rows to full sublane tiles

    def pack_gates(ws):                    # 3 x (K, H) -> (K, 3*BW), blocks [g0|g1|g2]
        return jnp.concatenate([_pad_cols(ws[g], BW) for g in range(3)], axis=1)

    def pack_bias_i(bih, bhh):             # (1,3BW): [bih_r+bhh_r | bih_z+bhh_z | bih_n]
        return jnp.concatenate([_pad_cols(bih[0] + bhh[0], BW),
                                _pad_cols(bih[1] + bhh[1], BW),
                                _pad_cols(bih[2], BW)], axis=1)

    def pack_bias_h(bhh):                  # (1,3BW): [0 | 0 | bhh_n]
        return jnp.concatenate([jnp.zeros((1, 2 * BW), f32),
                                _pad_cols(bhh[2], BW)], axis=1)

    e_w = pack_gates(params["e_wih"])                                    # (IN, 3BW)
    d_w = jnp.stack([pack_gates(params["d_wih"]),
                     pack_gates(params["d_whh"])], axis=0)               # (2, H, 3BW)
    b_all = jnp.concatenate([
        pack_bias_i(params["e_bih"], params["e_bhh"]),
        pack_bias_h(params["e_bhh"]),
        pack_bias_i(params["d_bih"], params["d_bhh"]),
        pack_bias_h(params["d_bhh"]),
    ], axis=0)                                                           # (4, 3BW)

    emb_p = _pad_cols(params["emb"], BW)                                 # (V, BW)
    out_p = jnp.concatenate([params["outw"], params["outb"]], axis=0)    # (H+1, V)

    src_last = source_tensor[L - 1].reshape(1, IN).astype(f32)

    # all scalar control data in one SMEM array: [sos, eos, targets(T), tf(T)]
    # TODO(synk): PyTorch uses python random.random() per step for teacher forcing;
    # replaced by a deterministic precomputed flag vector.
    meta = jnp.concatenate([
        jnp.array([sos_token, eos_token], jnp.int32),
        target_tensor[:, 0].astype(jnp.int32),
        (tf_flags > 0.5).astype(jnp.int32),
    ])

    vmem = pl.BlockSpec(memory_space=pltpu.MemorySpace.VMEM)
    smem = pl.BlockSpec(memory_space=pltpu.MemorySpace.SMEM)
    out = pl.pallas_call(
        seq2seq_kernel,
        out_shape=jax.ShapeDtypeStruct((Tp, V), f32),
        in_specs=[smem, vmem, vmem, vmem, vmem, vmem, vmem],
        out_specs=vmem,
    )(meta, src_last, e_w, d_w, b_all, emb_p, out_p)
    return out[:T].reshape(T, 1, V)


# ----------------------------------------------------------------------------
# Pure-JAX reference (same semantics) for a correctness check.
# ----------------------------------------------------------------------------
def seq2seq_reference(source_tensor, target_tensor, params, tf_flags,
                      sos_token, eos_token):
    L, B, IN = source_tensor.shape
    T = target_tensor.shape[0]
    V = params["outw"].shape[1]
    H = params["e_wih"].shape[2]
    x = source_tensor[L - 1].reshape(1, IN)

    def gru(xv, h, wih, whh, bih, bhh):
        r = jax.nn.sigmoid(xv @ wih[0] + bih[0] + h @ whh[0] + bhh[0])
        z = jax.nn.sigmoid(xv @ wih[1] + bih[1] + h @ whh[1] + bhh[1])
        n = jnp.tanh(xv @ wih[2] + bih[2] + r * (h @ whh[2] + bhh[2]))
        return (1.0 - z) * n + z * h

    zeros_whh = jnp.zeros((3, H, H))
    h = gru(x, jnp.zeros((1, H)),
            params["e_wih"], zeros_whh, params["e_bih"], params["e_bhh"])

    outputs = jnp.zeros((T, 1, V), jnp.float32)
    inp = int(sos_token)
    done = False
    for t in range(T):
        if done:
            break
        xe = jnp.maximum(params["emb"][inp:inp + 1], 0.0)
        h = gru(xe, h, params["d_wih"], params["d_whh"],
                params["d_bih"], params["d_bhh"])
        logits = h @ params["outw"] + params["outb"]
        logp = jax.nn.log_softmax(logits, axis=-1)
        outputs = outputs.at[t].set(logp)
        topi = int(jnp.argmax(logp, axis=-1)[0])
        if bool(tf_flags[t] > 0.5):
            inp = int(target_tensor[t, 0])
        else:
            inp = topi
            if inp == int(eos_token):
                done = True
    return outputs


if __name__ == "__main__":
    IN, H, V = 32, 32, 128      # keypoint-feature dim, hidden dim, vocab size
    L, T = 8, 6                 # source length, target length
    SOS_token, EOS_token = 1, 2

    key = jax.random.PRNGKey(0)
    ks = jax.random.split(key, 16)
    s = 0.1
    params = {
        "e_wih": jax.random.normal(ks[0], (3, IN, H), jnp.float32) * s,
        "e_bih": jax.random.normal(ks[1], (3, 1, H), jnp.float32) * s,
        "e_bhh": jax.random.normal(ks[2], (3, 1, H), jnp.float32) * s,
        "emb":   jax.random.normal(ks[3], (V, H), jnp.float32) * s,
        "d_wih": jax.random.normal(ks[4], (3, H, H), jnp.float32) * s,
        "d_whh": jax.random.normal(ks[5], (3, H, H), jnp.float32) * s,
        "d_bih": jax.random.normal(ks[6], (3, 1, H), jnp.float32) * s,
        "d_bhh": jax.random.normal(ks[7], (3, 1, H), jnp.float32) * s,
        "outw":  jax.random.normal(ks[8], (H, V), jnp.float32) * s,
        "outb":  jax.random.normal(ks[9], (1, V), jnp.float32) * s,
    }

    source_tensor = jax.random.normal(ks[10], (L, 1, IN), jnp.float32)
    target_tensor = jax.random.randint(ks[11], (T, 1), 0, V, jnp.int32)
    tf_flags = (jax.random.uniform(ks[12], (T,)) < 0.5).astype(jnp.float32)

    out = seq2seq_forward(source_tensor, target_tensor, params, tf_flags,
                          SOS_token, EOS_token)
    out = jax.block_until_ready(out)

    ref = seq2seq_reference(source_tensor, target_tensor, params, tf_flags,
                            SOS_token, EOS_token)
    assert out.shape == (T, 1, V)
    assert jnp.allclose(out, ref, atol=2e-3, rtol=2e-3), "mismatch vs reference"
    print("KERNEL_OK")
</pallas_src>

<mosaic_0001>
module attributes {stable_mosaic.version = 11 : i64} {
  func.func @seq2seq_kernel(%arg0: memref<14xi32, #tpu.memory_space<smem>>, %arg1: memref<1x32xf32, #tpu.memory_space<vmem>>, %arg2: memref<32x384xf32, #tpu.memory_space<vmem>>, %arg3: memref<2x32x384xf32, #tpu.memory_space<vmem>>, %arg4: memref<4x384xf32, #tpu.memory_space<vmem>>, %arg5: memref<128x128xf32, #tpu.memory_space<vmem>>, %arg6: memref<33x128xf32, #tpu.memory_space<vmem>>, %arg7: memref<8x128xf32, #tpu.memory_space<vmem>>) attributes {dimension_semantics = [], scalar_prefetch = 0 : i64, scratch_operands = 0 : i64, tpu.core_type = #tpu.core_type<tc>} {
    %c0 = arith.constant 0 : index
    %0 = memref.load %arg0[%c0] : memref<14xi32, #tpu.memory_space<smem>>
    %c1 = arith.constant 1 : index
    %1 = memref.load %arg0[%c1] : memref<14xi32, #tpu.memory_space<smem>>
    %c0_0 = arith.constant 0 : index
    %c0_1 = arith.constant 0 : index
    %2 = vector.load %arg6[%c0_0, %c0_1] : memref<33x128xf32, #tpu.memory_space<vmem>>, vector<32x128xf32>
    %c32 = arith.constant 32 : index
    %c0_2 = arith.constant 0 : index
    %3 = vector.load %arg6[%c32, %c0_2] : memref<33x128xf32, #tpu.memory_space<vmem>>, vector<1x128xf32>
    %c2 = arith.constant 2 : index
    %c0_3 = arith.constant 0 : index
    %4 = vector.load %arg4[%c2, %c0_3] : memref<4x384xf32, #tpu.memory_space<vmem>>, vector<1x384xf32>
    %c3 = arith.constant 3 : index
    %c0_4 = arith.constant 0 : index
    %5 = vector.load %arg4[%c3, %c0_4] : memref<4x384xf32, #tpu.memory_space<vmem>>, vector<1x384xf32>
    %6 = tpu.iota {dimensions = array<i32: 1>} : vector<1x128xi32>
    %7 = arith.sitofp %6 : vector<1x128xi32> to vector<1x128xf32>
    %cst = arith.constant 0.000000e+00 : f32
    %8 = vector.broadcast %cst : f32 to vector<1x128xf32>
    %9 = arith.subf %8, %7 : vector<1x128xf32>
    %c0_5 = arith.constant 0 : index
    %c0_6 = arith.constant 0 : index
    %10 = vector.load %arg1[%c0_5, %c0_6] : memref<1x32xf32, #tpu.memory_space<vmem>>, vector<1x32xf32>
    %c0_7 = arith.constant 0 : index
    %c0_8 = arith.constant 0 : index
    %11 = vector.load %arg2[%c0_7, %c0_8] : memref<32x384xf32, #tpu.memory_space<vmem>>, vector<32x384xf32>
    %cst_9 = arith.constant dense<0.000000e+00> : vector<1x384xf32>
    %12 = tpu.matmul %10, %11, %cst_9 {dimension_numbers = #tpu.dot_dimension_numbers<[1], [0], [0], [1], [0, 0, 1, 1], [], []>} : vector<1x32xf32>, vector<32x384xf32>, vector<1x384xf32> -> vector<1x384xf32>
    %c0_10 = arith.constant 0 : index
    %c0_11 = arith.constant 0 : index
    %13 = vector.load %arg4[%c0_10, %c0_11] : memref<4x384xf32, #tpu.memory_space<vmem>>, vector<1x384xf32>
    %14 = arith.addf %12, %13 : vector<1x384xf32>
    %c1_12 = arith.constant 1 : index
    %c0_13 = arith.constant 0 : index
    %15 = vector.load %arg4[%c1_12, %c0_13] : memref<4x384xf32, #tpu.memory_space<vmem>>, vector<1x384xf32>
    %cst_14 = arith.constant 0.000000e+00 : f32
    %16 = vector.broadcast %cst_14 : f32 to vector<1x32xf32>
    %17 = vector.extract_strided_slice %14 {offsets = [0, 0], sizes = [1, 128], strides = [1, 1]} : vector<1x384xf32> to vector<1x128xf32>
    %18 = vector.extract_strided_slice %15 {offsets = [0, 0], sizes = [1, 128], strides = [1, 1]} : vector<1x384xf32> to vector<1x128xf32>
    %19 = arith.addf %17, %18 : vector<1x128xf32>
    %20 = arith.negf %19 : vector<1x128xf32>
    %21 = math.exp %20 : vector<1x128xf32>
    %cst_15 = arith.constant 1.000000e+00 : f32
    %22 = vector.broadcast %cst_15 : f32 to vector<1x128xf32>
    %23 = arith.addf %22, %21 : vector<1x128xf32>
    %24 = arith.divf %22, %23 : vector<1x128xf32>
    %25 = vector.extract_strided_slice %14 {offsets = [0, 128], sizes = [1, 128], strides = [1, 1]} : vector<1x384xf32> to vector<1x128xf32>
    %26 = vector.extract_strided_slice %15 {offsets = [0, 128], sizes = [1, 128], strides = [1, 1]} : vector<1x384xf32> to vector<1x128xf32>
    %27 = arith.addf %25, %26 : vector<1x128xf32>
    %28 = arith.negf %27 : vector<1x128xf32>
    %29 = math.exp %28 : vector<1x128xf32>
    %cst_16 = arith.constant 1.000000e+00 : f32
    %30 = vector.broadcast %cst_16 : f32 to vector<1x128xf32>
    %31 = arith.addf %30, %29 : vector<1x128xf32>
    %32 = arith.divf %30, %31 : vector<1x128xf32>
    %33 = vector.extract_strided_slice %32 {offsets = [0, 0], sizes = [1, 32], strides = [1, 1]} : vector<1x128xf32> to vector<1x32xf32>
    %34 = vector.extract_strided_slice %14 {offsets = [0, 256], sizes = [1, 128], strides = [1, 1]} : vector<1x384xf32> to vector<1x128xf32>
    %35 = vector.extract_strided_slice %15 {offsets = [0, 256], sizes = [1, 128], strides = [1, 1]} : vector<1x384xf32> to vector<1x128xf32>
    %36 = arith.mulf %24, %35 : vector<1x128xf32>
    %37 = arith.addf %34, %36 : vector<1x128xf32>
    %38 = math.tanh %37 : vector<1x128xf32>
    %39 = vector.extract_strided_slice %38 {offsets = [0, 0], sizes = [1, 32], strides = [1, 1]} : vector<1x128xf32> to vector<1x32xf32>
    %cst_17 = arith.constant 1.000000e+00 : f32
    %40 = vector.broadcast %cst_17 : f32 to vector<1x32xf32>
    %41 = arith.subf %40, %33 : vector<1x32xf32>
    %42 = arith.mulf %41, %39 : vector<1x32xf32>
    %43 = arith.mulf %33, %16 : vector<1x32xf32>
    %44 = arith.addf %42, %43 : vector<1x32xf32>
    %cst_18 = arith.constant 0.000000e+00 : f32
    %45 = vector.broadcast %cst_18 : f32 to vector<8x128xf32>
    %c0_19 = arith.constant 0 : index
    %c0_20 = arith.constant 0 : index
    %46 = vector.load %arg7[%c0_19, %c0_20] : memref<8x128xf32, #tpu.memory_space<vmem>>, vector<8x128xf32>
    tpu.vector_store %arg7[%c0_19, %c0_20], %45 {strides = array<i32>} : memref<8x128xf32, #tpu.memory_space<vmem>>, vector<8x128xf32>,
    %c0_i32 = arith.constant 0 : i32
    %c0_i32_21 = arith.constant 0 : i32
    %c0_i32_22 = arith.constant 0 : i32
    %47 = arith.index_cast %0 : i32 to index
    %c0_23 = arith.constant 0 : index
    %48 = vector.load %arg5[%47, %c0_23] : memref<128x128xf32, #tpu.memory_space<vmem>>, vector<1x128xf32>
    %49 = vector.extract_strided_slice %48 {offsets = [0, 0], sizes = [1, 32], strides = [1, 1]} : vector<1x128xf32> to vector<1x32xf32>
    %cst_24 = arith.constant 0.000000e+00 : f32
    %50 = vector.broadcast %cst_24 : f32 to vector<1x32xf32>
    %51 = arith.maximumf %49, %50 : vector<1x32xf32>
    %c0_25 = arith.constant 0 : index
    %c0_26 = arith.constant 0 : index
    %c0_27 = arith.constant 0 : index
    %52 = vector.load %arg3[%c0_25, %c0_26, %c0_27] : memref<2x32x384xf32, #tpu.memory_space<vmem>>, vector<1x32x384xf32>
    %53 = vector.shape_cast %52 : vector<1x32x384xf32> to vector<32x384xf32>
    %cst_28 = arith.constant dense<0.000000e+00> : vector<1x384xf32>
    %54 = tpu.matmul %51, %53, %cst_28 {dimension_numbers = #tpu.dot_dimension_numbers<[1], [0], [0], [1], [0, 0, 1, 1], [], []>} : vector<1x32xf32>, vector<32x384xf32>, vector<1x384xf32> -> vector<1x384xf32>
    %55 = arith.addf %54, %4 : vector<1x384xf32>
    %c1_29 = arith.constant 1 : index
    %c0_30 = arith.constant 0 : index
    %c0_31 = arith.constant 0 : index
    %56 = vector.load %arg3[%c1_29, %c0_30, %c0_31] : memref<2x32x384xf32, #tpu.memory_space<vmem>>, vector<1x32x384xf32>
    %57 = vector.shape_cast %56 : vector<1x32x384xf32> to vector<32x384xf32>
    %cst_32 = arith.constant dense<0.000000e+00> : vector<1x384xf32>
    %58 = tpu.matmul %44, %57, %cst_32 {dimension_numbers = #tpu.dot_dimension_numbers<[1], [0], [0], [1], [0, 0, 1, 1], [], []>} : vector<1x32xf32>, vector<32x384xf32>, vector<1x384xf32> -> vector<1x384xf32>
    %59 = arith.addf %58, %5 : vector<1x384xf32>
    %60 = vector.extract_strided_slice %55 {offsets = [0, 0], sizes = [1, 128], strides = [1, 1]} : vector<1x384xf32> to vector<1x128xf32>
    %61 = vector.extract_strided_slice %59 {offsets = [0, 0], sizes = [1, 128], strides = [1, 1]} : vector<1x384xf32> to vector<1x128xf32>
    %62 = arith.addf %60, %61 : vector<1x128xf32>
    %63 = arith.negf %62 : vector<1x128xf32>
    %64 = math.exp %63 : vector<1x128xf32>
    %cst_33 = arith.constant 1.000000e+00 : f32
    %65 = vector.broadcast %cst_33 : f32 to vector<1x128xf32>
    %66 = arith.addf %65, %64 : vector<1x128xf32>
    %67 = arith.divf %65, %66 : vector<1x128xf32>
    %68 = vector.extract_strided_slice %55 {offsets = [0, 128], sizes = [1, 128], strides = [1, 1]} : vector<1x384xf32> to vector<1x128xf32>
    %69 = vector.extract_strided_slice %59 {offsets = [0, 128], sizes = [1, 128], strides = [1, 1]} : vector<1x384xf32> to vector<1x128xf32>
    %70 = arith.addf %68, %69 : vector<1x128xf32>
    %71 = arith.negf %70 : vector<1x128xf32>
    %72 = math.exp %71 : vector<1x128xf32>
    %cst_34 = arith.constant 1.000000e+00 : f32
    %73 = vector.broadcast %cst_34 : f32 to vector<1x128xf32>
    %74 = arith.addf %73, %72 : vector<1x128xf32>
    %75 = arith.divf %73, %74 : vector<1x128xf32>
    %76 = vector.extract_strided_slice %75 {offsets = [0, 0], sizes = [1, 32], strides = [1, 1]} : vector<1x128xf32> to vector<1x32xf32>
    %77 = vector.extract_strided_slice %55 {offsets = [0, 256], sizes = [1, 128], strides = [1, 1]} : vector<1x384xf32> to vector<1x128xf32>
    %78 = vector.extract_strided_slice %59 {offsets = [0, 256], sizes = [1, 128], strides = [1, 1]} : vector<1x384xf32> to vector<1x128xf32>
    %79 = arith.mulf %67, %78 : vector<1x128xf32>
    %80 = arith.addf %77, %79 : vector<1x128xf32>
    %81 = math.tanh %80 : vector<1x128xf32>
    %82 = vector.extract_strided_slice %81 {offsets = [0, 0], sizes = [1, 32], strides = [1, 1]} : vector<1x128xf32> to vector<1x32xf32>
    %cst_35 = arith.constant 1.000000e+00 : f32
    %83 = vector.broadcast %cst_35 : f32 to vector<1x32xf32>
    %84 = arith.subf %83, %76 : vector<1x32xf32>
    %85 = arith.mulf %84, %82 : vector<1x32xf32>
    %86 = arith.mulf %76, %44 : vector<1x32xf32>
    %87 = arith.addf %85, %86 : vector<1x32xf32>
    %cst_36 = arith.constant dense<0.000000e+00> : vector<1x128xf32>
    %88 = tpu.matmul %87, %2, %cst_36 {dimension_numbers = #tpu.dot_dimension_numbers<[1], [0], [0], [1], [0, 0, 1, 1], [], []>} : vector<1x32xf32>, vector<32x128xf32>, vector<1x128xf32> -> vector<1x128xf32>
    %89 = arith.addf %88, %3 : vector<1x128xf32>
    %90 = arith.index_cast %c0_i32_22 : i32 to index
    %c0_37 = arith.constant 0 : index
    %91 = vector.load %arg7[%90, %c0_37] : memref<8x128xf32, #tpu.memory_space<vmem>>, vector<1x128xf32>
    tpu.vector_store %arg7[%90, %c0_37], %89 {strides = array<i32>} : memref<8x128xf32, #tpu.memory_space<vmem>>, vector<1x128xf32>,
    %cst_38 = arith.constant dense<0xFF800000> : vector<1xf32>
    %92 = vector.multi_reduction <maximumf>, %89, %cst_38 [1] : vector<1x128xf32> to vector<1xf32>
    %93 = vector.shape_cast %92 : vector<1xf32> to vector<1x1xf32>
    %94 = vector.broadcast %93 : vector<1x1xf32> to vector<1x128xf32>
    %95 = arith.cmpf oge, %89, %94 : vector<1x128xf32>
    %cst_39 = arith.constant 0.000000e+00 : f32
    %cst_40 = arith.constant 1.280000e+02 : f32
    %96 = arith.subf %cst_39, %cst_40 : f32
    %97 = vector.broadcast %96 : f32 to vector<1x128xf32>
    %98 = arith.select %95, %9, %97 : vector<1x128xi1>, vector<1x128xf32>
    %cst_41 = arith.constant dense<0xFF800000> : vector<1xf32>
    %99 = vector.multi_reduction <maximumf>, %98, %cst_41 [1] : vector<1x128xf32> to vector<1xf32>
    %100 = vector.shape_cast %99 : vector<1xf32> to vector<1x1xf32>
    %101 = vector.extract %100[0, 0] : f32 from vector<1x1xf32>
    %cst_42 = arith.constant 0.000000e+00 : f32
    %102 = arith.subf %cst_42, %101 : f32
    %103 = arith.fptosi %102 : f32 to i32
    %c8_i32 = arith.constant 8 : i32
    %104 = arith.addi %c8_i32, %c0_i32_22 : i32
    %105 = arith.index_cast %104 : i32 to index
    %106 = memref.load %arg0[%105] : memref<14xi32, #tpu.memory_space<smem>>
    %c2_i32 = arith.constant 2 : i32
    %107 = arith.addi %c2_i32, %c0_i32_22 : i32
    %108 = arith.index_cast %107 : i32 to index
    %109 = memref.load %arg0[%108] : memref<14xi32, #tpu.memory_space<smem>>
    %c1_i32 = arith.constant 1 : i32
    %110 = arith.cmpi eq, %106, %c1_i32 : i32
    %111 = arith.select %110, %109, %103 : i32
    %c0_i32_43 = arith.constant 0 : i32
    %112 = arith.cmpi eq, %c0_i32, %c0_i32_43 : i32
    %113 = arith.extui %112 : i1 to i32
    %114 = arith.addi %c0_i32_21, %113 : i32
    %c0_i32_44 = arith.constant 0 : i32
    %115 = arith.cmpi eq, %106, %c0_i32_44 : i32
    %116 = arith.cmpi eq, %103, %1 : i32
    %117 = arith.andi %115, %116 : i1
    %c1_i32_45 = arith.constant 1 : i32
    %118 = arith.select %117, %c1_i32_45, %c0_i32 : i32
    %c1_i32_46 = arith.constant 1 : i32
    %119 = arith.index_cast %111 : i32 to index
    %c0_47 = arith.constant 0 : index
    %120 = vector.load %arg5[%119, %c0_47] : memref<128x128xf32, #tpu.memory_space<vmem>>, vector<1x128xf32>
    %121 = vector.extract_strided_slice %120 {offsets = [0, 0], sizes = [1, 32], strides = [1, 1]} : vector<1x128xf32> to vector<1x32xf32>
    %cst_48 = arith.constant 0.000000e+00 : f32
    %122 = vector.broadcast %cst_48 : f32 to vector<1x32xf32>
    %123 = arith.maximumf %121, %122 : vector<1x32xf32>
    %c0_49 = arith.constant 0 : index
    %c0_50 = arith.constant 0 : index
    %c0_51 = arith.constant 0 : index
    %124 = vector.load %arg3[%c0_49, %c0_50, %c0_51] : memref<2x32x384xf32, #tpu.memory_space<vmem>>, vector<1x32x384xf32>
    %125 = vector.shape_cast %124 : vector<1x32x384xf32> to vector<32x384xf32>
    %cst_52 = arith.constant dense<0.000000e+00> : vector<1x384xf32>
    %126 = tpu.matmul %123, %125, %cst_52 {dimension_numbers = #tpu.dot_dimension_numbers<[1], [0], [0], [1], [0, 0, 1, 1], [], []>} : vector<1x32xf32>, vector<32x384xf32>, vector<1x384xf32> -> vector<1x384xf32>
    %127 = arith.addf %126, %4 : vector<1x384xf32>
    %c1_53 = arith.constant 1 : index
    %c0_54 = arith.constant 0 : index
    %c0_55 = arith.constant 0 : index
    %128 = vector.load %arg3[%c1_53, %c0_54, %c0_55] : memref<2x32x384xf32, #tpu.memory_space<vmem>>, vector<1x32x384xf32>
    %129 = vector.shape_cast %128 : vector<1x32x384xf32> to vector<32x384xf32>
    %cst_56 = arith.constant dense<0.000000e+00> : vector<1x384xf32>
    %130 = tpu.matmul %87, %129, %cst_56 {dimension_numbers = #tpu.dot_dimension_numbers<[1], [0], [0], [1], [0, 0, 1, 1], [], []>} : vector<1x32xf32>, vector<32x384xf32>, vector<1x384xf32> -> vector<1x384xf32>
    %131 = arith.addf %130, %5 : vector<1x384xf32>
    %132 = vector.extract_strided_slice %127 {offsets = [0, 0], sizes = [1, 128], strides = [1, 1]} : vector<1x384xf32> to vector<1x128xf32>
    %133 = vector.extract_strided_slice %131 {offsets = [0, 0], sizes = [1, 128], strides = [1, 1]} : vector<1x384xf32> to vector<1x128xf32>
    %134 = arith.addf %132, %133 : vector<1x128xf32>
    %135 = arith.negf %134 : vector<1x128xf32>
    %136 = math.exp %135 : vector<1x128xf32>
    %cst_57 = arith.constant 1.000000e+00 : f32
    %137 = vector.broadcast %cst_57 : f32 to vector<1x128xf32>
    %138 = arith.addf %137, %136 : vector<1x128xf32>
    %139 = arith.divf %137, %138 : vector<1x128xf32>
    %140 = vector.extract_strided_slice %127 {offsets = [0, 128], sizes = [1, 128], strides = [1, 1]} : vector<1x384xf32> to vector<1x128xf32>
    %141 = vector.extract_strided_slice %131 {offsets = [0, 128], sizes = [1, 128], strides = [1, 1]} : vector<1x384xf32> to vector<1x128xf32>
    %142 = arith.addf %140, %141 : vector<1x128xf32>
    %143 = arith.negf %142 : vector<1x128xf32>
    %144 = math.exp %143 : vector<1x128xf32>
    %cst_58 = arith.constant 1.000000e+00 : f32
    %145 = vector.broadcast %cst_58 : f32 to vector<1x128xf32>
    %146 = arith.addf %145, %144 : vector<1x128xf32>
    %147 = arith.divf %145, %146 : vector<1x128xf32>
    %148 = vector.extract_strided_slice %147 {offsets = [0, 0], sizes = [1, 32], strides = [1, 1]} : vector<1x128xf32> to vector<1x32xf32>
    %149 = vector.extract_strided_slice %127 {offsets = [0, 256], sizes = [1, 128], strides = [1, 1]} : vector<1x384xf32> to vector<1x128xf32>
    %150 = vector.extract_strided_slice %131 {offsets = [0, 256], sizes = [1, 128], strides = [1, 1]} : vector<1x384xf32> to vector<1x128xf32>
    %151 = arith.mulf %139, %150 : vector<1x128xf32>
    %152 = arith.addf %149, %151 : vector<1x128xf32>
    %153 = math.tanh %152 : vector<1x128xf32>
    %154 = vector.extract_strided_slice %153 {offsets = [0, 0], sizes = [1, 32], strides = [1, 1]} : vector<1x128xf32> to vector<1x32xf32>
    %cst_59 = arith.constant 1.000000e+00 : f32
    %155 = vector.broadcast %cst_59 : f32 to vector<1x32xf32>
    %156 = arith.subf %155, %148 : vector<1x32xf32>
    %157 = arith.mulf %156, %154 : vector<1x32xf32>
    %158 = arith.mulf %148, %87 : vector<1x32xf32>
    %159 = arith.addf %157, %158 : vector<1x32xf32>
    %cst_60 = arith.constant dense<0.000000e+00> : vector<1x128xf32>
    %160 = tpu.matmul %159, %2, %cst_60 {dimension_numbers = #tpu.dot_dimension_numbers<[1], [0], [0], [1], [0, 0, 1, 1], [], []>} : vector<1x32xf32>, vector<32x128xf32>, vector<1x128xf32> -> vector<1x128xf32>
    %161 = arith.addf %160, %3 : vector<1x128xf32>
    %162 = arith.index_cast %c1_i32_46 : i32 to index
    %c0_61 = arith.constant 0 : index
    %163 = vector.load %arg7[%162, %c0_61] : memref<8x128xf32, #tpu.memory_space<vmem>>, vector<1x128xf32>
    tpu.vector_store %arg7[%162, %c0_61], %161 {strides = array<i32>} : memref<8x128xf32, #tpu.memory_space<vmem>>, vector<1x128xf32>,
    %cst_62 = arith.constant dense<0xFF800000> : vector<1xf32>
    %164 = vector.multi_reduction <maximumf>, %161, %cst_62 [1] : vector<1x128xf32> to vector<1xf32>
    %165 = vector.shape_cast %164 : vector<1xf32> to vector<1x1xf32>
    %166 = vector.broadcast %165 : vector<1x1xf32> to vector<1x128xf32>
    %167 = arith.cmpf oge, %161, %166 : vector<1x128xf32>
    %cst_63 = arith.constant 0.000000e+00 : f32
    %cst_64 = arith.constant 1.280000e+02 : f32
    %168 = arith.subf %cst_63, %cst_64 : f32
    %169 = vector.broadcast %168 : f32 to vector<1x128xf32>
    %170 = arith.select %167, %9, %169 : vector<1x128xi1>, vector<1x128xf32>
    %cst_65 = arith.constant dense<0xFF800000> : vector<1xf32>
    %171 = vector.multi_reduction <maximumf>, %170, %cst_65 [1] : vector<1x128xf32> to vector<1xf32>
    %172 = vector.shape_cast %171 : vector<1xf32> to vector<1x1xf32>
    %173 = vector.extract %172[0, 0] : f32 from vector<1x1xf32>
    %cst_66 = arith.constant 0.000000e+00 : f32
    %174 = arith.subf %cst_66, %173 : f32
    %175 = arith.fptosi %174 : f32 to i32
    %c8_i32_67 = arith.constant 8 : i32
    %176 = arith.addi %c8_i32_67, %c1_i32_46 : i32
    %177 = arith.index_cast %176 : i32 to index
    %178 = memref.load %arg0[%177] : memref<14xi32, #tpu.memory_space<smem>>
    %c2_i32_68 = arith.constant 2 : i32
    %179 = arith.addi %c2_i32_68, %c1_i32_46 : i32
    %180 = arith.index_cast %179 : i32 to index
    %181 = memref.load %arg0[%180] : memref<14xi32, #tpu.memory_space<smem>>
    %c1_i32_69 = arith.constant 1 : i32
    %182 = arith.cmpi eq, %178, %c1_i32_69 : i32
    %183 = arith.select %182, %181, %175 : i32
    %c0_i32_70 = arith.constant 0 : i32
    %184 = arith.cmpi eq, %118, %c0_i32_70 : i32
    %185 = arith.extui %184 : i1 to i32
    %186 = arith.addi %114, %185 : i32
    %c0_i32_71 = arith.constant 0 : i32
    %187 = arith.cmpi eq, %178, %c0_i32_71 : i32
    %188 = arith.cmpi eq, %175, %1 : i32
    %189 = arith.andi %187, %188 : i1
    %c1_i32_72 = arith.constant 1 : i32
    %190 = arith.select %189, %c1_i32_72, %118 : i32
    %c2_i32_73 = arith.constant 2 : i32
    %191 = arith.index_cast %183 : i32 to index
    %c0_74 = arith.constant 0 : index
    %192 = vector.load %arg5[%191, %c0_74] : memref<128x128xf32, #tpu.memory_space<vmem>>, vector<1x128xf32>
    %193 = vector.extract_strided_slice %192 {offsets = [0, 0], sizes = [1, 32], strides = [1, 1]} : vector<1x128xf32> to vector<1x32xf32>
    %cst_75 = arith.constant 0.000000e+00 : f32
    %194 = vector.broadcast %cst_75 : f32 to vector<1x32xf32>
    %195 = arith.maximumf %193, %194 : vector<1x32xf32>
    %c0_76 = arith.constant 0 : index
    %c0_77 = arith.constant 0 : index
    %c0_78 = arith.constant 0 : index
    %196 = vector.load %arg3[%c0_76, %c0_77, %c0_78] : memref<2x32x384xf32, #tpu.memory_space<vmem>>, vector<1x32x384xf32>
    %197 = vector.shape_cast %196 : vector<1x32x384xf32> to vector<32x384xf32>
    %cst_79 = arith.constant dense<0.000000e+00> : vector<1x384xf32>
    %198 = tpu.matmul %195, %197, %cst_79 {dimension_numbers = #tpu.dot_dimension_numbers<[1], [0], [0], [1], [0, 0, 1, 1], [], []>} : vector<1x32xf32>, vector<32x384xf32>, vector<1x384xf32> -> vector<1x384xf32>
    %199 = arith.addf %198, %4 : vector<1x384xf32>
    %c1_80 = arith.constant 1 : index
    %c0_81 = arith.constant 0 : index
    %c0_82 = arith.constant 0 : index
    %200 = vector.load %arg3[%c1_80, %c0_81, %c0_82] : memref<2x32x384xf32, #tpu.memory_space<vmem>>, vector<1x32x384xf32>
    %201 = vector.shape_cast %200 : vector<1x32x384xf32> to vector<32x384xf32>
    %cst_83 = arith.constant dense<0.000000e+00> : vector<1x384xf32>
    %202 = tpu.matmul %159, %201, %cst_83 {dimension_numbers = #tpu.dot_dimension_numbers<[1], [0], [0], [1], [0, 0, 1, 1], [], []>} : vector<1x32xf32>, vector<32x384xf32>, vector<1x384xf32> -> vector<1x384xf32>
    %203 = arith.addf %202, %5 : vector<1x384xf32>
    %204 = vector.extract_strided_slice %199 {offsets = [0, 0], sizes = [1, 128], strides = [1, 1]} : vector<1x384xf32> to vector<1x128xf32>
    %205 = vector.extract_strided_slice %203 {offsets = [0, 0], sizes = [1, 128], strides = [1, 1]} : vector<1x384xf32> to vector<1x128xf32>
    %206 = arith.addf %204, %205 : vector<1x128xf32>
    %207 = arith.negf %206 : vector<1x128xf32>
    %208 = math.exp %207 : vector<1x128xf32>
    %cst_84 = arith.constant 1.000000e+00 : f32
    %209 = vector.broadcast %cst_84 : f32 to vector<1x128xf32>
    %210 = arith.addf %209, %208 : vector<1x128xf32>
    %211 = arith.divf %209, %210 : vector<1x128xf32>
    %212 = vector.extract_strided_slice %199 {offsets = [0, 128], sizes = [1, 128], strides = [1, 1]} : vector<1x384xf32> to vector<1x128xf32>
    %213 = vector.extract_strided_slice %203 {offsets = [0, 128], sizes = [1, 128], strides = [1, 1]} : vector<1x384xf32> to vector<1x128xf32>
    %214 = arith.addf %212, %213 : vector<1x128xf32>
    %215 = arith.negf %214 : vector<1x128xf32>
    %216 = math.exp %215 : vector<1x128xf32>
    %cst_85 = arith.constant 1.000000e+00 : f32
    %217 = vector.broadcast %cst_85 : f32 to vector<1x128xf32>
    %218 = arith.addf %217, %216 : vector<1x128xf32>
    %219 = arith.divf %217, %218 : vector<1x128xf32>
    %220 = vector.extract_strided_slice %219 {offsets = [0, 0], sizes = [1, 32], strides = [1, 1]} : vector<1x128xf32> to vector<1x32xf32>
    %221 = vector.extract_strided_slice %199 {offsets = [0, 256], sizes = [1, 128], strides = [1, 1]} : vector<1x384xf32> to vector<1x128xf32>
    %222 = vector.extract_strided_slice %203 {offsets = [0, 256], sizes = [1, 128], strides = [1, 1]} : vector<1x384xf32> to vector<1x128xf32>
    %223 = arith.mulf %211, %222 : vector<1x128xf32>
    %224 = arith.addf %221, %223 : vector<1x128xf32>
    %225 = math.tanh %224 : vector<1x128xf32>
    %226 = vector.extract_strided_slice %225 {offsets = [0, 0], sizes = [1, 32], strides = [1, 1]} : vector<1x128xf32> to vector<1x32xf32>
    %cst_86 = arith.constant 1.000000e+00 : f32
    %227 = vector.broadcast %cst_86 : f32 to vector<1x32xf32>
    %228 = arith.subf %227, %220 : vector<1x32xf32>
    %229 = arith.mulf %228, %226 : vector<1x32xf32>
    %230 = arith.mulf %220, %159 : vector<1x32xf32>
    %231 = arith.addf %229, %230 : vector<1x32xf32>
    %cst_87 = arith.constant dense<0.000000e+00> : vector<1x128xf32>
    %232 = tpu.matmul %231, %2, %cst_87 {dimension_numbers = #tpu.dot_dimension_numbers<[1], [0], [0], [1], [0, 0, 1, 1], [], []>} : vector<1x32xf32>, vector<32x128xf32>, vector<1x128xf32> -> vector<1x128xf32>
    %233 = arith.addf %232, %3 : vector<1x128xf32>
    %234 = arith.index_cast %c2_i32_73 : i32 to index
    %c0_88 = arith.constant 0 : index
    %235 = vector.load %arg7[%234, %c0_88] : memref<8x128xf32, #tpu.memory_space<vmem>>, vector<1x128xf32>
    tpu.vector_store %arg7[%234, %c0_88], %233 {strides = array<i32>} : memref<8x128xf32, #tpu.memory_space<vmem>>, vector<1x128xf32>,
    %cst_89 = arith.constant dense<0xFF800000> : vector<1xf32>
    %236 = vector.multi_reduction <maximumf>, %233, %cst_89 [1] : vector<1x128xf32> to vector<1xf32>
    %237 = vector.shape_cast %236 : vector<1xf32> to vector<1x1xf32>
    %238 = vector.broadcast %237 : vector<1x1xf32> to vector<1x128xf32>
    %239 = arith.cmpf oge, %233, %238 : vector<1x128xf32>
    %cst_90 = arith.constant 0.000000e+00 : f32
    %cst_91 = arith.constant 1.280000e+02 : f32
    %240 = arith.subf %cst_90, %cst_91 : f32
    %241 = vector.broadcast %240 : f32 to vector<1x128xf32>
    %242 = arith.select %239, %9, %241 : vector<1x128xi1>, vector<1x128xf32>
    %cst_92 = arith.constant dense<0xFF800000> : vector<1xf32>
    %243 = vector.multi_reduction <maximumf>, %242, %cst_92 [1] : vector<1x128xf32> to vector<1xf32>
    %244 = vector.shape_cast %243 : vector<1xf32> to vector<1x1xf32>
    %245 = vector.extract %244[0, 0] : f32 from vector<1x1xf32>
    %cst_93 = arith.constant 0.000000e+00 : f32
    %246 = arith.subf %cst_93, %245 : f32
    %247 = arith.fptosi %246 : f32 to i32
    %c8_i32_94 = arith.constant 8 : i32
    %248 = arith.addi %c8_i32_94, %c2_i32_73 : i32
    %249 = arith.index_cast %248 : i32 to index
    %250 = memref.load %arg0[%249] : memref<14xi32, #tpu.memory_space<smem>>
    %c2_i32_95 = arith.constant 2 : i32
    %251 = arith.addi %c2_i32_95, %c2_i32_73 : i32
    %252 = arith.index_cast %251 : i32 to index
    %253 = memref.load %arg0[%252] : memref<14xi32, #tpu.memory_space<smem>>
    %c1_i32_96 = arith.constant 1 : i32
    %254 = arith.cmpi eq, %250, %c1_i32_96 : i32
    %255 = arith.select %254, %253, %247 : i32
    %c0_i32_97 = arith.constant 0 : i32
    %256 = arith.cmpi eq, %190, %c0_i32_97 : i32
    %257 = arith.extui %256 : i1 to i32
    %258 = arith.addi %186, %257 : i32
    %c0_i32_98 = arith.constant 0 : i32
    %259 = arith.cmpi eq, %250, %c0_i32_98 : i32
    %260 = arith.cmpi eq, %247, %1 : i32
    %261 = arith.andi %259, %260 : i1
    %c1_i32_99 = arith.constant 1 : i32
    %262 = arith.select %261, %c1_i32_99, %190 : i32
    %c3_i32 = arith.constant 3 : i32
    %263 = arith.index_cast %255 : i32 to index
    %c0_100 = arith.constant 0 : index
    %264 = vector.load %arg5[%263, %c0_100] : memref<128x128xf32, #tpu.memory_space<vmem>>, vector<1x128xf32>
    %265 = vector.extract_strided_slice %264 {offsets = [0, 0], sizes = [1, 32], strides = [1, 1]} : vector<1x128xf32> to vector<1x32xf32>
    %cst_101 = arith.constant 0.000000e+00 : f32
    %266 = vector.broadcast %cst_101 : f32 to vector<1x32xf32>
    %267 = arith.maximumf %265, %266 : vector<1x32xf32>
    %c0_102 = arith.constant 0 : index
    %c0_103 = arith.constant 0 : index
    %c0_104 = arith.constant 0 : index
    %268 = vector.load %arg3[%c0_102, %c0_103, %c0_104] : memref<2x32x384xf32, #tpu.memory_space<vmem>>, vector<1x32x384xf32>
    %269 = vector.shape_cast %268 : vector<1x32x384xf32> to vector<32x384xf32>
    %cst_105 = arith.constant dense<0.000000e+00> : vector<1x384xf32>
    %270 = tpu.matmul %267, %269, %cst_105 {dimension_numbers = #tpu.dot_dimension_numbers<[1], [0], [0], [1], [0, 0, 1, 1], [], []>} : vector<1x32xf32>, vector<32x384xf32>, vector<1x384xf32> -> vector<1x384xf32>
    %271 = arith.addf %270, %4 : vector<1x384xf32>
    %c1_106 = arith.constant 1 : index
    %c0_107 = arith.constant 0 : index
    %c0_108 = arith.constant 0 : index
    %272 = vector.load %arg3[%c1_106, %c0_107, %c0_108] : memref<2x32x384xf32, #tpu.memory_space<vmem>>, vector<1x32x384xf32>
    %273 = vector.shape_cast %272 : vector<1x32x384xf32> to vector<32x384xf32>
    %cst_109 = arith.constant dense<0.000000e+00> : vector<1x384xf32>
    %274 = tpu.matmul %231, %273, %cst_109 {dimension_numbers = #tpu.dot_dimension_numbers<[1], [0], [0], [1], [0, 0, 1, 1], [], []>} : vector<1x32xf32>, vector<32x384xf32>, vector<1x384xf32> -> vector<1x384xf32>
    %275 = arith.addf %274, %5 : vector<1x384xf32>
    %276 = vector.extract_strided_slice %271 {offsets = [0, 0], sizes = [1, 128], strides = [1, 1]} : vector<1x384xf32> to vector<1x128xf32>
    %277 = vector.extract_strided_slice %275 {offsets = [0, 0], sizes = [1, 128], strides = [1, 1]} : vector<1x384xf32> to vector<1x128xf32>
    %278 = arith.addf %276, %277 : vector<1x128xf32>
    %279 = arith.negf %278 : vector<1x128xf32>
    %280 = math.exp %279 : vector<1x128xf32>
    %cst_110 = arith.constant 1.000000e+00 : f32
    %281 = vector.broadcast %cst_110 : f32 to vector<1x128xf32>
    %282 = arith.addf %281, %280 : vector<1x128xf32>
    %283 = arith.divf %281, %282 : vector<1x128xf32>
    %284 = vector.extract_strided_slice %271 {offsets = [0, 128], sizes = [1, 128], strides = [1, 1]} : vector<1x384xf32> to vector<1x128xf32>
    %285 = vector.extract_strided_slice %275 {offsets = [0, 128], sizes = [1, 128], strides = [1, 1]} : vector<1x384xf32> to vector<1x128xf32>
    %286 = arith.addf %284, %285 : vector<1x128xf32>
    %287 = arith.negf %286 : vector<1x128xf32>
    %288 = math.exp %287 : vector<1x128xf32>
    %cst_111 = arith.constant 1.000000e+00 : f32
    %289 = vector.broadcast %cst_111 : f32 to vector<1x128xf32>
    %290 = arith.addf %289, %288 : vector<1x128xf32>
    %291 = arith.divf %289, %290 : vector<1x128xf32>
    %292 = vector.extract_strided_slice %291 {offsets = [0, 0], sizes = [1, 32], strides = [1, 1]} : vector<1x128xf32> to vector<1x32xf32>
    %293 = vector.extract_strided_slice %271 {offsets = [0, 256], sizes = [1, 128], strides = [1, 1]} : vector<1x384xf32> to vector<1x128xf32>
    %294 = vector.extract_strided_slice %275 {offsets = [0, 256], sizes = [1, 128], strides = [1, 1]} : vector<1x384xf32> to vector<1x128xf32>
    %295 = arith.mulf %283, %294 : vector<1x128xf32>
    %296 = arith.addf %293, %295 : vector<1x128xf32>
    %297 = math.tanh %296 : vector<1x128xf32>
    %298 = vector.extract_strided_slice %297 {offsets = [0, 0], sizes = [1, 32], strides = [1, 1]} : vector<1x128xf32> to vector<1x32xf32>
    %cst_112 = arith.constant 1.000000e+00 : f32
    %299 = vector.broadcast %cst_112 : f32 to vector<1x32xf32>
    %300 = arith.subf %299, %292 : vector<1x32xf32>
    %301 = arith.mulf %300, %298 : vector<1x32xf32>
    %302 = arith.mulf %292, %231 : vector<1x32xf32>
    %303 = arith.addf %301, %302 : vector<1x32xf32>
    %cst_113 = arith.constant dense<0.000000e+00> : vector<1x128xf32>
    %304 = tpu.matmul %303, %2, %cst_113 {dimension_numbers = #tpu.dot_dimension_numbers<[1], [0], [0], [1], [0, 0, 1, 1], [], []>} : vector<1x32xf32>, vector<32x128xf32>, vector<1x128xf32> -> vector<1x128xf32>
    %305 = arith.addf %304, %3 : vector<1x128xf32>
    %306 = arith.index_cast %c3_i32 : i32 to index
    %c0_114 = arith.constant 0 : index
    %307 = vector.load %arg7[%306, %c0_114] : memref<8x128xf32, #tpu.memory_space<vmem>>, vector<1x128xf32>
    tpu.vector_store %arg7[%306, %c0_114], %305 {strides = array<i32>} : memref<8x128xf32, #tpu.memory_space<vmem>>, vector<1x128xf32>,
    %cst_115 = arith.constant dense<0xFF800000> : vector<1xf32>
    %308 = vector.multi_reduction <maximumf>, %305, %cst_115 [1] : vector<1x128xf32> to vector<1xf32>
    %309 = vector.shape_cast %308 : vector<1xf32> to vector<1x1xf32>
    %310 = vector.broadcast %309 : vector<1x1xf32> to vector<1x128xf32>
    %311 = arith.cmpf oge, %305, %310 : vector<1x128xf32>
    %cst_116 = arith.constant 0.000000e+00 : f32
    %cst_117 = arith.constant 1.280000e+02 : f32
    %312 = arith.subf %cst_116, %cst_117 : f32
    %313 = vector.broadcast %312 : f32 to vector<1x128xf32>
    %314 = arith.select %311, %9, %313 : vector<1x128xi1>, vector<1x128xf32>
    %cst_118 = arith.constant dense<0xFF800000> : vector<1xf32>
    %315 = vector.multi_reduction <maximumf>, %314, %cst_118 [1] : vector<1x128xf32> to vector<1xf32>
    %316 = vector.shape_cast %315 : vector<1xf32> to vector<1x1xf32>
    %317 = vector.extract %316[0, 0] : f32 from vector<1x1xf32>
    %cst_119 = arith.constant 0.000000e+00 : f32
    %318 = arith.subf %cst_119, %317 : f32
    %319 = arith.fptosi %318 : f32 to i32
    %c8_i32_120 = arith.constant 8 : i32
    %320 = arith.addi %c8_i32_120, %c3_i32 : i32
    %321 = arith.index_cast %320 : i32 to index
    %322 = memref.load %arg0[%321] : memref<14xi32, #tpu.memory_space<smem>>
    %c2_i32_121 = arith.constant 2 : i32
    %323 = arith.addi %c2_i32_121, %c3_i32 : i32
    %324 = arith.index_cast %323 : i32 to index
    %325 = memref.load %arg0[%324] : memref<14xi32, #tpu.memory_space<smem>>
    %c1_i32_122 = arith.constant 1 : i32
    %326 = arith.cmpi eq, %322, %c1_i32_122 : i32
    %327 = arith.select %326, %325, %319 : i32
    %c0_i32_123 = arith.constant 0 : i32
    %328 = arith.cmpi eq, %262, %c0_i32_123 : i32
    %329 = arith.extui %328 : i1 to i32
    %330 = arith.addi %258, %329 : i32
    %c0_i32_124 = arith.constant 0 : i32
    %331 = arith.cmpi eq, %322, %c0_i32_124 : i32
    %332 = arith.cmpi eq, %319, %1 : i32
    %333 = arith.andi %331, %332 : i1
    %c1_i32_125 = arith.constant 1 : i32
    %334 = arith.select %333, %c1_i32_125, %262 : i32
    %c4_i32 = arith.constant 4 : i32
    %335 = arith.index_cast %327 : i32 to index
    %c0_126 = arith.constant 0 : index
    %336 = vector.load %arg5[%335, %c0_126] : memref<128x128xf32, #tpu.memory_space<vmem>>, vector<1x128xf32>
    %337 = vector.extract_strided_slice %336 {offsets = [0, 0], sizes = [1, 32], strides = [1, 1]} : vector<1x128xf32> to vector<1x32xf32>
    %cst_127 = arith.constant 0.000000e+00 : f32
    %338 = vector.broadcast %cst_127 : f32 to vector<1x32xf32>
    %339 = arith.maximumf %337, %338 : vector<1x32xf32>
    %c0_128 = arith.constant 0 : index
    %c0_129 = arith.constant 0 : index
    %c0_130 = arith.constant 0 : index
    %340 = vector.load %arg3[%c0_128, %c0_129, %c0_130] : memref<2x32x384xf32, #tpu.memory_space<vmem>>, vector<1x32x384xf32>
    %341 = vector.shape_cast %340 : vector<1x32x384xf32> to vector<32x384xf32>
    %cst_131 = arith.constant dense<0.000000e+00> : vector<1x384xf32>
    %342 = tpu.matmul %339, %341, %cst_131 {dimension_numbers = #tpu.dot_dimension_numbers<[1], [0], [0], [1], [0, 0, 1, 1], [], []>} : vector<1x32xf32>, vector<32x384xf32>, vector<1x384xf32> -> vector<1x384xf32>
    %343 = arith.addf %342, %4 : vector<1x384xf32>
    %c1_132 = arith.constant 1 : index
    %c0_133 = arith.constant 0 : index
    %c0_134 = arith.constant 0 : index
    %344 = vector.load %arg3[%c1_132, %c0_133, %c0_134] : memref<2x32x384xf32, #tpu.memory_space<vmem>>, vector<1x32x384xf32>
    %345 = vector.shape_cast %344 : vector<1x32x384xf32> to vector<32x384xf32>
    %cst_135 = arith.constant dense<0.000000e+00> : vector<1x384xf32>
    %346 = tpu.matmul %303, %345, %cst_135 {dimension_numbers = #tpu.dot_dimension_numbers<[1], [0], [0], [1], [0, 0, 1, 1], [], []>} : vector<1x32xf32>, vector<32x384xf32>, vector<1x384xf32> -> vector<1x384xf32>
    %347 = arith.addf %346, %5 : vector<1x384xf32>
    %348 = vector.extract_strided_slice %343 {offsets = [0, 0], sizes = [1, 128], strides = [1, 1]} : vector<1x384xf32> to vector<1x128xf32>
    %349 = vector.extract_strided_slice %347 {offsets = [0, 0], sizes = [1, 128], strides = [1, 1]} : vector<1x384xf32> to vector<1x128xf32>
    %350 = arith.addf %348, %349 : vector<1x128xf32>
    %351 = arith.negf %350 : vector<1x128xf32>
    %352 = math.exp %351 : vector<1x128xf32>
    %cst_136 = arith.constant 1.000000e+00 : f32
    %353 = vector.broadcast %cst_136 : f32 to vector<1x128xf32>
    %354 = arith.addf %353, %352 : vector<1x128xf32>
    %355 = arith.divf %353, %354 : vector<1x128xf32>
    %356 = vector.extract_strided_slice %343 {offsets = [0, 128], sizes = [1, 128], strides = [1, 1]} : vector<1x384xf32> to vector<1x128xf32>
    %357 = vector.extract_strided_slice %347 {offsets = [0, 128], sizes = [1, 128], strides = [1, 1]} : vector<1x384xf32> to vector<1x128xf32>
    %358 = arith.addf %356, %357 : vector<1x128xf32>
    %359 = arith.negf %358 : vector<1x128xf32>
    %360 = math.exp %359 : vector<1x128xf32>
    %cst_137 = arith.constant 1.000000e+00 : f32
    %361 = vector.broadcast %cst_137 : f32 to vector<1x128xf32>
    %362 = arith.addf %361, %360 : vector<1x128xf32>
    %363 = arith.divf %361, %362 : vector<1x128xf32>
    %364 = vector.extract_strided_slice %363 {offsets = [0, 0], sizes = [1, 32], strides = [1, 1]} : vector<1x128xf32> to vector<1x32xf32>
    %365 = vector.extract_strided_slice %343 {offsets = [0, 256], sizes = [1, 128], strides = [1, 1]} : vector<1x384xf32> to vector<1x128xf32>
    %366 = vector.extract_strided_slice %347 {offsets = [0, 256], sizes = [1, 128], strides = [1, 1]} : vector<1x384xf32> to vector<1x128xf32>
    %367 = arith.mulf %355, %366 : vector<1x128xf32>
    %368 = arith.addf %365, %367 : vector<1x128xf32>
    %369 = math.tanh %368 : vector<1x128xf32>
    %370 = vector.extract_strided_slice %369 {offsets = [0, 0], sizes = [1, 32], strides = [1, 1]} : vector<1x128xf32> to vector<1x32xf32>
    %cst_138 = arith.constant 1.000000e+00 : f32
    %371 = vector.broadcast %cst_138 : f32 to vector<1x32xf32>
    %372 = arith.subf %371, %364 : vector<1x32xf32>
    %373 = arith.mulf %372, %370 : vector<1x32xf32>
    %374 = arith.mulf %364, %303 : vector<1x32xf32>
    %375 = arith.addf %373, %374 : vector<1x32xf32>
    %cst_139 = arith.constant dense<0.000000e+00> : vector<1x128xf32>
    %376 = tpu.matmul %375, %2, %cst_139 {dimension_numbers = #tpu.dot_dimension_numbers<[1], [0], [0], [1], [0, 0, 1, 1], [], []>} : vector<1x32xf32>, vector<32x128xf32>, vector<1x128xf32> -> vector<1x128xf32>
    %377 = arith.addf %376, %3 : vector<1x128xf32>
    %378 = arith.index_cast %c4_i32 : i32 to index
    %c0_140 = arith.constant 0 : index
    %379 = vector.load %arg7[%378, %c0_140] : memref<8x128xf32, #tpu.memory_space<vmem>>, vector<1x128xf32>
    tpu.vector_store %arg7[%378, %c0_140], %377 {strides = array<i32>} : memref<8x128xf32, #tpu.memory_space<vmem>>, vector<1x128xf32>,
    %cst_141 = arith.constant dense<0xFF800000> : vector<1xf32>
    %380 = vector.multi_reduction <maximumf>, %377, %cst_141 [1] : vector<1x128xf32> to vector<1xf32>
    %381 = vector.shape_cast %380 : vector<1xf32> to vector<1x1xf32>
    %382 = vector.broadcast %381 : vector<1x1xf32> to vector<1x128xf32>
    %383 = arith.cmpf oge, %377, %382 : vector<1x128xf32>
    %cst_142 = arith.constant 0.000000e+00 : f32
    %cst_143 = arith.constant 1.280000e+02 : f32
    %384 = arith.subf %cst_142, %cst_143 : f32
    %385 = vector.broadcast %384 : f32 to vector<1x128xf32>
    %386 = arith.select %383, %9, %385 : vector<1x128xi1>, vector<1x128xf32>
    %cst_144 = arith.constant dense<0xFF800000> : vector<1xf32>
    %387 = vector.multi_reduction <maximumf>, %386, %cst_144 [1] : vector<1x128xf32> to vector<1xf32>
    %388 = vector.shape_cast %387 : vector<1xf32> to vector<1x1xf32>
    %389 = vector.extract %388[0, 0] : f32 from vector<1x1xf32>
    %cst_145 = arith.constant 0.000000e+00 : f32
    %390 = arith.subf %cst_145, %389 : f32
    %391 = arith.fptosi %390 : f32 to i32
    %c8_i32_146 = arith.constant 8 : i32
    %392 = arith.addi %c8_i32_146, %c4_i32 : i32
    %393 = arith.index_cast %392 : i32 to index
    %394 = memref.load %arg0[%393] : memref<14xi32, #tpu.memory_space<smem>>
    %c2_i32_147 = arith.constant 2 : i32
    %395 = arith.addi %c2_i32_147, %c4_i32 : i32
    %396 = arith.index_cast %395 : i32 to index
    %397 = memref.load %arg0[%396] : memref<14xi32, #tpu.memory_space<smem>>
    %c1_i32_148 = arith.constant 1 : i32
    %398 = arith.cmpi eq, %394, %c1_i32_148 : i32
    %399 = arith.select %398, %397, %391 : i32
    %c0_i32_149 = arith.constant 0 : i32
    %400 = arith.cmpi eq, %334, %c0_i32_149 : i32
    %401 = arith.extui %400 : i1 to i32
    %402 = arith.addi %330, %401 : i32
    %c0_i32_150 = arith.constant 0 : i32
    %403 = arith.cmpi eq, %394, %c0_i32_150 : i32
    %404 = arith.cmpi eq, %391, %1 : i32
    %405 = arith.andi %403, %404 : i1
    %c1_i32_151 = arith.constant 1 : i32
    %406 = arith.select %405, %c1_i32_151, %334 : i32
    %c5_i32 = arith.constant 5 : i32
    %407 = arith.index_cast %399 : i32 to index
    %c0_152 = arith.constant 0 : index
    %408 = vector.load %arg5[%407, %c0_152] : memref<128x128xf32, #tpu.memory_space<vmem>>, vector<1x128xf32>
    %409 = vector.extract_strided_slice %408 {offsets = [0, 0], sizes = [1, 32], strides = [1, 1]} : vector<1x128xf32> to vector<1x32xf32>
    %cst_153 = arith.constant 0.000000e+00 : f32
    %410 = vector.broadcast %cst_153 : f32 to vector<1x32xf32>
    %411 = arith.maximumf %409, %410 : vector<1x32xf32>
    %c0_154 = arith.constant 0 : index
    %c0_155 = arith.constant 0 : index
    %c0_156 = arith.constant 0 : index
    %412 = vector.load %arg3[%c0_154, %c0_155, %c0_156] : memref<2x32x384xf32, #tpu.memory_space<vmem>>, vector<1x32x384xf32>
    %413 = vector.shape_cast %412 : vector<1x32x384xf32> to vector<32x384xf32>
    %cst_157 = arith.constant dense<0.000000e+00> : vector<1x384xf32>
    %414 = tpu.matmul %411, %413, %cst_157 {dimension_numbers = #tpu.dot_dimension_numbers<[1], [0], [0], [1], [0, 0, 1, 1], [], []>} : vector<1x32xf32>, vector<32x384xf32>, vector<1x384xf32> -> vector<1x384xf32>
    %415 = arith.addf %414, %4 : vector<1x384xf32>
    %c1_158 = arith.constant 1 : index
    %c0_159 = arith.constant 0 : index
    %c0_160 = arith.constant 0 : index
    %416 = vector.load %arg3[%c1_158, %c0_159, %c0_160] : memref<2x32x384xf32, #tpu.memory_space<vmem>>, vector<1x32x384xf32>
    %417 = vector.shape_cast %416 : vector<1x32x384xf32> to vector<32x384xf32>
    %cst_161 = arith.constant dense<0.000000e+00> : vector<1x384xf32>
    %418 = tpu.matmul %375, %417, %cst_161 {dimension_numbers = #tpu.dot_dimension_numbers<[1], [0], [0], [1], [0, 0, 1, 1], [], []>} : vector<1x32xf32>, vector<32x384xf32>, vector<1x384xf32> -> vector<1x384xf32>
    %419 = arith.addf %418, %5 : vector<1x384xf32>
    %420 = vector.extract_strided_slice %415 {offsets = [0, 0], sizes = [1, 128], strides = [1, 1]} : vector<1x384xf32> to vector<1x128xf32>
    %421 = vector.extract_strided_slice %419 {offsets = [0, 0], sizes = [1, 128], strides = [1, 1]} : vector<1x384xf32> to vector<1x128xf32>
    %422 = arith.addf %420, %421 : vector<1x128xf32>
    %423 = arith.negf %422 : vector<1x128xf32>
    %424 = math.exp %423 : vector<1x128xf32>
    %cst_162 = arith.constant 1.000000e+00 : f32
    %425 = vector.broadcast %cst_162 : f32 to vector<1x128xf32>
    %426 = arith.addf %425, %424 : vector<1x128xf32>
    %427 = arith.divf %425, %426 : vector<1x128xf32>
    %428 = vector.extract_strided_slice %415 {offsets = [0, 128], sizes = [1, 128], strides = [1, 1]} : vector<1x384xf32> to vector<1x128xf32>
    %429 = vector.extract_strided_slice %419 {offsets = [0, 128], sizes = [1, 128], strides = [1, 1]} : vector<1x384xf32> to vector<1x128xf32>
    %430 = arith.addf %428, %429 : vector<1x128xf32>
    %431 = arith.negf %430 : vector<1x128xf32>
    %432 = math.exp %431 : vector<1x128xf32>
    %cst_163 = arith.constant 1.000000e+00 : f32
    %433 = vector.broadcast %cst_163 : f32 to vector<1x128xf32>
    %434 = arith.addf %433, %432 : vector<1x128xf32>
    %435 = arith.divf %433, %434 : vector<1x128xf32>
    %436 = vector.extract_strided_slice %435 {offsets = [0, 0], sizes = [1, 32], strides = [1, 1]} : vector<1x128xf32> to vector<1x32xf32>
    %437 = vector.extract_strided_slice %415 {offsets = [0, 256], sizes = [1, 128], strides = [1, 1]} : vector<1x384xf32> to vector<1x128xf32>
    %438 = vector.extract_strided_slice %419 {offsets = [0, 256], sizes = [1, 128], strides = [1, 1]} : vector<1x384xf32> to vector<1x128xf32>
    %439 = arith.mulf %427, %438 : vector<1x128xf32>
    %440 = arith.addf %437, %439 : vector<1x128xf32>
    %441 = math.tanh %440 : vector<1x128xf32>
    %442 = vector.extract_strided_slice %441 {offsets = [0, 0], sizes = [1, 32], strides = [1, 1]} : vector<1x128xf32> to vector<1x32xf32>
    %cst_164 = arith.constant 1.000000e+00 : f32
    %443 = vector.broadcast %cst_164 : f32 to vector<1x32xf32>
    %444 = arith.subf %443, %436 : vector<1x32xf32>
    %445 = arith.mulf %444, %442 : vector<1x32xf32>
    %446 = arith.mulf %436, %375 : vector<1x32xf32>
    %447 = arith.addf %445, %446 : vector<1x32xf32>
    %cst_165 = arith.constant dense<0.000000e+00> : vector<1x128xf32>
    %448 = tpu.matmul %447, %2, %cst_165 {dimension_numbers = #tpu.dot_dimension_numbers<[1], [0], [0], [1], [0, 0, 1, 1], [], []>} : vector<1x32xf32>, vector<32x128xf32>, vector<1x128xf32> -> vector<1x128xf32>
    %449 = arith.addf %448, %3 : vector<1x128xf32>
    %450 = arith.index_cast %c5_i32 : i32 to index
    %c0_166 = arith.constant 0 : index
    %451 = vector.load %arg7[%450, %c0_166] : memref<8x128xf32, #tpu.memory_space<vmem>>, vector<1x128xf32>
    tpu.vector_store %arg7[%450, %c0_166], %449 {strides = array<i32>} : memref<8x128xf32, #tpu.memory_space<vmem>>, vector<1x128xf32>,
    %cst_167 = arith.constant dense<0xFF800000> : vector<1xf32>
    %452 = vector.multi_reduction <maximumf>, %449, %cst_167 [1] : vector<1x128xf32> to vector<1xf32>
    %453 = vector.shape_cast %452 : vector<1xf32> to vector<1x1xf32>
    %454 = vector.broadcast %453 : vector<1x1xf32> to vector<1x128xf32>
    %455 = arith.cmpf oge, %449, %454 : vector<1x128xf32>
    %cst_168 = arith.constant 0.000000e+00 : f32
    %cst_169 = arith.constant 1.280000e+02 : f32
    %456 = arith.subf %cst_168, %cst_169 : f32
    %457 = vector.broadcast %456 : f32 to vector<1x128xf32>
    %458 = arith.select %455, %9, %457 : vector<1x128xi1>, vector<1x128xf32>
    %cst_170 = arith.constant dense<0xFF800000> : vector<1xf32>
    %459 = vector.multi_reduction <maximumf>, %458, %cst_170 [1] : vector<1x128xf32> to vector<1xf32>
    %460 = vector.shape_cast %459 : vector<1xf32> to vector<1x1xf32>
    %461 = vector.extract %460[0, 0] : f32 from vector<1x1xf32>
    %cst_171 = arith.constant 0.000000e+00 : f32
    %462 = arith.subf %cst_171, %461 : f32
    %463 = arith.fptosi %462 : f32 to i32
    %c8_i32_172 = arith.constant 8 : i32
    %464 = arith.addi %c8_i32_172, %c5_i32 : i32
    %465 = arith.index_cast %464 : i32 to index
    %466 = memref.load %arg0[%465] : memref<14xi32, #tpu.memory_space<smem>>
    %c2_i32_173 = arith.constant 2 : i32
    %467 = arith.addi %c2_i32_173, %c5_i32 : i32
    %468 = arith.index_cast %467 : i32 to index
    %469 = memref.load %arg0[%468] : memref<14xi32, #tpu.memory_space<smem>>
    %c1_i32_174 = arith.constant 1 : i32
    %470 = arith.cmpi eq, %466, %c1_i32_174 : i32
    %471 = arith.select %470, %469, %463 : i32
    %c0_i32_175 = arith.constant 0 : i32
    %472 = arith.cmpi eq, %406, %c0_i32_175 : i32
    %473 = arith.extui %472 : i1 to i32
    %474 = arith.addi %402, %473 : i32
    %c0_i32_176 = arith.constant 0 : i32
    %475 = arith.cmpi eq, %466, %c0_i32_176 : i32
    %476 = arith.cmpi eq, %463, %1 : i32
    %477 = arith.andi %475, %476 : i1
    %c1_i32_177 = arith.constant 1 : i32
    %478 = arith.select %477, %c1_i32_177, %406 : i32
    %c6_i32 = arith.constant 6 : i32
    %c0_178 = arith.constant 0 : index
    %c0_179 = arith.constant 0 : index
    %479 = vector.load %arg7[%c0_178, %c0_179] : memref<8x128xf32, #tpu.memory_space<vmem>>, vector<8x128xf32>
    %cst_180 = arith.constant dense<0xFF800000> : vector<8xf32>
    %480 = vector.multi_reduction <maximumf>, %479, %cst_180 [1] : vector<8x128xf32> to vector<8xf32>
    %481 = vector.shape_cast %480 : vector<8xf32> to vector<8x1xf32>
    %482 = vector.broadcast %481 : vector<8x1xf32> to vector<8x128xf32>
    %483 = arith.subf %479, %482 : vector<8x128xf32>
    %484 = math.exp %483 : vector<8x128xf32>
    %cst_181 = arith.constant dense<0.000000e+00> : vector<8xf32>
    %485 = vector.multi_reduction <add>, %484, %cst_181 [1] : vector<8x128xf32> to vector<8xf32>
    %486 = vector.shape_cast %485 : vector<8xf32> to vector<8x1xf32>
    %487 = math.log %486 : vector<8x1xf32>
    %488 = arith.addf %481, %487 : vector<8x1xf32>
    %489 = tpu.iota {dimensions = array<i32: 0>} : vector<8x128xi32>
    %490 = vector.broadcast %474 : i32 to vector<8x128xi32>
    %491 = arith.cmpi slt, %489, %490 : vector<8x128xi32>
    %492 = vector.broadcast %488 : vector<8x1xf32> to vector<8x128xf32>
    %493 = arith.subf %479, %492 : vector<8x128xf32>
    %cst_182 = arith.constant 0.000000e+00 : f32
    %494 = vector.broadcast %cst_182 : f32 to vector<8x128xf32>
    %495 = arith.select %491, %493, %494 : vector<8x128xi1>, vector<8x128xf32>
    %c0_183 = arith.constant 0 : index
    %c0_184 = arith.constant 0 : index
    %496 = vector.load %arg7[%c0_183, %c0_184] : memref<8x128xf32, #tpu.memory_space<vmem>>, vector<8x128xf32>
    tpu.vector_store %arg7[%c0_183, %c0_184], %495 {strides = array<i32>} : memref<8x128xf32, #tpu.memory_space<vmem>>, vector<8x128xf32>,
    return
  }
}

</mosaic_0001>

<llo_original>
// kernel: tpu_custom_call.1
$region0: #{tpu_custom_call.1}
  #allocation0 [shape = 'u32[]', space=smem, size = 0x4, offset = 0x4, fixed_abs, tag = 'smem constant byte address 0x4 - core index']
  #allocation1 [shape = 'u32[144,128]{1,0:T(1,128)}', space=vmem, size = 0x12000, scoped, tag = 'internal scratch']
  %s0 = inlined_call_operand.hbm [shape: s32[14], index: 0, kind: input, shape index: {}]
  %s1 = inlined_call_operand.vmem [shape: f32[1,32], index: 1, kind: input, shape index: {}]
  %s2 = inlined_call_operand.hbm [shape: f32[32,384], index: 2, kind: input, shape index: {}]
  %s3 = inlined_call_operand.hbm [shape: f32[2,32,384], index: 3, kind: input, shape index: {}]
  %s4 = inlined_call_operand.vmem [shape: f32[4,384], index: 4, kind: input, shape index: {}]
  %s5 = inlined_call_operand.hbm [shape: f32[128,128], index: 5, kind: input, shape index: {}]
  %s6 = inlined_call_operand.hbm [shape: f32[33,128], index: 6, kind: input, shape index: {}]
  %s7 = inlined_call_operand.hbm [shape: f32[8,128], index: 7, kind: output, shape index: {}]
  %s8 = sld [smem:[#allocation0]]
  $region58: #{tpu_custom_call.1} parent=0
    _
  %s10 = ssub.s32 1, %s8
  %s11 = scalar_select 0, %s10, %s8
  $region1: #{tpu_custom_call.1} parent=0
    #allocation2 [shape = 'u8[512]{0}', space=smem, size = 0x200, scoped, tag = 'input window, operand 0, single buffered']
    #allocation3 [shape = 's32[1]{0}', space=sflag, size = 0x4, scoped, tag = 'scoped memory for tpu_custom_call.1']
    #allocation4 [shape = 's32[1]{0}', space=sflag, size = 0x4, scoped, tag = 'scoped memory for tpu_custom_call.1']
    #allocation5 [shape = 's32[1]{0}', space=sflag, size = 0x4, scoped, tag = 'scoped memory for tpu_custom_call.1']
    #allocation6 [shape = 'u8[49152]{0}', space=vmem, size = 0xc000, scoped, tag = 'input window, operand 2, single buffered']
    #allocation7 [shape = 'u8[98304]{0}', space=vmem, size = 0x18000, scoped, tag = 'input window, operand 3, single buffered']
    #allocation8 [shape = 's32[1]{0}', space=sflag, size = 0x4, scoped, tag = 'scoped memory for tpu_custom_call.1']
    #allocation9 [shape = 'u8[65536]{0}', space=vmem, size = 0x10000, scoped, tag = 'input window, operand 5, single buffered']
    #allocation10 [shape = 'u8[20480]{0}', space=vmem, size = 0x5000, scoped, tag = 'input window, operand 6, single buffered']
    #allocation11 [shape = 's32[1]{0}', space=sflag, size = 0x4, scoped, tag = 'scoped memory for tpu_custom_call.1']
    #allocation12 [shape = 'u8[4096]{0}', space=vmem, size = 0x1000, scoped, tag = 'output window, operand 0, single buffered']
    %12 = vsyncpa [#allocation5], 0
    %13 = vsyncpa [#allocation3], 0
    %14 = vsyncpa [#allocation8], 0
    %15 = vsyncpa [#allocation11], 0
    %16 = vsyncpa [#allocation4], 0
    // Predicated region
    $region2: #{tpu_custom_call.1} parent=1 // pred_check
      _
    $region3: #{tpu_custom_call.1} parent=1 // pred_check_branch
      %18 = sbr.rel (0) target = $region5
    $region4: #{tpu_custom_call.1} parent=1 // pred_region
      %s20 = ssub.s32 16, 16
      %21 = vsyncadd [#allocation5], %s20
      %24 = dma.hbm_to_smem %s0, 16, [#allocation2], [#allocation5]
    $region5: #{tpu_custom_call.1} parent=1 // pred_fallthru
      _
    // Predicated region
    $region6: #{tpu_custom_call.1} parent=1 // pred_check
      _
    $region7: #{tpu_custom_call.1} parent=1 // pred_check_branch
      %26 = sbr.rel (0) target = $region9
    $region8: #{tpu_custom_call.1} parent=1 // pred_region
      _
    $region9: #{tpu_custom_call.1} parent=1 // pred_fallthru
      _
    // Predicated region
    $region10: #{tpu_custom_call.1} parent=1 // pred_check
      _
    $region11: #{tpu_custom_call.1} parent=1 // pred_check_branch
      %28 = sbr.rel (0) target = $region13
    $region12: #{tpu_custom_call.1} parent=1 // pred_region
      %s30 = ssub.s32 1536, 1536
      %31 = vsyncadd [#allocation3], %s30
      %s32 = sshll.u32 [#allocation6], 4
      %s33 = int_to_ptr.vmem [resolvable:$true] %s32
      %38 = dma.hbm_to_vmem [thread:$0]  %s2, 1536, %s33, [#allocation3], 384, 384, 24
    $region13: #{tpu_custom_call.1} parent=1 // pred_fallthru
      _
    // Predicated region
    $region14: #{tpu_custom_call.1} parent=1 // pred_check
      _
    $region15: #{tpu_custom_call.1} parent=1 // pred_check_branch
      %40 = sbr.rel (0) target = $region17
    $region16: #{tpu_custom_call.1} parent=1 // pred_region
      %s42 = ssub.s32 3072, 3072
      %43 = vsyncadd [#allocation8], %s42
      %s44 = sshll.u32 [#allocation7], 4
      %s45 = int_to_ptr.vmem [resolvable:$true] %s44
      %50 = dma.hbm_to_vmem [thread:$0]  %s3, 3072, %s45, [#allocation8], 384, 384, 24
    $region17: #{tpu_custom_call.1} parent=1 // pred_fallthru
      _
    // Predicated region
    $region18: #{tpu_custom_call.1} parent=1 // pred_check
      _
    $region19: #{tpu_custom_call.1} parent=1 // pred_check_branch
      %52 = sbr.rel (0) target = $region21
    $region20: #{tpu_custom_call.1} parent=1 // pred_region
      _
    $region21: #{tpu_custom_call.1} parent=1 // pred_fallthru
      _
    // Predicated region
    $region22: #{tpu_custom_call.1} parent=1 // pred_check
      _
    $region23: #{tpu_custom_call.1} parent=1 // pred_check_branch
      %54 = sbr.rel (0) target = $region25
    $region24: #{tpu_custom_call.1} parent=1 // pred_region
      %s56 = ssub.s32 2048, 2048
      %57 = vsyncadd [#allocation8], %s56
      %s58 = sshll.u32 [#allocation9], 4
      %s59 = int_to_ptr.vmem [resolvable:$true] %s58
      %64 = dma.hbm_to_vmem [thread:$0]  %s5, 2048, %s59, [#allocation8], 128, 128, 8
    $region25: #{tpu_custom_call.1} parent=1 // pred_fallthru
      _
    // Predicated region
    $region26: #{tpu_custom_call.1} parent=1 // pred_check
      _
    $region27: #{tpu_custom_call.1} parent=1 // pred_check_branch
      %66 = sbr.rel (0) target = $region29
    $region28: #{tpu_custom_call.1} parent=1 // pred_region
      %s68 = ssub.s32 640, 640
      %69 = vsyncadd [#allocation11], %s68
      %s70 = sshll.u32 [#allocation10], 4
      %s71 = int_to_ptr.vmem [resolvable:$true] %s70
      %76 = dma.hbm_to_vmem [thread:$0]  %s6, 640, %s71, [#allocation11], 128, 128, 8
    $region29: #{tpu_custom_call.1} parent=1 // pred_fallthru
      _
    // Predicated region
    $region30: #{tpu_custom_call.1} parent=1 // pred_check
      _
    $region31: #{tpu_custom_call.1} parent=1 // pred_check_branch
      %78 = sbr.rel (0) target = $region33
    $region32: #{tpu_custom_call.1} parent=1 // pred_region
      %79 = dma.done [#allocation5], 16
    $region33: #{tpu_custom_call.1} parent=1 // pred_fallthru
      _
    // Predicated region
    $region34: #{tpu_custom_call.1} parent=1 // pred_check
      _
    $region35: #{tpu_custom_call.1} parent=1 // pred_check_branch
      %81 = sbr.rel (0) target = $region37
    $region36: #{tpu_custom_call.1} parent=1 // pred_region
      %82 = dma.done [#allocation3], 1536
    $region37: #{tpu_custom_call.1} parent=1 // pred_fallthru
      _
    // Predicated region
    $region38: #{tpu_custom_call.1} parent=1 // pred_check
      _
    $region39: #{tpu_custom_call.1} parent=1 // pred_check_branch
      %84 = sbr.rel (0) target = $region41
    $region40: #{tpu_custom_call.1} parent=1 // pred_region
      %85 = dma.done [#allocation8], 3072
    $region41: #{tpu_custom_call.1} parent=1 // pred_fallthru
      _
    // Predicated region
    $region42: #{tpu_custom_call.1} parent=1 // pred_check
      _
    $region43: #{tpu_custom_call.1} parent=1 // pred_check_branch
      %87 = sbr.rel (0) target = $region45
    $region44: #{tpu_custom_call.1} parent=1 // pred_region
      %88 = dma.done [#allocation8], 2048
    $region45: #{tpu_custom_call.1} parent=1 // pred_fallthru
      _
    // Predicated region
    $region46: #{tpu_custom_call.1} parent=1 // pred_check
      _
    $region47: #{tpu_custom_call.1} parent=1 // pred_check_branch
      %90 = sbr.rel (0) target = $region49
    $region48: #{tpu_custom_call.1} parent=1 // pred_region
      %91 = dma.done [#allocation11], 640
    $region49: #{tpu_custom_call.1} parent=1 // pred_fallthru
      _
    %92 = sfence
    %s93 = sld [smem:[#allocation2]]
    %s94 = sld [smem:[#allocation2 + $0x1]]
    %v95 = vld [vmem:[#allocation10] sm:$0xff]
    %v96 = vld [vmem:[#allocation10 + $0x8] sm:$0xff]
    %v97 = vld [vmem:[#allocation10 + $0x10] sm:$0xff]
    %v98 = vld [vmem:[#allocation10 + $0x18] sm:$0xff]
    %v99 = vld [vmem:[#allocation10 + $0x20] sm:$0x1]
    %s100 = scalar_lea.vmem %s4, 2
    %v101 = vld [vmem:[%s100] ss:$4 sm:$0x7]
    %s102 = scalar_lea.vmem %s4, 3
    %v103 = vld [vmem:[%s102] ss:$4 sm:$0x7]
    %v104 = vlaneseq
    %v105 = vand.u32 %v104, 127
    %v106 = vcvt.s32.f32 %v105
    %v107 = vsub.f32 0.0, %v106
    %v108 = vld [vmem:[%s1] sm:$0x1]
    %v109 = vld [vmem:[#allocation6] sm:$0xff]
    %v110 = vld [vmem:[#allocation6 + $0x8] sm:$0xff]
    %v111 = vld [vmem:[#allocation6 + $0x10] sm:$0xff]
    %v112 = vld [vmem:[#allocation6 + $0x18] sm:$0xff]
    %v113 = vld [vmem:[#allocation6 + $0x20] sm:$0xff]
    %v114 = vld [vmem:[#allocation6 + $0x28] sm:$0xff]
    %v115 = vld [vmem:[#allocation6 + $0x30] sm:$0xff]
    %v116 = vld [vmem:[#allocation6 + $0x38] sm:$0xff]
    %v117 = vld [vmem:[#allocation6 + $0x40] sm:$0xff]
    %v118 = vld [vmem:[#allocation6 + $0x48] sm:$0xff]
    %v119 = vld [vmem:[#allocation6 + $0x50] sm:$0xff]
    %v120 = vld [vmem:[#allocation6 + $0x58] sm:$0xff]
    %v121 = vld [vmem:[%s4] ss:$4 sm:$0x7]
    %v123 = vlaneseq
    %v124 = vshrl.u32 %v123, 7
    %v125 = vsub.s32 0, %v124
    %v126 = vrot.slane %v121, %v125
    %v127 = vlaneseq
    %v128 = vshrl.u32 %v127, 7
    %v129 = vsub.s32 1, %v128
    %v130 = vrot.slane %v121, %v129
    %v131 = vlaneseq
    %v132 = vshrl.u32 %v131, 7
    %v133 = vsub.s32 2, %v132
    %v134 = vrot.slane %v121, %v133
    %vm138 = vcmask 261120
    %v140 = vsel %vm138, %v108, 0
    %142 = vmatprep.subr.mxu0 %v110
    %143 = vmatpush1.msra.mxu0 %v109
    %144 = vmatprep.subr.mxu0 %v113
    %145 = vmatpush1.msra.mxu0 %v112
    %146 = vmatprep.subr.mxu0 %v116
    %147 = vmatpush1.msra.mxu0 %v115
    %148 = vmatprep.subr.mxu0 %v119
    %149 = vmatpush1.msra.mxu0 %v118
    %150 = vmatprep.subr.mxu0 0.0
    %151 = vmatpush1.msra.mxu0 0.0
    %152 = vmatprep.subr.mxu0 0.0
    %153 = vmatpush1.msra.mxu0 0.0
    %154 = vmatprep.subr.mxu0 0.0
    %155 = vmatpush1.msra.mxu0 0.0
    %156 = vmatprep.subr.mxu0 0.0
    %157 = vmatpush1.msra.mxu0 0.0
    %158 = vmatprep.subr.mxu0 0.0
    %159 = vmatpush1.msra.mxu0 0.0
    %160 = vmatprep.subr.mxu0 0.0
    %161 = vmatpush1.msra.mxu0 0.0
    %162 = vmatprep.subr.mxu0 0.0
    %163 = vmatpush1.msra.mxu0 0.0
    %164 = vmatprep.subr.mxu0 0.0
    %165 = vmatpush1.msra.mxu0 0.0
    %166 = vmatprep.subr.mxu0 0.0
    %167 = vmatpush1.msra.mxu0 0.0
    %168 = vmatprep.subr.mxu0 0.0
    %169 = vmatpush1.msra.mxu0 0.0
    %170 = vmatprep.subr.mxu0 0.0
    %171 = vmatpush1.msra.mxu0 0.0
    %172 = vmatprep.subr.mxu0 0.0
    %173 = vmatpush1.msra.mxu0 0.0
    %174 = vmatprep.subr.mxu0 0.0
    %175 = vmatpush1.msra.mxu0 0.0
    %176 = vmatprep.subr.mxu0 0.0
    %177 = vmatpush1.msra.mxu0 0.0
    %178 = vmatprep.subr.mxu0 0.0
    %179 = vmatpush1.msra.mxu0 0.0
    %180 = vmatprep.subr.mxu0 0.0
    %181 = vmatpush1.msra.mxu0 0.0
    %182 = vmatprep.subr.mxu0 0.0
    %183 = vmatpush1.msra.mxu0 0.0
    %184 = vmatprep.subr.mxu0 0.0
    %185 = vmatpush1.msra.mxu0 0.0
    %186 = vmatprep.subr.mxu0 0.0
    %187 = vmatpush1.msra.mxu0 0.0
    %188 = vmatprep.subr.mxu0 0.0
    %189 = vmatpush1.msra.mxu0 0.0
    %190 = vmatprep.subr.mxu0 0.0
    %191 = vmatpush1.msra.mxu0 0.0
    %192 = vmatprep.subr.mxu0 0.0
    %193 = vmatpush1.msra.mxu0 0.0
    %194 = vmatprep.subr.mxu0 0.0
    %195 = vmatpush1.msra.mxu0 0.0
    %196 = vmatprep.subr.mxu0 0.0
    %197 = vmatpush1.msra.mxu0 0.0
    %198 = vmatprep.subr.mxu0 0.0
    %199 = vmatpush1.msra.mxu0 0.0
    %200 = vmatprep.subr.mxu0 0.0
    %201 = vmatpush1.msra.mxu0 0.0
    %202 = vmatprep.subr.mxu0 0.0
    %203 = vmatpush1.msra.mxu0 0.0
    %204 = vmatprep.subr.mxu0 0.0
    %205 = vmatpush1.msra.mxu0 0.0
    %206 = vmatprep.mubr.f32.mxu0 0.0
    %207 = vmatmul.mubr.f32.gmra.mrb[0].mxu0 %v140
    %v208 = vpop.f32.mrb[0].mxu0
    %v209 = vadd.f32 %v126, %v208
    %v210 = vpop.f32.mrb[0].mxu0
    %v211 = vadd.f32 %v130, %v210
    %212 = vdwg.mxu0
    %213 = vmatprep.subr.mxu0 0.0
    %214 = vmatpush1.msra.mxu0 %v111
    %215 = vmatprep.subr.mxu0 0.0
    %216 = vmatpush1.msra.mxu0 %v114
    %217 = vmatprep.subr.mxu0 0.0
    %218 = vmatpush1.msra.mxu0 %v117
    %219 = vmatprep.subr.mxu0 0.0
    %220 = vmatpush1.msra.mxu0 %v120
    %221 = vmatprep.subr.mxu0 0.0
    %222 = vmatpush1.msra.mxu0 0.0
    %223 = vmatprep.subr.mxu0 0.0
    %224 = vmatpush1.msra.mxu0 0.0
    %225 = vmatprep.subr.mxu0 0.0
    %226 = vmatpush1.msra.mxu0 0.0
    %227 = vmatprep.subr.mxu0 0.0
    %228 = vmatpush1.msra.mxu0 0.0
    %229 = vmatprep.subr.mxu0 0.0
    %230 = vmatpush1.msra.mxu0 0.0
    %231 = vmatprep.subr.mxu0 0.0
    %232 = vmatpush1.msra.mxu0 0.0
    %233 = vmatprep.subr.mxu0 0.0
    %234 = vmatpush1.msra.mxu0 0.0
    %235 = vmatprep.subr.mxu0 0.0
    %236 = vmatpush1.msra.mxu0 0.0
    %237 = vmatprep.subr.mxu0 0.0
    %238 = vmatpush1.msra.mxu0 0.0
    %239 = vmatprep.subr.mxu0 0.0
    %240 = vmatpush1.msra.mxu0 0.0
    %241 = vmatprep.subr.mxu0 0.0
    %242 = vmatpush1.msra.mxu0 0.0
    %243 = vmatprep.subr.mxu0 0.0
    %244 = vmatpush1.msra.mxu0 0.0
    %245 = vmatprep.subr.mxu0 0.0
    %246 = vmatpush1.msra.mxu0 0.0
    %247 = vmatprep.subr.mxu0 0.0
    %248 = vmatpush1.msra.mxu0 0.0
    %249 = vmatprep.subr.mxu0 0.0
    %250 = vmatpush1.msra.mxu0 0.0
    %251 = vmatprep.subr.mxu0 0.0
    %252 = vmatpush1.msra.mxu0 0.0
    %253 = vmatprep.subr.mxu0 0.0
    %254 = vmatpush1.msra.mxu0 0.0
    %255 = vmatprep.subr.mxu0 0.0
    %256 = vmatpush1.msra.mxu0 0.0
    %257 = vmatprep.subr.mxu0 0.0
    %258 = vmatpush1.msra.mxu0 0.0
    %259 = vmatprep.subr.mxu0 0.0
    %260 = vmatpush1.msra.mxu0 0.0
    %261 = vmatprep.subr.mxu0 0.0
    %262 = vmatpush1.msra.mxu0 0.0
    %263 = vmatprep.subr.mxu0 0.0
    %264 = vmatpush1.msra.mxu0 0.0
    %265 = vmatprep.subr.mxu0 0.0
    %266 = vmatpush1.msra.mxu0 0.0
    %267 = vmatprep.subr.mxu0 0.0
    %268 = vmatpush1.msra.mxu0 0.0
    %269 = vmatprep.subr.mxu0 0.0
    %270 = vmatpush1.msra.mxu0 0.0
    %271 = vmatprep.subr.mxu0 0.0
    %272 = vmatpush1.msra.mxu0 0.0
    %273 = vmatprep.subr.mxu0 0.0
    %274 = vmatpush1.msra.mxu0 0.0
    %275 = vmatprep.subr.mxu0 0.0
    %276 = vmatpush1.msra.mxu0 0.0
    %277 = vmatprep.mubr.f32.mxu0 0.0
    %278 = vmatmul.mubr.f32.gmra.mrb[0].mxu0 %v140
    %v279 = vpop.f32.mrb[0].mxu0
    %v280 = vadd.f32 %v134, %v279
    %v281 = vpop.f32.mrb[0].mxu0
    %282 = vdwg.mxu0
    %s283 = scalar_lea.vmem %s4, 1
    %v284 = vld [vmem:[%s283] ss:$4 sm:$0x7]
    %v285 = vadd.f32 %v209, %v284
    %v286 = vxor.u32 %v285, 2147483648
    %v287 = vmul.f32 %v286, 1.442695
    %v288 = vpow.pop %v287
    %v289 = vadd.f32 %v288, 1.0
    %v290 = vrcp.pop %v289
    %v291 = vmul.f32 1.0, %v290
    %v293 = vlaneseq
    %v294 = vshrl.u32 %v293, 7
    %v295 = vsub.s32 1, %v294
    %v296 = vrot.slane %v284, %v295
    %v298 = vadd.f32 %v211, %v296
    %v299 = vxor.u32 %v298, 2147483648
    %v300 = vmul.f32 %v299, 1.442695
    %v301 = vpow.pop %v300
    %v302 = vadd.f32 %v301, 1.0
    %v303 = vrcp.pop %v302
    %v304 = vmul.f32 1.0, %v303
    %v305 = vlaneseq
    %v306 = vshrl.u32 %v305, 7
    %v307 = vsub.s32 2, %v306
    %v308 = vrot.slane %v284, %v307
    %v310 = vmul.f32 %v291, %v308
    %v311 = vadd.f32 %v280, %v310
    %v312 = vtanh.pop %v311
    %v313 = vsub.f32 1.0, %v304
    %v314 = vmul.f32 %v313, %v312
    %v315 = vmul.f32 %v304, 0.0
    %v316 = vadd.f32 %v314, %v315
    %317 = vst [vmem:[#allocation12] sm:$0xff] 0.0
    %s318 = scalar_lea.vmem [#allocation9], %s93
    %v319 = vld [vmem:[%s318] sm:$0x1]
    %v320 = vmax.f32 %v319, 0.0
    %v321 = vld [vmem:[#allocation7] sm:$0xff]
    %v322 = vld [vmem:[#allocation7 + $0x8] sm:$0xff]
    %v323 = vld [vmem:[#allocation7 + $0x10] sm:$0xff]
    %v324 = vld [vmem:[#allocation7 + $0x18] sm:$0xff]
    %v325 = vld [vmem:[#allocation7 + $0x20] sm:$0xff]
    %v326 = vld [vmem:[#allocation7 + $0x28] sm:$0xff]
    %v327 = vld [vmem:[#allocation7 + $0x30] sm:$0xff]
    %v328 = vld [vmem:[#allocation7 + $0x38] sm:$0xff]
    %v329 = vld [vmem:[#allocation7 + $0x40] sm:$0xff]
    %v330 = vld [vmem:[#allocation7 + $0x48] sm:$0xff]
    %v331 = vld [vmem:[#allocation7 + $0x50] sm:$0xff]
    %v332 = vld [vmem:[#allocation7 + $0x58] sm:$0xff]
    %v334 = vlaneseq
    %v335 = vshrl.u32 %v334, 7
    %v336 = vsub.s32 0, %v335
    %v337 = vrot.slane %v101, %v336
    %v338 = vlaneseq
    %v339 = vshrl.u32 %v338, 7
    %v340 = vsub.s32 1, %v339
    %v341 = vrot.slane %v101, %v340
    %v342 = vlaneseq
    %v343 = vshrl.u32 %v342, 7
    %v344 = vsub.s32 2, %v343
    %v345 = vrot.slane %v101, %v344
    %v350 = vsel %vm138, %v320, 0
    %352 = vmatprep.subr.mxu0 %v322
    %353 = vmatpush1.msra.mxu0 %v321
    %354 = vmatprep.subr.mxu0 %v325
    %355 = vmatpush1.msra.mxu0 %v324
    %356 = vmatprep.subr.mxu0 %v328
    %357 = vmatpush1.msra.mxu0 %v327
    %358 = vmatprep.subr.mxu0 %v331
    %359 = vmatpush1.msra.mxu0 %v330
    %360 = vmatprep.subr.mxu0 0.0
    %361 = vmatpush1.msra.mxu0 0.0
    %362 = vmatprep.subr.mxu0 0.0
    %363 = vmatpush1.msra.mxu0 0.0
    %364 = vmatprep.subr.mxu0 0.0
    %365 = vmatpush1.msra.mxu0 0.0
    %366 = vmatprep.subr.mxu0 0.0
    %367 = vmatpush1.msra.mxu0 0.0
    %368 = vmatprep.subr.mxu0 0.0
    %369 = vmatpush1.msra.mxu0 0.0
    %370 = vmatprep.subr.mxu0 0.0
    %371 = vmatpush1.msra.mxu0 0.0
    %372 = vmatprep.subr.mxu0 0.0
    %373 = vmatpush1.msra.mxu0 0.0
    %374 = vmatprep.subr.mxu0 0.0
    %375 = vmatpush1.msra.mxu0 0.0
    %376 = vmatprep.subr.mxu0 0.0
    %377 = vmatpush1.msra.mxu0 0.0
    %378 = vmatprep.subr.mxu0 0.0
    %379 = vmatpush1.msra.mxu0 0.0
    %380 = vmatprep.subr.mxu0 0.0
    %381 = vmatpush1.msra.mxu0 0.0
    %382 = vmatprep.subr.mxu0 0.0
    %383 = vmatpush1.msra.mxu0 0.0
    %384 = vmatprep.subr.mxu0 0.0
    %385 = vmatpush1.msra.mxu0 0.0
    %386 = vmatprep.subr.mxu0 0.0
    %387 = vmatpush1.msra.mxu0 0.0
    %388 = vmatprep.subr.mxu0 0.0
    %389 = vmatpush1.msra.mxu0 0.0
    %390 = vmatprep.subr.mxu0 0.0
    %391 = vmatpush1.msra.mxu0 0.0
    %392 = vmatprep.subr.mxu0 0.0
    %393 = vmatpush1.msra.mxu0 0.0
    %394 = vmatprep.subr.mxu0 0.0
    %395 = vmatpush1.msra.mxu0 0.0
    %396 = vmatprep.subr.mxu0 0.0
    %397 = vmatpush1.msra.mxu0 0.0
    %398 = vmatprep.subr.mxu0 0.0
    %399 = vmatpush1.msra.mxu0 0.0
    %400 = vmatprep.subr.mxu0 0.0
    %401 = vmatpush1.msra.mxu0 0.0
    %402 = vmatprep.subr.mxu0 0.0
    %403 = vmatpush1.msra.mxu0 0.0
    %404 = vmatprep.subr.mxu0 0.0
    %405 = vmatpush1.msra.mxu0 0.0
    %406 = vmatprep.subr.mxu0 0.0
    %407 = vmatpush1.msra.mxu0 0.0
    %408 = vmatprep.subr.mxu0 0.0
    %409 = vmatpush1.msra.mxu0 0.0
    %410 = vmatprep.subr.mxu0 0.0
    %411 = vmatpush1.msra.mxu0 0.0
    %412 = vmatprep.subr.mxu0 0.0
    %413 = vmatpush1.msra.mxu0 0.0
    %414 = vmatprep.subr.mxu0 0.0
    %415 = vmatpush1.msra.mxu0 0.0
    %416 = vmatprep.mubr.f32.mxu0 0.0
    %417 = vmatmul.mubr.f32.gmra.mrb[0].mxu0 %v350
    %v418 = vpop.f32.mrb[0].mxu0
    %v419 = vadd.f32 %v337, %v418
    %v420 = vpop.f32.mrb[0].mxu0
    %v421 = vadd.f32 %v341, %v420
    %422 = vdwg.mxu0
    %423 = vmatprep.subr.mxu0 0.0
    %424 = vmatpush1.msra.mxu0 %v323
    %425 = vmatprep.subr.mxu0 0.0
    %426 = vmatpush1.msra.mxu0 %v326
    %427 = vmatprep.subr.mxu0 0.0
    %428 = vmatpush1.msra.mxu0 %v329
    %429 = vmatprep.subr.mxu0 0.0
    %430 = vmatpush1.msra.mxu0 %v332
    %431 = vmatprep.subr.mxu0 0.0
    %432 = vmatpush1.msra.mxu0 0.0
    %433 = vmatprep.subr.mxu0 0.0
    %434 = vmatpush1.msra.mxu0 0.0
    %435 = vmatprep.subr.mxu0 0.0
    %436 = vmatpush1.msra.mxu0 0.0
    %437 = vmatprep.subr.mxu0 0.0
    %438 = vmatpush1.msra.mxu0 0.0
    %439 = vmatprep.subr.mxu0 0.0
    %440 = vmatpush1.msra.mxu0 0.0
    %441 = vmatprep.subr.mxu0 0.0
    %442 = vmatpush1.msra.mxu0 0.0
    %443 = vmatprep.subr.mxu0 0.0
    %444 = vmatpush1.msra.mxu0 0.0
    %445 = vmatprep.subr.mxu0 0.0
    %446 = vmatpush1.msra.mxu0 0.0
    %447 = vmatprep.subr.mxu0 0.0
    %448 = vmatpush1.msra.mxu0 0.0
    %449 = vmatprep.subr.mxu0 0.0
    %450 = vmatpush1.msra.mxu0 0.0
    %451 = vmatprep.subr.mxu0 0.0
    %452 = vmatpush1.msra.mxu0 0.0
    %453 = vmatprep.subr.mxu0 0.0
    %454 = vmatpush1.msra.mxu0 0.0
    %455 = vmatprep.subr.mxu0 0.0
    %456 = vmatpush1.msra.mxu0 0.0
    %457 = vmatprep.subr.mxu0 0.0
    %458 = vmatpush1.msra.mxu0 0.0
    %459 = vmatprep.subr.mxu0 0.0
    %460 = vmatpush1.msra.mxu0 0.0
    %461 = vmatprep.subr.mxu0 0.0
    %462 = vmatpush1.msra.mxu0 0.0
    %463 = vmatprep.subr.mxu0 0.0
    %464 = vmatpush1.msra.mxu0 0.0
    %465 = vmatprep.subr.mxu0 0.0
    %466 = vmatpush1.msra.mxu0 0.0
    %467 = vmatprep.subr.mxu0 0.0
    %468 = vmatpush1.msra.mxu0 0.0
    %469 = vmatprep.subr.mxu0 0.0
    %470 = vmatpush1.msra.mxu0 0.0
    %471 = vmatprep.subr.mxu0 0.0
    %472 = vmatpush1.msra.mxu0 0.0
    %473 = vmatprep.subr.mxu0 0.0
    %474 = vmatpush1.msra.mxu0 0.0
    %475 = vmatprep.subr.mxu0 0.0
    %476 = vmatpush1.msra.mxu0 0.0
    %477 = vmatprep.subr.mxu0 0.0
    %478 = vmatpush1.msra.mxu0 0.0
    %479 = vmatprep.subr.mxu0 0.0
    %480 = vmatpush1.msra.mxu0 0.0
    %481 = vmatprep.subr.mxu0 0.0
    %482 = vmatpush1.msra.mxu0 0.0
    %483 = vmatprep.subr.mxu0 0.0
    %484 = vmatpush1.msra.mxu0 0.0
    %485 = vmatprep.subr.mxu0 0.0
    %486 = vmatpush1.msra.mxu0 0.0
    %487 = vmatprep.mubr.f32.mxu0 0.0
    %488 = vmatmul.mubr.f32.gmra.mrb[0].mxu0 %v350
    %v489 = vpop.f32.mrb[0].mxu0
    %v490 = vadd.f32 %v345, %v489
    %v491 = vpop.f32.mrb[0].mxu0
    %492 = vdwg.mxu0
    %s493 = scalar_lea.vmem [#allocation7], 96
    %v494 = vld [vmem:[%s493] sm:$0xff]
    %v495 = vld [vmem:[%s493 + $0x8] sm:$0xff]
    %v496 = vld [vmem:[%s493 + $0x10] sm:$0xff]
    %v497 = vld [vmem:[%s493 + $0x18] sm:$0xff]
    %v498 = vld [vmem:[%s493 + $0x20] sm:$0xff]
    %v499 = vld [vmem:[%s493 + $0x28] sm:$0xff]
    %v500 = vld [vmem:[%s493 + $0x30] sm:$0xff]
    %v501 = vld [vmem:[%s493 + $0x38] sm:$0xff]
    %v502 = vld [vmem:[%s493 + $0x40] sm:$0xff]
    %v503 = vld [vmem:[%s493 + $0x48] sm:$0xff]
    %v504 = vld [vmem:[%s493 + $0x50] sm:$0xff]
    %v505 = vld [vmem:[%s493 + $0x58] sm:$0xff]
    %v507 = vlaneseq
    %v508 = vshrl.u32 %v507, 7
    %v509 = vsub.s32 0, %v508
    %v510 = vrot.slane %v103, %v509
    %v511 = vlaneseq
    %v512 = vshrl.u32 %v511, 7
    %v513 = vsub.s32 1, %v512
    %v514 = vrot.slane %v103, %v513
    %v515 = vlaneseq
    %v516 = vshrl.u32 %v515, 7
    %v517 = vsub.s32 2, %v516
    %v518 = vrot.slane %v103, %v517
    %v523 = vsel %vm138, %v316, 0
    %525 = vmatprep.subr.mxu0 %v495
    %526 = vmatpush1.msra.mxu0 %v494
    %527 = vmatprep.subr.mxu0 %v498
    %528 = vmatpush1.msra.mxu0 %v497
    %529 = vmatprep.subr.mxu0 %v501
    %530 = vmatpush1.msra.mxu0 %v500
    %531 = vmatprep.subr.mxu0 %v504
    %532 = vmatpush1.msra.mxu0 %v503
    %533 = vmatprep.subr.mxu0 0.0
    %534 = vmatpush1.msra.mxu0 0.0
    %535 = vmatprep.subr.mxu0 0.0
    %536 = vmatpush1.msra.mxu0 0.0
    %537 = vmatprep.subr.mxu0 0.0
    %538 = vmatpush1.msra.mxu0 0.0
    %539 = vmatprep.subr.mxu0 0.0
    %540 = vmatpush1.msra.mxu0 0.0
    %541 = vmatprep.subr.mxu0 0.0
    %542 = vmatpush1.msra.mxu0 0.0
    %543 = vmatprep.subr.mxu0 0.0
    %544 = vmatpush1.msra.mxu0 0.0
    %545 = vmatprep.subr.mxu0 0.0
    %546 = vmatpush1.msra.mxu0 0.0
    %547 = vmatprep.subr.mxu0 0.0
    %548 = vmatpush1.msra.mxu0 0.0
    %549 = vmatprep.subr.mxu0 0.0
    %550 = vmatpush1.msra.mxu0 0.0
    %551 = vmatprep.subr.mxu0 0.0
    %552 = vmatpush1.msra.mxu0 0.0
    %553 = vmatprep.subr.mxu0 0.0
    %554 = vmatpush1.msra.mxu0 0.0
    %555 = vmatprep.subr.mxu0 0.0
    %556 = vmatpush1.msra.mxu0 0.0
    %557 = vmatprep.subr.mxu0 0.0
    %558 = vmatpush1.msra.mxu0 0.0
    %559 = vmatprep.subr.mxu0 0.0
    %560 = vmatpush1.msra.mxu0 0.0
    %561 = vmatprep.subr.mxu0 0.0
    %562 = vmatpush1.msra.mxu0 0.0
    %563 = vmatprep.subr.mxu0 0.0
    %564 = vmatpush1.msra.mxu0 0.0
    %565 = vmatprep.subr.mxu0 0.0
    %566 = vmatpush1.msra.mxu0 0.0
    %567 = vmatprep.subr.mxu0 0.0
    %568 = vmatpush1.msra.mxu0 0.0
    %569 = vmatprep.subr.mxu0 0.0
    %570 = vmatpush1.msra.mxu0 0.0
    %571 = vmatprep.subr.mxu0 0.0
    %572 = vmatpush1.msra.mxu0 0.0
    %573 = vmatprep.subr.mxu0 0.0
    %574 = vmatpush1.msra.mxu0 0.0
    %575 = vmatprep.subr.mxu0 0.0
    %576 = vmatpush1.msra.mxu0 0.0
    %577 = vmatprep.subr.mxu0 0.0
    %578 = vmatpush1.msra.mxu0 0.0
    %579 = vmatprep.subr.mxu0 0.0
    %580 = vmatpush1.msra.mxu0 0.0
    %581 = vmatprep.subr.mxu0 0.0
    %582 = vmatpush1.msra.mxu0 0.0
    %583 = vmatprep.subr.mxu0 0.0
    %584 = vmatpush1.msra.mxu0 0.0
    %585 = vmatprep.subr.mxu0 0.0
    %586 = vmatpush1.msra.mxu0 0.0
    %587 = vmatprep.subr.mxu0 0.0
    %588 = vmatpush1.msra.mxu0 0.0
    %589 = vmatprep.mubr.f32.mxu0 0.0
    %590 = vmatmul.mubr.f32.gmra.mrb[0].mxu0 %v523
    %v591 = vpop.f32.mrb[0].mxu0
    %v592 = vadd.f32 %v510, %v591
    %v593 = vpop.f32.mrb[0].mxu0
    %v594 = vadd.f32 %v514, %v593
    %595 = vdwg.mxu0
    %596 = vmatprep.subr.mxu0 0.0
    %597 = vmatpush1.msra.mxu0 %v496
    %598 = vmatprep.subr.mxu0 0.0
    %599 = vmatpush1.msra.mxu0 %v499
    %600 = vmatprep.subr.mxu0 0.0
    %601 = vmatpush1.msra.mxu0 %v502
    %602 = vmatprep.subr.mxu0 0.0
    %603 = vmatpush1.msra.mxu0 %v505
    %604 = vmatprep.subr.mxu0 0.0
    %605 = vmatpush1.msra.mxu0 0.0
    %606 = vmatprep.subr.mxu0 0.0
    %607 = vmatpush1.msra.mxu0 0.0
    %608 = vmatprep.subr.mxu0 0.0
    %609 = vmatpush1.msra.mxu0 0.0
    %610 = vmatprep.subr.mxu0 0.0
    %611 = vmatpush1.msra.mxu0 0.0
    %612 = vmatprep.subr.mxu0 0.0
    %613 = vmatpush1.msra.mxu0 0.0
    %614 = vmatprep.subr.mxu0 0.0
    %615 = vmatpush1.msra.mxu0 0.0
    %616 = vmatprep.subr.mxu0 0.0
    %617 = vmatpush1.msra.mxu0 0.0
    %618 = vmatprep.subr.mxu0 0.0
    %619 = vmatpush1.msra.mxu0 0.0
    %620 = vmatprep.subr.mxu0 0.0
    %621 = vmatpush1.msra.mxu0 0.0
    %622 = vmatprep.subr.mxu0 0.0
    %623 = vmatpush1.msra.mxu0 0.0
    %624 = vmatprep.subr.mxu0 0.0
    %625 = vmatpush1.msra.mxu0 0.0
    %626 = vmatprep.subr.mxu0 0.0
    %627 = vmatpush1.msra.mxu0 0.0
    %628 = vmatprep.subr.mxu0 0.0
    %629 = vmatpush1.msra.mxu0 0.0
    %630 = vmatprep.subr.mxu0 0.0
    %631 = vmatpush1.msra.mxu0 0.0
    %632 = vmatprep.subr.mxu0 0.0
    %633 = vmatpush1.msra.mxu0 0.0
    %634 = vmatprep.subr.mxu0 0.0
    %635 = vmatpush1.msra.mxu0 0.0
    %636 = vmatprep.subr.mxu0 0.0
    %637 = vmatpush1.msra.mxu0 0.0
    %638 = vmatprep.subr.mxu0 0.0
    %639 = vmatpush1.msra.mxu0 0.0
    %640 = vmatprep.subr.mxu0 0.0
    %641 = vmatpush1.msra.mxu0 0.0
    %642 = vmatprep.subr.mxu0 0.0
    %643 = vmatpush1.msra.mxu0 0.0
    %644 = vmatprep.subr.mxu0 0.0
    %645 = vmatpush1.msra.mxu0 0.0
    %646 = vmatprep.subr.mxu0 0.0
    %647 = vmatpush1.msra.mxu0 0.0
    %648 = vmatprep.subr.mxu0 0.0
    %649 = vmatpush1.msra.mxu0 0.0
    %650 = vmatprep.subr.mxu0 0.0
    %651 = vmatpush1.msra.mxu0 0.0
    %652 = vmatprep.subr.mxu0 0.0
    %653 = vmatpush1.msra.mxu0 0.0
    %654 = vmatprep.subr.mxu0 0.0
    %655 = vmatpush1.msra.mxu0 0.0
    %656 = vmatprep.subr.mxu0 0.0
    %657 = vmatpush1.msra.mxu0 0.0
    %658 = vmatprep.subr.mxu0 0.0
    %659 = vmatpush1.msra.mxu0 0.0
    %660 = vmatprep.mubr.f32.mxu0 0.0
    %661 = vmatmul.mubr.f32.gmra.mrb[0].mxu0 %v523
    %v662 = vpop.f32.mrb[0].mxu0
    %v663 = vadd.f32 %v518, %v662
    %v664 = vpop.f32.mrb[0].mxu0
    %665 = vdwg.mxu0
    %v666 = vadd.f32 %v419, %v592
    %v667 = vxor.u32 %v666, 2147483648
    %v668 = vmul.f32 %v667, 1.442695
    %v669 = vpow.pop %v668
    %v670 = vadd.f32 %v669, 1.0
    %v671 = vrcp.pop %v670
    %v672 = vmul.f32 1.0, %v671
    %v673 = vadd.f32 %v421, %v594
    %v674 = vxor.u32 %v673, 2147483648
    %v675 = vmul.f32 %v674, 1.442695
    %v676 = vpow.pop %v675
    %v677 = vadd.f32 %v676, 1.0
    %v678 = vrcp.pop %v677
    %v679 = vmul.f32 1.0, %v678
    %v680 = vmul.f32 %v672, %v663
    %v681 = vadd.f32 %v490, %v680
    %v682 = vtanh.pop %v681
    %v683 = vsub.f32 1.0, %v679
    %v684 = vmul.f32 %v683, %v682
    %v685 = vmul.f32 %v679, %v316
    %v686 = vadd.f32 %v684, %v685
    %v688 = vsel %vm138, %v686, 0
    %690 = vmatprep.subr.mxu0 0.0
    %691 = vmatpush1.msra.mxu0 %v95
    %692 = vmatprep.subr.mxu0 0.0
    %693 = vmatpush1.msra.mxu0 %v96
    %694 = vmatprep.subr.mxu0 0.0
    %695 = vmatpush1.msra.mxu0 %v97
    %696 = vmatprep.subr.mxu0 0.0
    %697 = vmatpush1.msra.mxu0 %v98
    %698 = vmatprep.subr.mxu0 0.0
    %699 = vmatpush1.msra.mxu0 0.0
    %700 = vmatprep.subr.mxu0 0.0
    %701 = vmatpush1.msra.mxu0 0.0
    %702 = vmatprep.subr.mxu0 0.0
    %703 = vmatpush1.msra.mxu0 0.0
    %704 = vmatprep.subr.mxu0 0.0
    %705 = vmatpush1.msra.mxu0 0.0
    %706 = vmatprep.subr.mxu0 0.0
    %707 = vmatpush1.msra.mxu0 0.0
    %708 = vmatprep.subr.mxu0 0.0
    %709 = vmatpush1.msra.mxu0 0.0
    %710 = vmatprep.subr.mxu0 0.0
    %711 = vmatpush1.msra.mxu0 0.0
    %712 = vmatprep.subr.mxu0 0.0
    %713 = vmatpush1.msra.mxu0 0.0
    %714 = vmatprep.subr.mxu0 0.0
    %715 = vmatpush1.msra.mxu0 0.0
    %716 = vmatprep.subr.mxu0 0.0
    %717 = vmatpush1.msra.mxu0 0.0
    %718 = vmatprep.subr.mxu0 0.0
    %719 = vmatpush1.msra.mxu0 0.0
    %720 = vmatprep.subr.mxu0 0.0
    %721 = vmatpush1.msra.mxu0 0.0
    %722 = vmatprep.subr.mxu0 0.0
    %723 = vmatpush1.msra.mxu0 0.0
    %724 = vmatprep.subr.mxu0 0.0
    %725 = vmatpush1.msra.mxu0 0.0
    %726 = vmatprep.subr.mxu0 0.0
    %727 = vmatpush1.msra.mxu0 0.0
    %728 = vmatprep.subr.mxu0 0.0
    %729 = vmatpush1.msra.mxu0 0.0
    %730 = vmatprep.subr.mxu0 0.0
    %731 = vmatpush1.msra.mxu0 0.0
    %732 = vmatprep.subr.mxu0 0.0
    %733 = vmatpush1.msra.mxu0 0.0
    %734 = vmatprep.subr.mxu0 0.0
    %735 = vmatpush1.msra.mxu0 0.0
    %736 = vmatprep.subr.mxu0 0.0
    %737 = vmatpush1.msra.mxu0 0.0
    %738 = vmatprep.subr.mxu0 0.0
    %739 = vmatpush1.msra.mxu0 0.0
    %740 = vmatprep.subr.mxu0 0.0
    %741 = vmatpush1.msra.mxu0 0.0
    %742 = vmatprep.subr.mxu0 0.0
    %743 = vmatpush1.msra.mxu0 0.0
    %744 = vmatprep.subr.mxu0 0.0
    %745 = vmatpush1.msra.mxu0 0.0
    %746 = vmatprep.subr.mxu0 0.0
    %747 = vmatpush1.msra.mxu0 0.0
    %748 = vmatprep.subr.mxu0 0.0
    %749 = vmatpush1.msra.mxu0 0.0
    %750 = vmatprep.subr.mxu0 0.0
    %751 = vmatpush1.msra.mxu0 0.0
    %752 = vmatprep.subr.mxu0 0.0
    %753 = vmatpush1.msra.mxu0 0.0
    %754 = vmatprep.mubr.f32.mxu0 0.0
    %755 = vmatmul.mubr.f32.gmra.mrb[0].mxu0 %v688
    %v756 = vpop.f32.mrb[0].mxu0
    %v757 = vadd.f32 %v99, %v756
    %v758 = vpop.f32.mrb[0].mxu0
    %759 = vdwg.mxu0
    %760 = vst [vmem:[#allocation12] sm:$0x1] %v757
    %vm761 = vcmask 1040384
    %v762 = vsel %vm761, %v757, -inf
    %763 = vmax.xlane.f32.xlu0 %v762
    %v764 = vpop.xlane.xlu0 %763
    %vm765 = vcmp.ge.f32.partialorder %v757, %v764
    %v766 = vsel %vm765, %v107, -128.0
    %v767 = vsel %vm761, %v766, -inf
    %768 = vmax.xlane.f32.xlu0 %v767
    %v769 = vpop.xlane.xlu0 %768
    %s770 = vtos %v769
    %s771 = ssub.f32 0.0, %s770
    %s772 = scvt.f32.s32.to.zero.pseudo %s771
    %s773 = sld [smem:[#allocation2 + $0x8]]
    %s774 = sld [smem:[#allocation2 + $0x2]]
    %p775 = scmp.eq.s32.totalorder %s773, 1
    %s776 = scalar_select %p775, %s774, %s772
    %p777 = scmp.eq.s32.totalorder %s773, 0
    %p778 = scmp.eq.s32.totalorder %s772, %s94
    %p779 = pnand %p777, %p778
    %p780 = pneg %p779
    %s781 = scalar_select %p780, 1, 0
    %s782 = scalar_lea.vmem [#allocation9], %s776
    %v783 = vld [vmem:[%s782] sm:$0x1]
    %v784 = vmax.f32 %v783, 0.0
    %v785 = vld [vmem:[#allocation7] sm:$0xff]
    %v786 = vld [vmem:[#allocation7 + $0x8] sm:$0xff]
    %v787 = vld [vmem:[#allocation7 + $0x10] sm:$0xff]
    %v788 = vld [vmem:[#allocation7 + $0x18] sm:$0xff]
    %v789 = vld [vmem:[#allocation7 + $0x20] sm:$0xff]
    %v790 = vld [vmem:[#allocation7 + $0x28] sm:$0xff]
    %v791 = vld [vmem:[#allocation7 + $0x30] sm:$0xff]
    %v792 = vld [vmem:[#allocation7 + $0x38] sm:$0xff]
    %v793 = vld [vmem:[#allocation7 + $0x40] sm:$0xff]
    %v794 = vld [vmem:[#allocation7 + $0x48] sm:$0xff]
    %v795 = vld [vmem:[#allocation7 + $0x50] sm:$0xff]
    %v796 = vld [vmem:[#allocation7 + $0x58] sm:$0xff]
    %v798 = vsel %vm138, %v784, 0
    %800 = vmatprep.subr.mxu0 %v786
    %801 = vmatpush1.msra.mxu0 %v785
    %802 = vmatprep.subr.mxu0 %v789
    %803 = vmatpush1.msra.mxu0 %v788
    %804 = vmatprep.subr.mxu0 %v792
    %805 = vmatpush1.msra.mxu0 %v791
    %806 = vmatprep.subr.mxu0 %v795
    %807 = vmatpush1.msra.mxu0 %v794
    %808 = vmatprep.subr.mxu0 0.0
    %809 = vmatpush1.msra.mxu0 0.0
    %810 = vmatprep.subr.mxu0 0.0
    %811 = vmatpush1.msra.mxu0 0.0
    %812 = vmatprep.subr.mxu0 0.0
    %813 = vmatpush1.msra.mxu0 0.0
    %814 = vmatprep.subr.mxu0 0.0
    %815 = vmatpush1.msra.mxu0 0.0
    %816 = vmatprep.subr.mxu0 0.0
    %817 = vmatpush1.msra.mxu0 0.0
    %818 = vmatprep.subr.mxu0 0.0
    %819 = vmatpush1.msra.mxu0 0.0
    %820 = vmatprep.subr.mxu0 0.0
    %821 = vmatpush1.msra.mxu0 0.0
    %822 = vmatprep.subr.mxu0 0.0
    %823 = vmatpush1.msra.mxu0 0.0
    %824 = vmatprep.subr.mxu0 0.0
    %825 = vmatpush1.msra.mxu0 0.0
    %826 = vmatprep.subr.mxu0 0.0
    %827 = vmatpush1.msra.mxu0 0.0
    %828 = vmatprep.subr.mxu0 0.0
    %829 = vmatpush1.msra.mxu0 0.0
    %830 = vmatprep.subr.mxu0 0.0
    %831 = vmatpush1.msra.mxu0 0.0
    %832 = vmatprep.subr.mxu0 0.0
    %833 = vmatpush1.msra.mxu0 0.0
    %834 = vmatprep.subr.mxu0 0.0
    %835 = vmatpush1.msra.mxu0 0.0
    %836 = vmatprep.subr.mxu0 0.0
    %837 = vmatpush1.msra.mxu0 0.0
    %838 = vmatprep.subr.mxu0 0.0
    %839 = vmatpush1.msra.mxu0 0.0
    %840 = vmatprep.subr.mxu0 0.0
    %841 = vmatpush1.msra.mxu0 0.0
    %842 = vmatprep.subr.mxu0 0.0
    %843 = vmatpush1.msra.mxu0 0.0
    %844 = vmatprep.subr.mxu0 0.0
    %845 = vmatpush1.msra.mxu0 0.0
    %846 = vmatprep.subr.mxu0 0.0
    %847 = vmatpush1.msra.mxu0 0.0
    %848 = vmatprep.subr.mxu0 0.0
    %849 = vmatpush1.msra.mxu0 0.0
    %850 = vmatprep.subr.mxu0 0.0
    %851 = vmatpush1.msra.mxu0 0.0
    %852 = vmatprep.subr.mxu0 0.0
    %853 = vmatpush1.msra.mxu0 0.0
    %854 = vmatprep.subr.mxu0 0.0
    %855 = vmatpush1.msra.mxu0 0.0
    %856 = vmatprep.subr.mxu0 0.0
    %857 = vmatpush1.msra.mxu0 0.0
    %858 = vmatprep.subr.mxu0 0.0
    %859 = vmatpush1.msra.mxu0 0.0
    %860 = vmatprep.subr.mxu0 0.0
    %861 = vmatpush1.msra.mxu0 0.0
    %862 = vmatprep.subr.mxu0 0.0
    %863 = vmatpush1.msra.mxu0 0.0
    %864 = vmatprep.mubr.f32.mxu0 0.0
    %865 = vmatmul.mubr.f32.gmra.mrb[0].mxu0 %v798
    %v866 = vpop.f32.mrb[0].mxu0
    %v867 = vadd.f32 %v337, %v866
    %v868 = vpop.f32.mrb[0].mxu0
    %v869 = vadd.f32 %v341, %v868
    %870 = vdwg.mxu0
    %871 = vmatprep.subr.mxu0 0.0
    %872 = vmatpush1.msra.mxu0 %v787
    %873 = vmatprep.subr.mxu0 0.0
    %874 = vmatpush1.msra.mxu0 %v790
    %875 = vmatprep.subr.mxu0 0.0
    %876 = vmatpush1.msra.mxu0 %v793
    %877 = vmatprep.subr.mxu0 0.0
    %878 = vmatpush1.msra.mxu0 %v796
    %879 = vmatprep.subr.mxu0 0.0
    %880 = vmatpush1.msra.mxu0 0.0
    %881 = vmatprep.subr.mxu0 0.0
    %882 = vmatpush1.msra.mxu0 0.0
    %883 = vmatprep.subr.mxu0 0.0
    %884 = vmatpush1.msra.mxu0 0.0
    %885 = vmatprep.subr.mxu0 0.0
    %886 = vmatpush1.msra.mxu0 0.0
    %887 = vmatprep.subr.mxu0 0.0
    %888 = vmatpush1.msra.mxu0 0.0
    %889 = vmatprep.subr.mxu0 0.0
    %890 = vmatpush1.msra.mxu0 0.0
    %891 = vmatprep.subr.mxu0 0.0
    %892 = vmatpush1.msra.mxu0 0.0
    %893 = vmatprep.subr.mxu0 0.0
    %894 = vmatpush1.msra.mxu0 0.0
    %895 = vmatprep.subr.mxu0 0.0
    %896 = vmatpush1.msra.mxu0 0.0
    %897 = vmatprep.subr.mxu0 0.0
    %898 = vmatpush1.msra.mxu0 0.0
    %899 = vmatprep.subr.mxu0 0.0
    %900 = vmatpush1.msra.mxu0 0.0
    %901 = vmatprep.subr.mxu0 0.0
    %902 = vmatpush1.msra.mxu0 0.0
    %903 = vmatprep.subr.mxu0 0.0
    %904 = vmatpush1.msra.mxu0 0.0
    %905 = vmatprep.subr.mxu0 0.0
    %906 = vmatpush1.msra.mxu0 0.0
    %907 = vmatprep.subr.mxu0 0.0
    %908 = vmatpush1.msra.mxu0 0.0
    %909 = vmatprep.subr.mxu0 0.0
    %910 = vmatpush1.msra.mxu0 0.0
    %911 = vmatprep.subr.mxu0 0.0
    %912 = vmatpush1.msra.mxu0 0.0
    %913 = vmatprep.subr.mxu0 0.0
    %914 = vmatpush1.msra.mxu0 0.0
    %915 = vmatprep.subr.mxu0 0.0
    %916 = vmatpush1.msra.mxu0 0.0
    %917 = vmatprep.subr.mxu0 0.0
    %918 = vmatpush1.msra.mxu0 0.0
    %919 = vmatprep.subr.mxu0 0.0
    %920 = vmatpush1.msra.mxu0 0.0
    %921 = vmatprep.subr.mxu0 0.0
    %922 = vmatpush1.msra.mxu0 0.0
    %923 = vmatprep.subr.mxu0 0.0
    %924 = vmatpush1.msra.mxu0 0.0
    %925 = vmatprep.subr.mxu0 0.0
    %926 = vmatpush1.msra.mxu0 0.0
    %927 = vmatprep.subr.mxu0 0.0
    %928 = vmatpush1.msra.mxu0 0.0
    %929 = vmatprep.subr.mxu0 0.0
    %930 = vmatpush1.msra.mxu0 0.0
    %931 = vmatprep.subr.mxu0 0.0
    %932 = vmatpush1.msra.mxu0 0.0
    %933 = vmatprep.subr.mxu0 0.0
    %934 = vmatpush1.msra.mxu0 0.0
    %935 = vmatprep.mubr.f32.mxu0 0.0
    %936 = vmatmul.mubr.f32.gmra.mrb[0].mxu0 %v798
    %v937 = vpop.f32.mrb[0].mxu0
    %v938 = vadd.f32 %v345, %v937
    %v939 = vpop.f32.mrb[0].mxu0
    %940 = vdwg.mxu0
    %v941 = vld [vmem:[%s493] sm:$0xff]
    %v942 = vld [vmem:[%s493 + $0x8] sm:$0xff]
    %v943 = vld [vmem:[%s493 + $0x10] sm:$0xff]
    %v944 = vld [vmem:[%s493 + $0x18] sm:$0xff]
    %v945 = vld [vmem:[%s493 + $0x20] sm:$0xff]
    %v946 = vld [vmem:[%s493 + $0x28] sm:$0xff]
    %v947 = vld [vmem:[%s493 + $0x30] sm:$0xff]
    %v948 = vld [vmem:[%s493 + $0x38] sm:$0xff]
    %v949 = vld [vmem:[%s493 + $0x40] sm:$0xff]
    %v950 = vld [vmem:[%s493 + $0x48] sm:$0xff]
    %v951 = vld [vmem:[%s493 + $0x50] sm:$0xff]
    %v952 = vld [vmem:[%s493 + $0x58] sm:$0xff]
    %953 = vmatprep.subr.mxu0 %v942
    %954 = vmatpush1.msra.mxu0 %v941
    %955 = vmatprep.subr.mxu0 %v945
    %956 = vmatpush1.msra.mxu0 %v944
    %957 = vmatprep.subr.mxu0 %v948
    %958 = vmatpush1.msra.mxu0 %v947
    %959 = vmatprep.subr.mxu0 %v951
    %960 = vmatpush1.msra.mxu0 %v950
    %961 = vmatprep.subr.mxu0 0.0
    %962 = vmatpush1.msra.mxu0 0.0
    %963 = vmatprep.subr.mxu0 0.0
    %964 = vmatpush1.msra.mxu0 0.0
    %965 = vmatprep.subr.mxu0 0.0
    %966 = vmatpush1.msra.mxu0 0.0
    %967 = vmatprep.subr.mxu0 0.0
    %968 = vmatpush1.msra.mxu0 0.0
    %969 = vmatprep.subr.mxu0 0.0
    %970 = vmatpush1.msra.mxu0 0.0
    %971 = vmatprep.subr.mxu0 0.0
    %972 = vmatpush1.msra.mxu0 0.0
    %973 = vmatprep.subr.mxu0 0.0
    %974 = vmatpush1.msra.mxu0 0.0
    %975 = vmatprep.subr.mxu0 0.0
    %976 = vmatpush1.msra.mxu0 0.0
    %977 = vmatprep.subr.mxu0 0.0
    %978 = vmatpush1.msra.mxu0 0.0
    %979 = vmatprep.subr.mxu0 0.0
    %980 = vmatpush1.msra.mxu0 0.0
    %981 = vmatprep.subr.mxu0 0.0
    %982 = vmatpush1.msra.mxu0 0.0
    %983 = vmatprep.subr.mxu0 0.0
    %984 = vmatpush1.msra.mxu0 0.0
    %985 = vmatprep.subr.mxu0 0.0
    %986 = vmatpush1.msra.mxu0 0.0
    %987 = vmatprep.subr.mxu0 0.0
    %988 = vmatpush1.msra.mxu0 0.0
    %989 = vmatprep.subr.mxu0 0.0
    %990 = vmatpush1.msra.mxu0 0.0
    %991 = vmatprep.subr.mxu0 0.0
    %992 = vmatpush1.msra.mxu0 0.0
    %993 = vmatprep.subr.mxu0 0.0
    %994 = vmatpush1.msra.mxu0 0.0
    %995 = vmatprep.subr.mxu0 0.0
    %996 = vmatpush1.msra.mxu0 0.0
    %997 = vmatprep.subr.mxu0 0.0
    %998 = vmatpush1.msra.mxu0 0.0
    %999 = vmatprep.subr.mxu0 0.0
    %1000 = vmatpush1.msra.mxu0 0.0
    %1001 = vmatprep.subr.mxu0 0.0
    %1002 = vmatpush1.msra.mxu0 0.0
    %1003 = vmatprep.subr.mxu0 0.0
    %1004 = vmatpush1.msra.mxu0 0.0
    %1005 = vmatprep.subr.mxu0 0.0
    %1006 = vmatpush1.msra.mxu0 0.0
    %1007 = vmatprep.subr.mxu0 0.0
    %1008 = vmatpush1.msra.mxu0 0.0
    %1009 = vmatprep.subr.mxu0 0.0
    %1010 = vmatpush1.msra.mxu0 0.0
    %1011 = vmatprep.subr.mxu0 0.0
    %1012 = vmatpush1.msra.mxu0 0.0
    %1013 = vmatprep.subr.mxu0 0.0
    %1014 = vmatpush1.msra.mxu0 0.0
    %1015 = vmatprep.subr.mxu0 0.0
    %1016 = vmatpush1.msra.mxu0 0.0
    %1017 = vmatprep.mubr.f32.mxu0 0.0
    %1018 = vmatmul.mubr.f32.gmra.mrb[0].mxu0 %v688
    %v1019 = vpop.f32.mrb[0].mxu0
    %v1020 = vadd.f32 %v510, %v1019
    %v1021 = vpop.f32.mrb[0].mxu0
    %v1022 = vadd.f32 %v514, %v1021
    %1023 = vdwg.mxu0
    %1024 = vmatprep.subr.mxu0 0.0
    %1025 = vmatpush1.msra.mxu0 %v943
    %1026 = vmatprep.subr.mxu0 0.0
    %1027 = vmatpush1.msra.mxu0 %v946
    %1028 = vmatprep.subr.mxu0 0.0
    %1029 = vmatpush1.msra.mxu0 %v949
    %1030 = vmatprep.subr.mxu0 0.0
    %1031 = vmatpush1.msra.mxu0 %v952
    %1032 = vmatprep.subr.mxu0 0.0
    %1033 = vmatpush1.msra.mxu0 0.0
    %1034 = vmatprep.subr.mxu0 0.0
    %1035 = vmatpush1.msra.mxu0 0.0
    %1036 = vmatprep.subr.mxu0 0.0
    %1037 = vmatpush1.msra.mxu0 0.0
    %1038 = vmatprep.subr.mxu0 0.0
    %1039 = vmatpush1.msra.mxu0 0.0
    %1040 = vmatprep.subr.mxu0 0.0
    %1041 = vmatpush1.msra.mxu0 0.0
    %1042 = vmatprep.subr.mxu0 0.0
    %1043 = vmatpush1.msra.mxu0 0.0
    %1044 = vmatprep.subr.mxu0 0.0
    %1045 = vmatpush1.msra.mxu0 0.0
    %1046 = vmatprep.subr.mxu0 0.0
    %1047 = vmatpush1.msra.mxu0 0.0
    %1048 = vmatprep.subr.mxu0 0.0
    %1049 = vmatpush1.msra.mxu0 0.0
    %1050 = vmatprep.subr.mxu0 0.0
    %1051 = vmatpush1.msra.mxu0 0.0
    %1052 = vmatprep.subr.mxu0 0.0
    %1053 = vmatpush1.msra.mxu0 0.0
    %1054 = vmatprep.subr.mxu0 0.0
    %1055 = vmatpush1.msra.mxu0 0.0
    %1056 = vmatprep.subr.mxu0 0.0
    %1057 = vmatpush1.msra.mxu0 0.0
    %1058 = vmatprep.subr.mxu0 0.0
    %1059 = vmatpush1.msra.mxu0 0.0
    %1060 = vmatprep.subr.mxu0 0.0
    %1061 = vmatpush1.msra.mxu0 0.0
    %1062 = vmatprep.subr.mxu0 0.0
    %1063 = vmatpush1.msra.mxu0 0.0
    %1064 = vmatprep.subr.mxu0 0.0
    %1065 = vmatpush1.msra.mxu0 0.0
    %1066 = vmatprep.subr.mxu0 0.0
    %1067 = vmatpush1.msra.mxu0 0.0
    %1068 = vmatprep.subr.mxu0 0.0
    %1069 = vmatpush1.msra.mxu0 0.0
    %1070 = vmatprep.subr.mxu0 0.0
    %1071 = vmatpush1.msra.mxu0 0.0
    %1072 = vmatprep.subr.mxu0 0.0
    %1073 = vmatpush1.msra.mxu0 0.0
    %1074 = vmatprep.subr.mxu0 0.0
    %1075 = vmatpush1.msra.mxu0 0.0
    %1076 = vmatprep.subr.mxu0 0.0
    %1077 = vmatpush1.msra.mxu0 0.0
    %1078 = vmatprep.subr.mxu0 0.0
    %1079 = vmatpush1.msra.mxu0 0.0
    %1080 = vmatprep.subr.mxu0 0.0
    %1081 = vmatpush1.msra.mxu0 0.0
    %1082 = vmatprep.subr.mxu0 0.0
    %1083 = vmatpush1.msra.mxu0 0.0
    %1084 = vmatprep.subr.mxu0 0.0
    %1085 = vmatpush1.msra.mxu0 0.0
    %1086 = vmatprep.subr.mxu0 0.0
    %1087 = vmatpush1.msra.mxu0 0.0
    %1088 = vmatprep.mubr.f32.mxu0 0.0
    %1089 = vmatmul.mubr.f32.gmra.mrb[0].mxu0 %v688
    %v1090 = vpop.f32.mrb[0].mxu0
    %v1091 = vadd.f32 %v518, %v1090
    %v1092 = vpop.f32.mrb[0].mxu0
    %1093 = vdwg.mxu0
    %v1094 = vadd.f32 %v867, %v1020
    %v1095 = vxor.u32 %v1094, 2147483648
    %v1096 = vmul.f32 %v1095, 1.442695
    %v1097 = vpow.pop %v1096
    %v1098 = vadd.f32 %v1097, 1.0
    %v1099 = vrcp.pop %v1098
    %v1100 = vmul.f32 1.0, %v1099
    %v1101 = vadd.f32 %v869, %v1022
    %v1102 = vxor.u32 %v1101, 2147483648
    %v1103 = vmul.f32 %v1102, 1.442695
    %v1104 = vpow.pop %v1103
    %v1105 = vadd.f32 %v1104, 1.0
    %v1106 = vrcp.pop %v1105
    %v1107 = vmul.f32 1.0, %v1106
    %v1108 = vmul.f32 %v1100, %v1091
    %v1109 = vadd.f32 %v938, %v1108
    %v1110 = vtanh.pop %v1109
    %v1111 = vsub.f32 1.0, %v1107
    %v1112 = vmul.f32 %v1111, %v1110
    %v1113 = vmul.f32 %v1107, %v686
    %v1114 = vadd.f32 %v1112, %v1113
    %v1116 = vsel %vm138, %v1114, 0
    %1118 = vmatprep.subr.mxu0 0.0
    %1119 = vmatpush1.msra.mxu0 %v95
    %1120 = vmatprep.subr.mxu0 0.0
    %1121 = vmatpush1.msra.mxu0 %v96
    %1122 = vmatprep.subr.mxu0 0.0
    %1123 = vmatpush1.msra.mxu0 %v97
    %1124 = vmatprep.subr.mxu0 0.0
    %1125 = vmatpush1.msra.mxu0 %v98
    %1126 = vmatprep.subr.mxu0 0.0
    %1127 = vmatpush1.msra.mxu0 0.0
    %1128 = vmatprep.subr.mxu0 0.0
    %1129 = vmatpush1.msra.mxu0 0.0
    %1130 = vmatprep.subr.mxu0 0.0
    %1131 = vmatpush1.msra.mxu0 0.0
    %1132 = vmatprep.subr.mxu0 0.0
    %1133 = vmatpush1.msra.mxu0 0.0
    %1134 = vmatprep.subr.mxu0 0.0
    %1135 = vmatpush1.msra.mxu0 0.0
    %1136 = vmatprep.subr.mxu0 0.0
    %1137 = vmatpush1.msra.mxu0 0.0
    %1138 = vmatprep.subr.mxu0 0.0
    %1139 = vmatpush1.msra.mxu0 0.0
    %1140 = vmatprep.subr.mxu0 0.0
    %1141 = vmatpush1.msra.mxu0 0.0
    %1142 = vmatprep.subr.mxu0 0.0
    %1143 = vmatpush1.msra.mxu0 0.0
    %1144 = vmatprep.subr.mxu0 0.0
    %1145 = vmatpush1.msra.mxu0 0.0
    %1146 = vmatprep.subr.mxu0 0.0
    %1147 = vmatpush1.msra.mxu0 0.0
    %1148 = vmatprep.subr.mxu0 0.0
    %1149 = vmatpush1.msra.mxu0 0.0
    %1150 = vmatprep.subr.mxu0 0.0
    %1151 = vmatpush1.msra.mxu0 0.0
    %1152 = vmatprep.subr.mxu0 0.0
    %1153 = vmatpush1.msra.mxu0 0.0
    %1154 = vmatprep.subr.mxu0 0.0
    %1155 = vmatpush1.msra.mxu0 0.0
    %1156 = vmatprep.subr.mxu0 0.0
    %1157 = vmatpush1.msra.mxu0 0.0
    %1158 = vmatprep.subr.mxu0 0.0
    %1159 = vmatpush1.msra.mxu0 0.0
    %1160 = vmatprep.subr.mxu0 0.0
    %1161 = vmatpush1.msra.mxu0 0.0
    %1162 = vmatprep.subr.mxu0 0.0
    %1163 = vmatpush1.msra.mxu0 0.0
    %1164 = vmatprep.subr.mxu0 0.0
    %1165 = vmatpush1.msra.mxu0 0.0
    %1166 = vmatprep.subr.mxu0 0.0
    %1167 = vmatpush1.msra.mxu0 0.0
    %1168 = vmatprep.subr.mxu0 0.0
    %1169 = vmatpush1.msra.mxu0 0.0
    %1170 = vmatprep.subr.mxu0 0.0
    %1171 = vmatpush1.msra.mxu0 0.0
    %1172 = vmatprep.subr.mxu0 0.0
    %1173 = vmatpush1.msra.mxu0 0.0
    %1174 = vmatprep.subr.mxu0 0.0
    %1175 = vmatpush1.msra.mxu0 0.0
    %1176 = vmatprep.subr.mxu0 0.0
    %1177 = vmatpush1.msra.mxu0 0.0
    %1178 = vmatprep.subr.mxu0 0.0
    %1179 = vmatpush1.msra.mxu0 0.0
    %1180 = vmatprep.subr.mxu0 0.0
    %1181 = vmatpush1.msra.mxu0 0.0
    %1182 = vmatprep.mubr.f32.mxu0 0.0
    %1183 = vmatmul.mubr.f32.gmra.mrb[0].mxu0 %v1116
    %v1184 = vpop.f32.mrb[0].mxu0
    %v1185 = vadd.f32 %v99, %v1184
    %v1186 = vpop.f32.mrb[0].mxu0
    %1187 = vdwg.mxu0
    %1188 = vst [vmem:[#allocation12 + $0x1] sm:$0x1] %v1185
    %v1189 = vsel %vm761, %v1185, -inf
    %1190 = vmax.xlane.f32.xlu0 %v1189
    %v1191 = vpop.xlane.xlu0 %1190
    %vm1192 = vcmp.ge.f32.partialorder %v1185, %v1191
    %v1193 = vsel %vm1192, %v107, -128.0
    %v1194 = vsel %vm761, %v1193, -inf
    %1195 = vmax.xlane.f32.xlu0 %v1194
    %v1196 = vpop.xlane.xlu0 %1195
    %s1197 = vtos %v1196
    %s1198 = ssub.f32 0.0, %s1197
    %s1199 = scvt.f32.s32.to.zero.pseudo %s1198
    %s1200 = sld [smem:[#allocation2 + $0x9]]
    %s1201 = sld [smem:[#allocation2 + $0x3]]
    %p1202 = scmp.eq.s32.totalorder %s1200, 1
    %s1203 = scalar_select %p1202, %s1201, %s1199
    %p1204 = scmp.eq.s32.totalorder %s781, 0
    %s1205 = scalar_select %p1204, 1, 0
    %s1206 = sadd.s32 %s1205, 1
    %p1207 = scmp.eq.s32.totalorder %s1200, 0
    %p1208 = scmp.eq.s32.totalorder %s1199, %s94
    %p1209 = pnand %p1207, %p1208
    %p1210 = pneg %p1209
    %s1211 = scalar_select %p1210, 1, %s781
    %s1212 = scalar_lea.vmem [#allocation9], %s1203
    %v1213 = vld [vmem:[%s1212] sm:$0x1]
    %v1214 = vmax.f32 %v1213, 0.0
    %v1215 = vld [vmem:[#allocation7] sm:$0xff]
    %v1216 = vld [vmem:[#allocation7 + $0x8] sm:$0xff]
    %v1217 = vld [vmem:[#allocation7 + $0x10] sm:$0xff]
    %v1218 = vld [vmem:[#allocation7 + $0x18] sm:$0xff]
    %v1219 = vld [vmem:[#allocation7 + $0x20] sm:$0xff]
    %v1220 = vld [vmem:[#allocation7 + $0x28] sm:$0xff]
    %v1221 = vld [vmem:[#allocation7 + $0x30] sm:$0xff]
    %v1222 = vld [vmem:[#allocation7 + $0x38] sm:$0xff]
    %v1223 = vld [vmem:[#allocation7 + $0x40] sm:$0xff]
    %v1224 = vld [vmem:[#allocation7 + $0x48] sm:$0xff]
    %v1225 = vld [vmem:[#allocation7 + $0x50] sm:$0xff]
    %v1226 = vld [vmem:[#allocation7 + $0x58] sm:$0xff]
    %v1228 = vsel %vm138, %v1214, 0
    %1230 = vmatprep.subr.mxu0 %v1216
    %1231 = vmatpush1.msra.mxu0 %v1215
    %1232 = vmatprep.subr.mxu0 %v1219
    %1233 = vmatpush1.msra.mxu0 %v1218
    %1234 = vmatprep.subr.mxu0 %v1222
    %1235 = vmatpush1.msra.mxu0 %v1221
    %1236 = vmatprep.subr.mxu0 %v1225
    %1237 = vmatpush1.msra.mxu0 %v1224
    %1238 = vmatprep.subr.mxu0 0.0
    %1239 = vmatpush1.msra.mxu0 0.0
    %1240 = vmatprep.subr.mxu0 0.0
    %1241 = vmatpush1.msra.mxu0 0.0
    %1242 = vmatprep.subr.mxu0 0.0
    %1243 = vmatpush1.msra.mxu0 0.0
    %1244 = vmatprep.subr.mxu0 0.0
    %1245 = vmatpush1.msra.mxu0 0.0
    %1246 = vmatprep.subr.mxu0 0.0
    %1247 = vmatpush1.msra.mxu0 0.0
    %1248 = vmatprep.subr.mxu0 0.0
    %1249 = vmatpush1.msra.mxu0 0.0
    %1250 = vmatprep.subr.mxu0 0.0
    %1251 = vmatpush1.msra.mxu0 0.0
    %1252 = vmatprep.subr.mxu0 0.0
    %1253 = vmatpush1.msra.mxu0 0.0
    %1254 = vmatprep.subr.mxu0 0.0
    %1255 = vmatpush1.msra.mxu0 0.0
    %1256 = vmatprep.subr.mxu0 0.0
    %1257 = vmatpush1.msra.mxu0 0.0
    %1258 = vmatprep.subr.mxu0 0.0
    %1259 = vmatpush1.msra.mxu0 0.0
    %1260 = vmatprep.subr.mxu0 0.0
    %1261 = vmatpush1.msra.mxu0 0.0
    %1262 = vmatprep.subr.mxu0 0.0
    %1263 = vmatpush1.msra.mxu0 0.0
    %1264 = vmatprep.subr.mxu0 0.0
    %1265 = vmatpush1.msra.mxu0 0.0
    %1266 = vmatprep.subr.mxu0 0.0
    %1267 = vmatpush1.msra.mxu0 0.0
    %1268 = vmatprep.subr.mxu0 0.0
    %1269 = vmatpush1.msra.mxu0 0.0
    %1270 = vmatprep.subr.mxu0 0.0
    %1271 = vmatpush1.msra.mxu0 0.0
    %1272 = vmatprep.subr.mxu0 0.0
    %1273 = vmatpush1.msra.mxu0 0.0
    %1274 = vmatprep.subr.mxu0 0.0
    %1275 = vmatpush1.msra.mxu0 0.0
    %1276 = vmatprep.subr.mxu0 0.0
    %1277 = vmatpush1.msra.mxu0 0.0
    %1278 = vmatprep.subr.mxu0 0.0
    %1279 = vmatpush1.msra.mxu0 0.0
    %1280 = vmatprep.subr.mxu0 0.0
    %1281 = vmatpush1.msra.mxu0 0.0
    %1282 = vmatprep.subr.mxu0 0.0
    %1283 = vmatpush1.msra.mxu0 0.0
    %1284 = vmatprep.subr.mxu0 0.0
    %1285 = vmatpush1.msra.mxu0 0.0
    %1286 = vmatprep.subr.mxu0 0.0
    %1287 = vmatpush1.msra.mxu0 0.0
    %1288 = vmatprep.subr.mxu0 0.0
    %1289 = vmatpush1.msra.mxu0 0.0
    %1290 = vmatprep.subr.mxu0 0.0
    %1291 = vmatpush1.msra.mxu0 0.0
    %1292 = vmatprep.subr.mxu0 0.0
    %1293 = vmatpush1.msra.mxu0 0.0
    %1294 = vmatprep.mubr.f32.mxu0 0.0
    %1295 = vmatmul.mubr.f32.gmra.mrb[0].mxu0 %v1228
    %v1296 = vpop.f32.mrb[0].mxu0
    %v1297 = vadd.f32 %v337, %v1296
    %v1298 = vpop.f32.mrb[0].mxu0
    %v1299 = vadd.f32 %v341, %v1298
    %1300 = vdwg.mxu0
    %1301 = vmatprep.subr.mxu0 0.0
    %1302 = vmatpush1.msra.mxu0 %v1217
    %1303 = vmatprep.subr.mxu0 0.0
    %1304 = vmatpush1.msra.mxu0 %v1220
    %1305 = vmatprep.subr.mxu0 0.0
    %1306 = vmatpush1.msra.mxu0 %v1223
    %1307 = vmatprep.subr.mxu0 0.0
    %1308 = vmatpush1.msra.mxu0 %v1226
    %1309 = vmatprep.subr.mxu0 0.0
    %1310 = vmatpush1.msra.mxu0 0.0
    %1311 = vmatprep.subr.mxu0 0.0
    %1312 = vmatpush1.msra.mxu0 0.0
    %1313 = vmatprep.subr.mxu0 0.0
    %1314 = vmatpush1.msra.mxu0 0.0
    %1315 = vmatprep.subr.mxu0 0.0
    %1316 = vmatpush1.msra.mxu0 0.0
    %1317 = vmatprep.subr.mxu0 0.0
    %1318 = vmatpush1.msra.mxu0 0.0
    %1319 = vmatprep.subr.mxu0 0.0
    %1320 = vmatpush1.msra.mxu0 0.0
    %1321 = vmatprep.subr.mxu0 0.0
    %1322 = vmatpush1.msra.mxu0 0.0
    %1323 = vmatprep.subr.mxu0 0.0
    %1324 = vmatpush1.msra.mxu0 0.0
    %1325 = vmatprep.subr.mxu0 0.0
    %1326 = vmatpush1.msra.mxu0 0.0
    %1327 = vmatprep.subr.mxu0 0.0
    %1328 = vmatpush1.msra.mxu0 0.0
    %1329 = vmatprep.subr.mxu0 0.0
    %1330 = vmatpush1.msra.mxu0 0.0
    %1331 = vmatprep.subr.mxu0 0.0
    %1332 = vmatpush1.msra.mxu0 0.0
    %1333 = vmatprep.subr.mxu0 0.0
    %1334 = vmatpush1.msra.mxu0 0.0
    %1335 = vmatprep.subr.mxu0 0.0
    %1336 = vmatpush1.msra.mxu0 0.0
    %1337 = vmatprep.subr.mxu0 0.0
    %1338 = vmatpush1.msra.mxu0 0.0
    %1339 = vmatprep.subr.mxu0 0.0
    %1340 = vmatpush1.msra.mxu0 0.0
    %1341 = vmatprep.subr.mxu0 0.0
    %1342 = vmatpush1.msra.mxu0 0.0
    %1343 = vmatprep.subr.mxu0 0.0
    %1344 = vmatpush1.msra.mxu0 0.0
    %1345 = vmatprep.subr.mxu0 0.0
    %1346 = vmatpush1.msra.mxu0 0.0
    %1347 = vmatprep.subr.mxu0 0.0
    %1348 = vmatpush1.msra.mxu0 0.0
    %1349 = vmatprep.subr.mxu0 0.0
    %1350 = vmatpush1.msra.mxu0 0.0
    %1351 = vmatprep.subr.mxu0 0.0
    %1352 = vmatpush1.msra.mxu0 0.0
    %1353 = vmatprep.subr.mxu0 0.0
    %1354 = vmatpush1.msra.mxu0 0.0
    %1355 = vmatprep.subr.mxu0 0.0
    %1356 = vmatpush1.msra.mxu0 0.0
    %1357 = vmatprep.subr.mxu0 0.0
    %1358 = vmatpush1.msra.mxu0 0.0
    %1359 = vmatprep.subr.mxu0 0.0
    %1360 = vmatpush1.msra.mxu0 0.0
    %1361 = vmatprep.subr.mxu0 0.0
    %1362 = vmatpush1.msra.mxu0 0.0
    %1363 = vmatprep.subr.mxu0 0.0
    %1364 = vmatpush1.msra.mxu0 0.0
    %1365 = vmatprep.mubr.f32.mxu0 0.0
    %1366 = vmatmul.mubr.f32.gmra.mrb[0].mxu0 %v1228
    %v1367 = vpop.f32.mrb[0].mxu0
    %v1368 = vadd.f32 %v345, %v1367
    %v1369 = vpop.f32.mrb[0].mxu0
    %1370 = vdwg.mxu0
    %v1371 = vld [vmem:[%s493] sm:$0xff]
    %v1372 = vld [vmem:[%s493 + $0x8] sm:$0xff]
    %v1373 = vld [vmem:[%s493 + $0x10] sm:$0xff]
    %v1374 = vld [vmem:[%s493 + $0x18] sm:$0xff]
    %v1375 = vld [vmem:[%s493 + $0x20] sm:$0xff]
    %v1376 = vld [vmem:[%s493 + $0x28] sm:$0xff]
    %v1377 = vld [vmem:[%s493 + $0x30] sm:$0xff]
    %v1378 = vld [vmem:[%s493 + $0x38] sm:$0xff]
    %v1379 = vld [vmem:[%s493 + $0x40] sm:$0xff]
    %v1380 = vld [vmem:[%s493 + $0x48] sm:$0xff]
    %v1381 = vld [vmem:[%s493 + $0x50] sm:$0xff]
    %v1382 = vld [vmem:[%s493 + $0x58] sm:$0xff]
    %1383 = vmatprep.subr.mxu0 %v1372
    %1384 = vmatpush1.msra.mxu0 %v1371
    %1385 = vmatprep.subr.mxu0 %v1375
    %1386 = vmatpush1.msra.mxu0 %v1374
    %1387 = vmatprep.subr.mxu0 %v1378
    %1388 = vmatpush1.msra.mxu0 %v1377
    %1389 = vmatprep.subr.mxu0 %v1381
    %1390 = vmatpush1.msra.mxu0 %v1380
    %1391 = vmatprep.subr.mxu0 0.0
    %1392 = vmatpush1.msra.mxu0 0.0
    %1393 = vmatprep.subr.mxu0 0.0
    %1394 = vmatpush1.msra.mxu0 0.0
    %1395 = vmatprep.subr.mxu0 0.0
    %1396 = vmatpush1.msra.mxu0 0.0
    %1397 = vmatprep.subr.mxu0 0.0
    %1398 = vmatpush1.msra.mxu0 0.0
    %1399 = vmatprep.subr.mxu0 0.0
    %1400 = vmatpush1.msra.mxu0 0.0
    %1401 = vmatprep.subr.mxu0 0.0
    %1402 = vmatpush1.msra.mxu0 0.0
    %1403 = vmatprep.subr.mxu0 0.0
    %1404 = vmatpush1.msra.mxu0 0.0
    %1405 = vmatprep.subr.mxu0 0.0
    %1406 = vmatpush1.msra.mxu0 0.0
    %1407 = vmatprep.subr.mxu0 0.0
    %1408 = vmatpush1.msra.mxu0 0.0
    %1409 = vmatprep.subr.mxu0 0.0
    %1410 = vmatpush1.msra.mxu0 0.0
    %1411 = vmatprep.subr.mxu0 0.0
    %1412 = vmatpush1.msra.mxu0 0.0
    %1413 = vmatprep.subr.mxu0 0.0
    %1414 = vmatpush1.msra.mxu0 0.0
    %1415 = vmatprep.subr.mxu0 0.0
    %1416 = vmatpush1.msra.mxu0 0.0
    %1417 = vmatprep.subr.mxu0 0.0
    %1418 = vmatpush1.msra.mxu0 0.0
    %1419 = vmatprep.subr.mxu0 0.0
    %1420 = vmatpush1.msra.mxu0 0.0
    %1421 = vmatprep.subr.mxu0 0.0
    %1422 = vmatpush1.msra.mxu0 0.0
    %1423 = vmatprep.subr.mxu0 0.0
    %1424 = vmatpush1.msra.mxu0 0.0
    %1425 = vmatprep.subr.mxu0 0.0
    %1426 = vmatpush1.msra.mxu0 0.0
    %1427 = vmatprep.subr.mxu0 0.0
    %1428 = vmatpush1.msra.mxu0 0.0
    %1429 = vmatprep.subr.mxu0 0.0
    %1430 = vmatpush1.msra.mxu0 0.0
    %1431 = vmatprep.subr.mxu0 0.0
    %1432 = vmatpush1.msra.mxu0 0.0
    %1433 = vmatprep.subr.mxu0 0.0
    %1434 = vmatpush1.msra.mxu0 0.0
    %1435 = vmatprep.subr.mxu0 0.0
    %1436 = vmatpush1.msra.mxu0 0.0
    %1437 = vmatprep.subr.mxu0 0.0
    %1438 = vmatpush1.msra.mxu0 0.0
    %1439 = vmatprep.subr.mxu0 0.0
    %1440 = vmatpush1.msra.mxu0 0.0
    %1441 = vmatprep.subr.mxu0 0.0
    %1442 = vmatpush1.msra.mxu0 0.0
    %1443 = vmatprep.subr.mxu0 0.0
    %1444 = vmatpush1.msra.mxu0 0.0
    %1445 = vmatprep.subr.mxu0 0.0
    %1446 = vmatpush1.msra.mxu0 0.0
    %1447 = vmatprep.mubr.f32.mxu0 0.0
    %1448 = vmatmul.mubr.f32.gmra.mrb[0].mxu0 %v1116
    %v1449 = vpop.f32.mrb[0].mxu0
    %v1450 = vadd.f32 %v510, %v1449
    %v1451 = vpop.f32.mrb[0].mxu0
    %v1452 = vadd.f32 %v514, %v1451
    %1453 = vdwg.mxu0
    %1454 = vmatprep.subr.mxu0 0.0
    %1455 = vmatpush1.msra.mxu0 %v1373
    %1456 = vmatprep.subr.mxu0 0.0
    %1457 = vmatpush1.msra.mxu0 %v1376
    %1458 = vmatprep.subr.mxu0 0.0
    %1459 = vmatpush1.msra.mxu0 %v1379
    %1460 = vmatprep.subr.mxu0 0.0
    %1461 = vmatpush1.msra.mxu0 %v1382
    %1462 = vmatprep.subr.mxu0 0.0
    %1463 = vmatpush1.msra.mxu0 0.0
    %1464 = vmatprep.subr.mxu0 0.0
    %1465 = vmatpush1.msra.mxu0 0.0
    %1466 = vmatprep.subr.mxu0 0.0
    %1467 = vmatpush1.msra.mxu0 0.0
    %1468 = vmatprep.subr.mxu0 0.0
    %1469 = vmatpush1.msra.mxu0 0.0
    %1470 = vmatprep.subr.mxu0 0.0
    %1471 = vmatpush1.msra.mxu0 0.0
    %1472 = vmatprep.subr.mxu0 0.0
    %1473 = vmatpush1.msra.mxu0 0.0
    %1474 = vmatprep.subr.mxu0 0.0
    %1475 = vmatpush1.msra.mxu0 0.0
    %1476 = vmatprep.subr.mxu0 0.0
    %1477 = vmatpush1.msra.mxu0 0.0
    %1478 = vmatprep.subr.mxu0 0.0
    %1479 = vmatpush1.msra.mxu0 0.0
    %1480 = vmatprep.subr.mxu0 0.0
    %1481 = vmatpush1.msra.mxu0 0.0
    %1482 = vmatprep.subr.mxu0 0.0
    %1483 = vmatpush1.msra.mxu0 0.0
    %1484 = vmatprep.subr.mxu0 0.0
    %1485 = vmatpush1.msra.mxu0 0.0
    %1486 = vmatprep.subr.mxu0 0.0
    %1487 = vmatpush1.msra.mxu0 0.0
    %1488 = vmatprep.subr.mxu0 0.0
    %1489 = vmatpush1.msra.mxu0 0.0
    %1490 = vmatprep.subr.mxu0 0.0
    %1491 = vmatpush1.msra.mxu0 0.0
    %1492 = vmatprep.subr.mxu0 0.0
    %1493 = vmatpush1.msra.mxu0 0.0
    %1494 = vmatprep.subr.mxu0 0.0
    %1495 = vmatpush1.msra.mxu0 0.0
    %1496 = vmatprep.subr.mxu0 0.0
    %1497 = vmatpush1.msra.mxu0 0.0
    %1498 = vmatprep.subr.mxu0 0.0
    %1499 = vmatpush1.msra.mxu0 0.0
    %1500 = vmatprep.subr.mxu0 0.0
    %1501 = vmatpush1.msra.mxu0 0.0
    %1502 = vmatprep.subr.mxu0 0.0
    %1503 = vmatpush1.msra.mxu0 0.0
    %1504 = vmatprep.subr.mxu0 0.0
    %1505 = vmatpush1.msra.mxu0 0.0
    %1506 = vmatprep.subr.mxu0 0.0
    %1507 = vmatpush1.msra.mxu0 0.0
    %1508 = vmatprep.subr.mxu0 0.0
    %1509 = vmatpush1.msra.mxu0 0.0
    %1510 = vmatprep.subr.mxu0 0.0
    %1511 = vmatpush1.msra.mxu0 0.0
    %1512 = vmatprep.subr.mxu0 0.0
    %1513 = vmatpush1.msra.mxu0 0.0
    %1514 = vmatprep.subr.mxu0 0.0
    %1515 = vmatpush1.msra.mxu0 0.0
    %1516 = vmatprep.subr.mxu0 0.0
    %1517 = vmatpush1.msra.mxu0 0.0
    %1518 = vmatprep.mubr.f32.mxu0 0.0
    %1519 = vmatmul.mubr.f32.gmra.mrb[0].mxu0 %v1116
    %v1520 = vpop.f32.mrb[0].mxu0
    %v1521 = vadd.f32 %v518, %v1520
    %v1522 = vpop.f32.mrb[0].mxu0
    %1523 = vdwg.mxu0
    %v1524 = vadd.f32 %v1297, %v1450
    %v1525 = vxor.u32 %v1524, 2147483648
    %v1526 = vmul.f32 %v1525, 1.442695
    %v1527 = vpow.pop %v1526
    %v1528 = vadd.f32 %v1527, 1.0
    %v1529 = vrcp.pop %v1528
    %v1530 = vmul.f32 1.0, %v1529
    %v1531 = vadd.f32 %v1299, %v1452
    %v1532 = vxor.u32 %v1531, 2147483648
    %v1533 = vmul.f32 %v1532, 1.442695
    %v1534 = vpow.pop %v1533
    %v1535 = vadd.f32 %v1534, 1.0
    %v1536 = vrcp.pop %v1535
    %v1537 = vmul.f32 1.0, %v1536
    %v1538 = vmul.f32 %v1530, %v1521
    %v1539 = vadd.f32 %v1368, %v1538
    %v1540 = vtanh.pop %v1539
    %v1541 = vsub.f32 1.0, %v1537
    %v1542 = vmul.f32 %v1541, %v1540
    %v1543 = vmul.f32 %v1537, %v1114
    %v1544 = vadd.f32 %v1542, %v1543
    %v1546 = vsel %vm138, %v1544, 0
    %1548 = vmatprep.subr.mxu0 0.0
    %1549 = vmatpush1.msra.mxu0 %v95
    %1550 = vmatprep.subr.mxu0 0.0
    %1551 = vmatpush1.msra.mxu0 %v96
    %1552 = vmatprep.subr.mxu0 0.0
    %1553 = vmatpush1.msra.mxu0 %v97
    %1554 = vmatprep.subr.mxu0 0.0
    %1555 = vmatpush1.msra.mxu0 %v98
    %1556 = vmatprep.subr.mxu0 0.0
    %1557 = vmatpush1.msra.mxu0 0.0
    %1558 = vmatprep.subr.mxu0 0.0
    %1559 = vmatpush1.msra.mxu0 0.0
    %1560 = vmatprep.subr.mxu0 0.0
    %1561 = vmatpush1.msra.mxu0 0.0
    %1562 = vmatprep.subr.mxu0 0.0
    %1563 = vmatpush1.msra.mxu0 0.0
    %1564 = vmatprep.subr.mxu0 0.0
    %1565 = vmatpush1.msra.mxu0 0.0
    %1566 = vmatprep.subr.mxu0 0.0
    %1567 = vmatpush1.msra.mxu0 0.0
    %1568 = vmatprep.subr.mxu0 0.0
    %1569 = vmatpush1.msra.mxu0 0.0
    %1570 = vmatprep.subr.mxu0 0.0
    %1571 = vmatpush1.msra.mxu0 0.0
    %1572 = vmatprep.subr.mxu0 0.0
    %1573 = vmatpush1.msra.mxu0 0.0
    %1574 = vmatprep.subr.mxu0 0.0
    %1575 = vmatpush1.msra.mxu0 0.0
    %1576 = vmatprep.subr.mxu0 0.0
    %1577 = vmatpush1.msra.mxu0 0.0
    %1578 = vmatprep.subr.mxu0 0.0
    %1579 = vmatpush1.msra.mxu0 0.0
    %1580 = vmatprep.subr.mxu0 0.0
    %1581 = vmatpush1.msra.mxu0 0.0
    %1582 = vmatprep.subr.mxu0 0.0
    %1583 = vmatpush1.msra.mxu0 0.0
    %1584 = vmatprep.subr.mxu0 0.0
    %1585 = vmatpush1.msra.mxu0 0.0
    %1586 = vmatprep.subr.mxu0 0.0
    %1587 = vmatpush1.msra.mxu0 0.0
    %1588 = vmatprep.subr.mxu0 0.0
    %1589 = vmatpush1.msra.mxu0 0.0
    %1590 = vmatprep.subr.mxu0 0.0
    %1591 = vmatpush1.msra.mxu0 0.0
    %1592 = vmatprep.subr.mxu0 0.0
    %1593 = vmatpush1.msra.mxu0 0.0
    %1594 = vmatprep.subr.mxu0 0.0
    %1595 = vmatpush1.msra.mxu0 0.0
    %1596 = vmatprep.subr.mxu0 0.0
    %1597 = vmatpush1.msra.mxu0 0.0
    %1598 = vmatprep.subr.mxu0 0.0
    %1599 = vmatpush1.msra.mxu0 0.0
    %1600 = vmatprep.subr.mxu0 0.0
    %1601 = vmatpush1.msra.mxu0 0.0
    %1602 = vmatprep.subr.mxu0 0.0
    %1603 = vmatpush1.msra.mxu0 0.0
    %1604 = vmatprep.subr.mxu0 0.0
    %1605 = vmatpush1.msra.mxu0 0.0
    %1606 = vmatprep.subr.mxu0 0.0
    %1607 = vmatpush1.msra.mxu0 0.0
    %1608 = vmatprep.subr.mxu0 0.0
    %1609 = vmatpush1.msra.mxu0 0.0
    %1610 = vmatprep.subr.mxu0 0.0
    %1611 = vmatpush1.msra.mxu0 0.0
    %1612 = vmatprep.mubr.f32.mxu0 0.0
    %1613 = vmatmul.mubr.f32.gmra.mrb[0].mxu0 %v1546
    %v1614 = vpop.f32.mrb[0].mxu0
    %v1615 = vadd.f32 %v99, %v1614
    %v1616 = vpop.f32.mrb[0].mxu0
    %1617 = vdwg.mxu0
    %1618 = vst [vmem:[#allocation12 + $0x2] sm:$0x1] %v1615
    %v1619 = vsel %vm761, %v1615, -inf
    %1620 = vmax.xlane.f32.xlu0 %v1619
    %v1621 = vpop.xlane.xlu0 %1620
    %vm1622 = vcmp.ge.f32.partialorder %v1615, %v1621
    %v1623 = vsel %vm1622, %v107, -128.0
    %v1624 = vsel %vm761, %v1623, -inf
    %1625 = vmax.xlane.f32.xlu0 %v1624
    %v1626 = vpop.xlane.xlu0 %1625
    %s1627 = vtos %v1626
    %s1628 = ssub.f32 0.0, %s1627
    %s1629 = scvt.f32.s32.to.zero.pseudo %s1628
    %s1630 = sld [smem:[#allocation2 + $0xa]]
    %s1631 = sld [smem:[#allocation2 + $0x4]]
    %p1632 = scmp.eq.s32.totalorder %s1630, 1
    %s1633 = scalar_select %p1632, %s1631, %s1629
    %p1634 = scmp.eq.s32.totalorder %s1211, 0
    %s1635 = scalar_select %p1634, 1, 0
    %s1636 = sadd.s32 %s1206, %s1635
    %p1637 = scmp.eq.s32.totalorder %s1630, 0
    %p1638 = scmp.eq.s32.totalorder %s1629, %s94
    %p1639 = pnand %p1637, %p1638
    %p1640 = pneg %p1639
    %s1641 = scalar_select %p1640, 1, %s1211
    %s1642 = scalar_lea.vmem [#allocation9], %s1633
    %v1643 = vld [vmem:[%s1642] sm:$0x1]
    %v1644 = vmax.f32 %v1643, 0.0
    %v1645 = vld [vmem:[#allocation7] sm:$0xff]
    %v1646 = vld [vmem:[#allocation7 + $0x8] sm:$0xff]
    %v1647 = vld [vmem:[#allocation7 + $0x10] sm:$0xff]
    %v1648 = vld [vmem:[#allocation7 + $0x18] sm:$0xff]
    %v1649 = vld [vmem:[#allocation7 + $0x20] sm:$0xff]
    %v1650 = vld [vmem:[#allocation7 + $0x28] sm:$0xff]
    %v1651 = vld [vmem:[#allocation7 + $0x30] sm:$0xff]
    %v1652 = vld [vmem:[#allocation7 + $0x38] sm:$0xff]
    %v1653 = vld [vmem:[#allocation7 + $0x40] sm:$0xff]
    %v1654 = vld [vmem:[#allocation7 + $0x48] sm:$0xff]
    %v1655 = vld [vmem:[#allocation7 + $0x50] sm:$0xff]
    %v1656 = vld [vmem:[#allocation7 + $0x58] sm:$0xff]
    %v1658 = vsel %vm138, %v1644, 0
    %1660 = vmatprep.subr.mxu0 %v1646
    %1661 = vmatpush1.msra.mxu0 %v1645
    %1662 = vmatprep.subr.mxu0 %v1649
    %1663 = vmatpush1.msra.mxu0 %v1648
    %1664 = vmatprep.subr.mxu0 %v1652
    %1665 = vmatpush1.msra.mxu0 %v1651
    %1666 = vmatprep.subr.mxu0 %v1655
    %1667 = vmatpush1.msra.mxu0 %v1654
    %1668 = vmatprep.subr.mxu0 0.0
    %1669 = vmatpush1.msra.mxu0 0.0
    %1670 = vmatprep.subr.mxu0 0.0
    %1671 = vmatpush1.msra.mxu0 0.0
    %1672 = vmatprep.subr.mxu0 0.0
    %1673 = vmatpush1.msra.mxu0 0.0
    %1674 = vmatprep.subr.mxu0 0.0
    %1675 = vmatpush1.msra.mxu0 0.0
    %1676 = vmatprep.subr.mxu0 0.0
    %1677 = vmatpush1.msra.mxu0 0.0
    %1678 = vmatprep.subr.mxu0 0.0
    %1679 = vmatpush1.msra.mxu0 0.0
    %1680 = vmatprep.subr.mxu0 0.0
    %1681 = vmatpush1.msra.mxu0 0.0
    %1682 = vmatprep.subr.mxu0 0.0
    %1683 = vmatpush1.msra.mxu0 0.0
    %1684 = vmatprep.subr.mxu0 0.0
    %1685 = vmatpush1.msra.mxu0 0.0
    %1686 = vmatprep.subr.mxu0 0.0
    %1687 = vmatpush1.msra.mxu0 0.0
    %1688 = vmatprep.subr.mxu0 0.0
    %1689 = vmatpush1.msra.mxu0 0.0
    %1690 = vmatprep.subr.mxu0 0.0
    %1691 = vmatpush1.msra.mxu0 0.0
    %1692 = vmatprep.subr.mxu0 0.0
    %1693 = vmatpush1.msra.mxu0 0.0
    %1694 = vmatprep.subr.mxu0 0.0
    %1695 = vmatpush1.msra.mxu0 0.0
    %1696 = vmatprep.subr.mxu0 0.0
    %1697 = vmatpush1.msra.mxu0 0.0
    %1698 = vmatprep.subr.mxu0 0.0
    %1699 = vmatpush1.msra.mxu0 0.0
    %1700 = vmatprep.subr.mxu0 0.0
    %1701 = vmatpush1.msra.mxu0 0.0
    %1702 = vmatprep.subr.mxu0 0.0
    %1703 = vmatpush1.msra.mxu0 0.0
    %1704 = vmatprep.subr.mxu0 0.0
    %1705 = vmatpush1.msra.mxu0 0.0
    %1706 = vmatprep.subr.mxu0 0.0
    %1707 = vmatpush1.msra.mxu0 0.0
    %1708 = vmatprep.subr.mxu0 0.0
    %1709 = vmatpush1.msra.mxu0 0.0
    %1710 = vmatprep.subr.mxu0 0.0
    %1711 = vmatpush1.msra.mxu0 0.0
    %1712 = vmatprep.subr.mxu0 0.0
    %1713 = vmatpush1.msra.mxu0 0.0
    %1714 = vmatprep.subr.mxu0 0.0
    %1715 = vmatpush1.msra.mxu0 0.0
    %1716 = vmatprep.subr.mxu0 0.0
    %1717 = vmatpush1.msra.mxu0 0.0
    %1718 = vmatprep.subr.mxu0 0.0
    %1719 = vmatpush1.msra.mxu0 0.0
    %1720 = vmatprep.subr.mxu0 0.0
    %1721 = vmatpush1.msra.mxu0 0.0
    %1722 = vmatprep.subr.mxu0 0.0
    %1723 = vmatpush1.msra.mxu0 0.0
    %1724 = vmatprep.mubr.f32.mxu0 0.0
    %1725 = vmatmul.mubr.f32.gmra.mrb[0].mxu0 %v1658
    %v1726 = vpop.f32.mrb[0].mxu0
    %v1727 = vadd.f32 %v337, %v1726
    %v1728 = vpop.f32.mrb[0].mxu0
    %v1729 = vadd.f32 %v341, %v1728
    %1730 = vdwg.mxu0
    %1731 = vmatprep.subr.mxu0 0.0
    %1732 = vmatpush1.msra.mxu0 %v1647
    %1733 = vmatprep.subr.mxu0 0.0
    %1734 = vmatpush1.msra.mxu0 %v1650
    %1735 = vmatprep.subr.mxu0 0.0
    %1736 = vmatpush1.msra.mxu0 %v1653
    %1737 = vmatprep.subr.mxu0 0.0
    %1738 = vmatpush1.msra.mxu0 %v1656
    %1739 = vmatprep.subr.mxu0 0.0
    %1740 = vmatpush1.msra.mxu0 0.0
    %1741 = vmatprep.subr.mxu0 0.0
    %1742 = vmatpush1.msra.mxu0 0.0
    %1743 = vmatprep.subr.mxu0 0.0
    %1744 = vmatpush1.msra.mxu0 0.0
    %1745 = vmatprep.subr.mxu0 0.0
    %1746 = vmatpush1.msra.mxu0 0.0
    %1747 = vmatprep.subr.mxu0 0.0
    %1748 = vmatpush1.msra.mxu0 0.0
    %1749 = vmatprep.subr.mxu0 0.0
    %1750 = vmatpush1.msra.mxu0 0.0
    %1751 = vmatprep.subr.mxu0 0.0
    %1752 = vmatpush1.msra.mxu0 0.0
    %1753 = vmatprep.subr.mxu0 0.0
    %1754 = vmatpush1.msra.mxu0 0.0
    %1755 = vmatprep.subr.mxu0 0.0
    %1756 = vmatpush1.msra.mxu0 0.0
    %1757 = vmatprep.subr.mxu0 0.0
    %1758 = vmatpush1.msra.mxu0 0.0
    %1759 = vmatprep.subr.mxu0 0.0
    %1760 = vmatpush1.msra.mxu0 0.0
    %1761 = vmatprep.subr.mxu0 0.0
    %1762 = vmatpush1.msra.mxu0 0.0
    %1763 = vmatprep.subr.mxu0 0.0
    %1764 = vmatpush1.msra.mxu0 0.0
    %1765 = vmatprep.subr.mxu0 0.0
    %1766 = vmatpush1.msra.mxu0 0.0
    %1767 = vmatprep.subr.mxu0 0.0
    %1768 = vmatpush1.msra.mxu0 0.0
    %1769 = vmatprep.subr.mxu0 0.0
    %1770 = vmatpush1.msra.mxu0 0.0
    %1771 = vmatprep.subr.mxu0 0.0
    %1772 = vmatpush1.msra.mxu0 0.0
    %1773 = vmatprep.subr.mxu0 0.0
    %1774 = vmatpush1.msra.mxu0 0.0
    %1775 = vmatprep.subr.mxu0 0.0
    %1776 = vmatpush1.msra.mxu0 0.0
    %1777 = vmatprep.subr.mxu0 0.0
    %1778 = vmatpush1.msra.mxu0 0.0
    %1779 = vmatprep.subr.mxu0 0.0
    %1780 = vmatpush1.msra.mxu0 0.0
    %1781 = vmatprep.subr.mxu0 0.0
    %1782 = vmatpush1.msra.mxu0 0.0
    %1783 = vmatprep.subr.mxu0 0.0
    %1784 = vmatpush1.msra.mxu0 0.0
    %1785 = vmatprep.subr.mxu0 0.0
    %1786 = vmatpush1.msra.mxu0 0.0
    %1787 = vmatprep.subr.mxu0 0.0
    %1788 = vmatpush1.msra.mxu0 0.0
    %1789 = vmatprep.subr.mxu0 0.0
    %1790 = vmatpush1.msra.mxu0 0.0
    %1791 = vmatprep.subr.mxu0 0.0
    %1792 = vmatpush1.msra.mxu0 0.0
    %1793 = vmatprep.subr.mxu0 0.0
    %1794 = vmatpush1.msra.mxu0 0.0
    %1795 = vmatprep.mubr.f32.mxu0 0.0
    %1796 = vmatmul.mubr.f32.gmra.mrb[0].mxu0 %v1658
    %v1797 = vpop.f32.mrb[0].mxu0
    %v1798 = vadd.f32 %v345, %v1797
    %v1799 = vpop.f32.mrb[0].mxu0
    %1800 = vdwg.mxu0
    %v1801 = vld [vmem:[%s493] sm:$0xff]
    %v1802 = vld [vmem:[%s493 + $0x8] sm:$0xff]
    %v1803 = vld [vmem:[%s493 + $0x10] sm:$0xff]
    %v1804 = vld [vmem:[%s493 + $0x18] sm:$0xff]
    %v1805 = vld [vmem:[%s493 + $0x20] sm:$0xff]
    %v1806 = vld [vmem:[%s493 + $0x28] sm:$0xff]
    %v1807 = vld [vmem:[%s493 + $0x30] sm:$0xff]
    %v1808 = vld [vmem:[%s493 + $0x38] sm:$0xff]
    %v1809 = vld [vmem:[%s493 + $0x40] sm:$0xff]
    %v1810 = vld [vmem:[%s493 + $0x48] sm:$0xff]
    %v1811 = vld [vmem:[%s493 + $0x50] sm:$0xff]
    %v1812 = vld [vmem:[%s493 + $0x58] sm:$0xff]
    %1813 = vmatprep.subr.mxu0 %v1802
    %1814 = vmatpush1.msra.mxu0 %v1801
    %1815 = vmatprep.subr.mxu0 %v1805
    %1816 = vmatpush1.msra.mxu0 %v1804
    %1817 = vmatprep.subr.mxu0 %v1808
    %1818 = vmatpush1.msra.mxu0 %v1807
    %1819 = vmatprep.subr.mxu0 %v1811
    %1820 = vmatpush1.msra.mxu0 %v1810
    %1821 = vmatprep.subr.mxu0 0.0
    %1822 = vmatpush1.msra.mxu0 0.0
    %1823 = vmatprep.subr.mxu0 0.0
    %1824 = vmatpush1.msra.mxu0 0.0
    %1825 = vmatprep.subr.mxu0 0.0
    %1826 = vmatpush1.msra.mxu0 0.0
    %1827 = vmatprep.subr.mxu0 0.0
    %1828 = vmatpush1.msra.mxu0 0.0
    %1829 = vmatprep.subr.mxu0 0.0
    %1830 = vmatpush1.msra.mxu0 0.0
    %1831 = vmatprep.subr.mxu0 0.0
    %1832 = vmatpush1.msra.mxu0 0.0
    %1833 = vmatprep.subr.mxu0 0.0
    %1834 = vmatpush1.msra.mxu0 0.0
    %1835 = vmatprep.subr.mxu0 0.0
    %1836 = vmatpush1.msra.mxu0 0.0
    %1837 = vmatprep.subr.mxu0 0.0
    %1838 = vmatpush1.msra.mxu0 0.0
    %1839 = vmatprep.subr.mxu0 0.0
    %1840 = vmatpush1.msra.mxu0 0.0
    %1841 = vmatprep.subr.mxu0 0.0
    %1842 = vmatpush1.msra.mxu0 0.0
    %1843 = vmatprep.subr.mxu0 0.0
    %1844 = vmatpush1.msra.mxu0 0.0
    %1845 = vmatprep.subr.mxu0 0.0
    %1846 = vmatpush1.msra.mxu0 0.0
    %1847 = vmatprep.subr.mxu0 0.0
    %1848 = vmatpush1.msra.mxu0 0.0
    %1849 = vmatprep.subr.mxu0 0.0
    %1850 = vmatpush1.msra.mxu0 0.0
    %1851 = vmatprep.subr.mxu0 0.0
    %1852 = vmatpush1.msra.mxu0 0.0
    %1853 = vmatprep.subr.mxu0 0.0
    %1854 = vmatpush1.msra.mxu0 0.0
    %1855 = vmatprep.subr.mxu0 0.0
    %1856 = vmatpush1.msra.mxu0 0.0
    %1857 = vmatprep.subr.mxu0 0.0
    %1858 = vmatpush1.msra.mxu0 0.0
    %1859 = vmatprep.subr.mxu0 0.0
    %1860 = vmatpush1.msra.mxu0 0.0
    %1861 = vmatprep.subr.mxu0 0.0
    %1862 = vmatpush1.msra.mxu0 0.0
    %1863 = vmatprep.subr.mxu0 0.0
    %1864 = vmatpush1.msra.mxu0 0.0
    %1865 = vmatprep.subr.mxu0 0.0
    %1866 = vmatpush1.msra.mxu0 0.0
    %1867 = vmatprep.subr.mxu0 0.0
    %1868 = vmatpush1.msra.mxu0 0.0
    %1869 = vmatprep.subr.mxu0 0.0
    %1870 = vmatpush1.msra.mxu0 0.0
    %1871 = vmatprep.subr.mxu0 0.0
    %1872 = vmatpush1.msra.mxu0 0.0
    %1873 = vmatprep.subr.mxu0 0.0
    %1874 = vmatpush1.msra.mxu0 0.0
    %1875 = vmatprep.subr.mxu0 0.0
    %1876 = vmatpush1.msra.mxu0 0.0
    %1877 = vmatprep.mubr.f32.mxu0 0.0
    %1878 = vmatmul.mubr.f32.gmra.mrb[0].mxu0 %v1546
    %v1879 = vpop.f32.mrb[0].mxu0
    %v1880 = vadd.f32 %v510, %v1879
    %v1881 = vpop.f32.mrb[0].mxu0
    %v1882 = vadd.f32 %v514, %v1881
    %1883 = vdwg.mxu0
    %1884 = vmatprep.subr.mxu0 0.0
    %1885 = vmatpush1.msra.mxu0 %v1803
    %1886 = vmatprep.subr.mxu0 0.0
    %1887 = vmatpush1.msra.mxu0 %v1806
    %1888 = vmatprep.subr.mxu0 0.0
    %1889 = vmatpush1.msra.mxu0 %v1809
    %1890 = vmatprep.subr.mxu0 0.0
    %1891 = vmatpush1.msra.mxu0 %v1812
    %1892 = vmatprep.subr.mxu0 0.0
    %1893 = vmatpush1.msra.mxu0 0.0
    %1894 = vmatprep.subr.mxu0 0.0
    %1895 = vmatpush1.msra.mxu0 0.0
    %1896 = vmatprep.subr.mxu0 0.0
    %1897 = vmatpush1.msra.mxu0 0.0
    %1898 = vmatprep.subr.mxu0 0.0
    %1899 = vmatpush1.msra.mxu0 0.0
    %1900 = vmatprep.subr.mxu0 0.0
    %1901 = vmatpush1.msra.mxu0 0.0
    %1902 = vmatprep.subr.mxu0 0.0
    %1903 = vmatpush1.msra.mxu0 0.0
    %1904 = vmatprep.subr.mxu0 0.0
    %1905 = vmatpush1.msra.mxu0 0.0
    %1906 = vmatprep.subr.mxu0 0.0
    %1907 = vmatpush1.msra.mxu0 0.0
    %1908 = vmatprep.subr.mxu0 0.0
    %1909 = vmatpush1.msra.mxu0 0.0
    %1910 = vmatprep.subr.mxu0 0.0
    %1911 = vmatpush1.msra.mxu0 0.0
    %1912 = vmatprep.subr.mxu0 0.0
    %1913 = vmatpush1.msra.mxu0 0.0
    %1914 = vmatprep.subr.mxu0 0.0
    %1915 = vmatpush1.msra.mxu0 0.0
    %1916 = vmatprep.subr.mxu0 0.0
    %1917 = vmatpush1.msra.mxu0 0.0
    %1918 = vmatprep.subr.mxu0 0.0
    %1919 = vmatpush1.msra.mxu0 0.0
    %1920 = vmatprep.subr.mxu0 0.0
    %1921 = vmatpush1.msra.mxu0 0.0
    %1922 = vmatprep.subr.mxu0 0.0
    %1923 = vmatpush1.msra.mxu0 0.0
    %1924 = vmatprep.subr.mxu0 0.0
    %1925 = vmatpush1.msra.mxu0 0.0
    %1926 = vmatprep.subr.mxu0 0.0
    %1927 = vmatpush1.msra.mxu0 0.0
    %1928 = vmatprep.subr.mxu0 0.0
    %1929 = vmatpush1.msra.mxu0 0.0
    %1930 = vmatprep.subr.mxu0 0.0
    %1931 = vmatpush1.msra.mxu0 0.0
    %1932 = vmatprep.subr.mxu0 0.0
    %1933 = vmatpush1.msra.mxu0 0.0
    %1934 = vmatprep.subr.mxu0 0.0
    %1935 = vmatpush1.msra.mxu0 0.0
    %1936 = vmatprep.subr.mxu0 0.0
    %1937 = vmatpush1.msra.mxu0 0.0
    %1938 = vmatprep.subr.mxu0 0.0
    %1939 = vmatpush1.msra.mxu0 0.0
    %1940 = vmatprep.subr.mxu0 0.0
    %1941 = vmatpush1.msra.mxu0 0.0
    %1942 = vmatprep.subr.mxu0 0.0
    %1943 = vmatpush1.msra.mxu0 0.0
    %1944 = vmatprep.subr.mxu0 0.0
    %1945 = vmatpush1.msra.mxu0 0.0
    %1946 = vmatprep.subr.mxu0 0.0
    %1947 = vmatpush1.msra.mxu0 0.0
    %1948 = vmatprep.mubr.f32.mxu0 0.0
    %1949 = vmatmul.mubr.f32.gmra.mrb[0].mxu0 %v1546
    %v1950 = vpop.f32.mrb[0].mxu0
    %v1951 = vadd.f32 %v518, %v1950
    %v1952 = vpop.f32.mrb[0].mxu0
    %1953 = vdwg.mxu0
    %v1954 = vadd.f32 %v1727, %v1880
    %v1955 = vxor.u32 %v1954, 2147483648
    %v1956 = vmul.f32 %v1955, 1.442695
    %v1957 = vpow.pop %v1956
    %v1958 = vadd.f32 %v1957, 1.0
    %v1959 = vrcp.pop %v1958
    %v1960 = vmul.f32 1.0, %v1959
    %v1961 = vadd.f32 %v1729, %v1882
    %v1962 = vxor.u32 %v1961, 2147483648
    %v1963 = vmul.f32 %v1962, 1.442695
    %v1964 = vpow.pop %v1963
    %v1965 = vadd.f32 %v1964, 1.0
    %v1966 = vrcp.pop %v1965
    %v1967 = vmul.f32 1.0, %v1966
    %v1968 = vmul.f32 %v1960, %v1951
    %v1969 = vadd.f32 %v1798, %v1968
    %v1970 = vtanh.pop %v1969
    %v1971 = vsub.f32 1.0, %v1967
    %v1972 = vmul.f32 %v1971, %v1970
    %v1973 = vmul.f32 %v1967, %v1544
    %v1974 = vadd.f32 %v1972, %v1973
    %v1976 = vsel %vm138, %v1974, 0
    %1978 = vmatprep.subr.mxu0 0.0
    %1979 = vmatpush1.msra.mxu0 %v95
    %1980 = vmatprep.subr.mxu0 0.0
    %1981 = vmatpush1.msra.mxu0 %v96
    %1982 = vmatprep.subr.mxu0 0.0
    %1983 = vmatpush1.msra.mxu0 %v97
    %1984 = vmatprep.subr.mxu0 0.0
    %1985 = vmatpush1.msra.mxu0 %v98
    %1986 = vmatprep.subr.mxu0 0.0
    %1987 = vmatpush1.msra.mxu0 0.0
    %1988 = vmatprep.subr.mxu0 0.0
    %1989 = vmatpush1.msra.mxu0 0.0
    %1990 = vmatprep.subr.mxu0 0.0
    %1991 = vmatpush1.msra.mxu0 0.0
    %1992 = vmatprep.subr.mxu0 0.0
    %1993 = vmatpush1.msra.mxu0 0.0
    %1994 = vmatprep.subr.mxu0 0.0
    %1995 = vmatpush1.msra.mxu0 0.0
    %1996 = vmatprep.subr.mxu0 0.0
    %1997 = vmatpush1.msra.mxu0 0.0
    %1998 = vmatprep.subr.mxu0 0.0
    %1999 = vmatpush1.msra.mxu0 0.0
    %2000 = vmatprep.subr.mxu0 0.0
    %2001 = vmatpush1.msra.mxu0 0.0
    %2002 = vmatprep.subr.mxu0 0.0
    %2003 = vmatpush1.msra.mxu0 0.0
    %2004 = vmatprep.subr.mxu0 0.0
    %2005 = vmatpush1.msra.mxu0 0.0
    %2006 = vmatprep.subr.mxu0 0.0
    %2007 = vmatpush1.msra.mxu0 0.0
    %2008 = vmatprep.subr.mxu0 0.0
    %2009 = vmatpush1.msra.mxu0 0.0
    %2010 = vmatprep.subr.mxu0 0.0
    %2011 = vmatpush1.msra.mxu0 0.0
    %2012 = vmatprep.subr.mxu0 0.0
    %2013 = vmatpush1.msra.mxu0 0.0
    %2014 = vmatprep.subr.mxu0 0.0
    %2015 = vmatpush1.msra.mxu0 0.0
    %2016 = vmatprep.subr.mxu0 0.0
    %2017 = vmatpush1.msra.mxu0 0.0
    %2018 = vmatprep.subr.mxu0 0.0
    %2019 = vmatpush1.msra.mxu0 0.0
    %2020 = vmatprep.subr.mxu0 0.0
    %2021 = vmatpush1.msra.mxu0 0.0
    %2022 = vmatprep.subr.mxu0 0.0
    %2023 = vmatpush1.msra.mxu0 0.0
    %2024 = vmatprep.subr.mxu0 0.0
    %2025 = vmatpush1.msra.mxu0 0.0
    %2026 = vmatprep.subr.mxu0 0.0
    %2027 = vmatpush1.msra.mxu0 0.0
    %2028 = vmatprep.subr.mxu0 0.0
    %2029 = vmatpush1.msra.mxu0 0.0
    %2030 = vmatprep.subr.mxu0 0.0
    %2031 = vmatpush1.msra.mxu0 0.0
    %2032 = vmatprep.subr.mxu0 0.0
    %2033 = vmatpush1.msra.mxu0 0.0
    %2034 = vmatprep.subr.mxu0 0.0
    %2035 = vmatpush1.msra.mxu0 0.0
    %2036 = vmatprep.subr.mxu0 0.0
    %2037 = vmatpush1.msra.mxu0 0.0
    %2038 = vmatprep.subr.mxu0 0.0
    %2039 = vmatpush1.msra.mxu0 0.0
    %2040 = vmatprep.subr.mxu0 0.0
    %2041 = vmatpush1.msra.mxu0 0.0
    %2042 = vmatprep.mubr.f32.mxu0 0.0
    %2043 = vmatmul.mubr.f32.gmra.mrb[0].mxu0 %v1976
    %v2044 = vpop.f32.mrb[0].mxu0
    %v2045 = vadd.f32 %v99, %v2044
    %v2046 = vpop.f32.mrb[0].mxu0
    %2047 = vdwg.mxu0
    %2048 = vst [vmem:[#allocation12 + $0x3] sm:$0x1] %v2045
    %v2049 = vsel %vm761, %v2045, -inf
    %2050 = vmax.xlane.f32.xlu0 %v2049
    %v2051 = vpop.xlane.xlu0 %2050
    %vm2052 = vcmp.ge.f32.partialorder %v2045, %v2051
    %v2053 = vsel %vm2052, %v107, -128.0
    %v2054 = vsel %vm761, %v2053, -inf
    %2055 = vmax.xlane.f32.xlu0 %v2054
    %v2056 = vpop.xlane.xlu0 %2055
    %s2057 = vtos %v2056
    %s2058 = ssub.f32 0.0, %s2057
    %s2059 = scvt.f32.s32.to.zero.pseudo %s2058
    %s2060 = sld [smem:[#allocation2 + $0xb]]
    %s2061 = sld [smem:[#allocation2 + $0x5]]
    %p2062 = scmp.eq.s32.totalorder %s2060, 1
    %s2063 = scalar_select %p2062, %s2061, %s2059
    %p2064 = scmp.eq.s32.totalorder %s1641, 0
    %s2065 = scalar_select %p2064, 1, 0
    %s2066 = sadd.s32 %s1636, %s2065
    %p2067 = scmp.eq.s32.totalorder %s2060, 0
    %p2068 = scmp.eq.s32.totalorder %s2059, %s94
    %p2069 = pnand %p2067, %p2068
    %p2070 = pneg %p2069
    %s2071 = scalar_select %p2070, 1, %s1641
    %s2072 = scalar_lea.vmem [#allocation9], %s2063
    %v2073 = vld [vmem:[%s2072] sm:$0x1]
    %v2074 = vmax.f32 %v2073, 0.0
    %v2075 = vld [vmem:[#allocation7] sm:$0xff]
    %v2076 = vld [vmem:[#allocation7 + $0x8] sm:$0xff]
    %v2077 = vld [vmem:[#allocation7 + $0x10] sm:$0xff]
    %v2078 = vld [vmem:[#allocation7 + $0x18] sm:$0xff]
    %v2079 = vld [vmem:[#allocation7 + $0x20] sm:$0xff]
    %v2080 = vld [vmem:[#allocation7 + $0x28] sm:$0xff]
    %v2081 = vld [vmem:[#allocation7 + $0x30] sm:$0xff]
    %v2082 = vld [vmem:[#allocation7 + $0x38] sm:$0xff]
    %v2083 = vld [vmem:[#allocation7 + $0x40] sm:$0xff]
    %v2084 = vld [vmem:[#allocation7 + $0x48] sm:$0xff]
    %v2085 = vld [vmem:[#allocation7 + $0x50] sm:$0xff]
    %v2086 = vld [vmem:[#allocation7 + $0x58] sm:$0xff]
    %v2088 = vsel %vm138, %v2074, 0
    %2090 = vmatprep.subr.mxu0 %v2076
    %2091 = vmatpush1.msra.mxu0 %v2075
    %2092 = vmatprep.subr.mxu0 %v2079
    %2093 = vmatpush1.msra.mxu0 %v2078
    %2094 = vmatprep.subr.mxu0 %v2082
    %2095 = vmatpush1.msra.mxu0 %v2081
    %2096 = vmatprep.subr.mxu0 %v2085
    %2097 = vmatpush1.msra.mxu0 %v2084
    %2098 = vmatprep.subr.mxu0 0.0
    %2099 = vmatpush1.msra.mxu0 0.0
    %2100 = vmatprep.subr.mxu0 0.0
    %2101 = vmatpush1.msra.mxu0 0.0
    %2102 = vmatprep.subr.mxu0 0.0
    %2103 = vmatpush1.msra.mxu0 0.0
    %2104 = vmatprep.subr.mxu0 0.0
    %2105 = vmatpush1.msra.mxu0 0.0
    %2106 = vmatprep.subr.mxu0 0.0
    %2107 = vmatpush1.msra.mxu0 0.0
    %2108 = vmatprep.subr.mxu0 0.0
    %2109 = vmatpush1.msra.mxu0 0.0
    %2110 = vmatprep.subr.mxu0 0.0
    %2111 = vmatpush1.msra.mxu0 0.0
    %2112 = vmatprep.subr.mxu0 0.0
    %2113 = vmatpush1.msra.mxu0 0.0
    %2114 = vmatprep.subr.mxu0 0.0
    %2115 = vmatpush1.msra.mxu0 0.0
    %2116 = vmatprep.subr.mxu0 0.0
    %2117 = vmatpush1.msra.mxu0 0.0
    %2118 = vmatprep.subr.mxu0 0.0
    %2119 = vmatpush1.msra.mxu0 0.0
    %2120 = vmatprep.subr.mxu0 0.0
    %2121 = vmatpush1.msra.mxu0 0.0
    %2122 = vmatprep.subr.mxu0 0.0
    %2123 = vmatpush1.msra.mxu0 0.0
    %2124 = vmatprep.subr.mxu0 0.0
    %2125 = vmatpush1.msra.mxu0 0.0
    %2126 = vmatprep.subr.mxu0 0.0
    %2127 = vmatpush1.msra.mxu0 0.0
    %2128 = vmatprep.subr.mxu0 0.0
    %2129 = vmatpush1.msra.mxu0 0.0
    %2130 = vmatprep.subr.mxu0 0.0
    %2131 = vmatpush1.msra.mxu0 0.0
    %2132 = vmatprep.subr.mxu0 0.0
    %2133 = vmatpush1.msra.mxu0 0.0
    %2134 = vmatprep.subr.mxu0 0.0
    %2135 = vmatpush1.msra.mxu0 0.0
    %2136 = vmatprep.subr.mxu0 0.0
    %2137 = vmatpush1.msra.mxu0 0.0
    %2138 = vmatprep.subr.mxu0 0.0
    %2139 = vmatpush1.msra.mxu0 0.0
    %2140 = vmatprep.subr.mxu0 0.0
    %2141 = vmatpush1.msra.mxu0 0.0
    %2142 = vmatprep.subr.mxu0 0.0
    %2143 = vmatpush1.msra.mxu0 0.0
    %2144 = vmatprep.subr.mxu0 0.0
    %2145 = vmatpush1.msra.mxu0 0.0
    %2146 = vmatprep.subr.mxu0 0.0
    %2147 = vmatpush1.msra.mxu0 0.0
    %2148 = vmatprep.subr.mxu0 0.0
    %2149 = vmatpush1.msra.mxu0 0.0
    %2150 = vmatprep.subr.mxu0 0.0
    %2151 = vmatpush1.msra.mxu0 0.0
    %2152 = vmatprep.subr.mxu0 0.0
    %2153 = vmatpush1.msra.mxu0 0.0
    %2154 = vmatprep.mubr.f32.mxu0 0.0
    %2155 = vmatmul.mubr.f32.gmra.mrb[0].mxu0 %v2088
    %v2156 = vpop.f32.mrb[0].mxu0
    %v2157 = vadd.f32 %v337, %v2156
    %v2158 = vpop.f32.mrb[0].mxu0
    %v2159 = vadd.f32 %v341, %v2158
    %2160 = vdwg.mxu0
    %2161 = vmatprep.subr.mxu0 0.0
    %2162 = vmatpush1.msra.mxu0 %v2077
    %2163 = vmatprep.subr.mxu0 0.0
    %2164 = vmatpush1.msra.mxu0 %v2080
    %2165 = vmatprep.subr.mxu0 0.0
    %2166 = vmatpush1.msra.mxu0 %v2083
    %2167 = vmatprep.subr.mxu0 0.0
    %2168 = vmatpush1.msra.mxu0 %v2086
    %2169 = vmatprep.subr.mxu0 0.0
    %2170 = vmatpush1.msra.mxu0 0.0
    %2171 = vmatprep.subr.mxu0 0.0
    %2172 = vmatpush1.msra.mxu0 0.0
    %2173 = vmatprep.subr.mxu0 0.0
    %2174 = vmatpush1.msra.mxu0 0.0
    %2175 = vmatprep.subr.mxu0 0.0
    %2176 = vmatpush1.msra.mxu0 0.0
    %2177 = vmatprep.subr.mxu0 0.0
    %2178 = vmatpush1.msra.mxu0 0.0
    %2179 = vmatprep.subr.mxu0 0.0
    %2180 = vmatpush1.msra.mxu0 0.0
    %2181 = vmatprep.subr.mxu0 0.0
    %2182 = vmatpush1.msra.mxu0 0.0
    %2183 = vmatprep.subr.mxu0 0.0
    %2184 = vmatpush1.msra.mxu0 0.0
    %2185 = vmatprep.subr.mxu0 0.0
    %2186 = vmatpush1.msra.mxu0 0.0
    %2187 = vmatprep.subr.mxu0 0.0
    %2188 = vmatpush1.msra.mxu0 0.0
    %2189 = vmatprep.subr.mxu0 0.0
    %2190 = vmatpush1.msra.mxu0 0.0
    %2191 = vmatprep.subr.mxu0 0.0
    %2192 = vmatpush1.msra.mxu0 0.0
    %2193 = vmatprep.subr.mxu0 0.0
    %2194 = vmatpush1.msra.mxu0 0.0
    %2195 = vmatprep.subr.mxu0 0.0
    %2196 = vmatpush1.msra.mxu0 0.0
    %2197 = vmatprep.subr.mxu0 0.0
    %2198 = vmatpush1.msra.mxu0 0.0
    %2199 = vmatprep.subr.mxu0 0.0
    %2200 = vmatpush1.msra.mxu0 0.0
    %2201 = vmatprep.subr.mxu0 0.0
    %2202 = vmatpush1.msra.mxu0 0.0
    %2203 = vmatprep.subr.mxu0 0.0
    %2204 = vmatpush1.msra.mxu0 0.0
    %2205 = vmatprep.subr.mxu0 0.0
    %2206 = vmatpush1.msra.mxu0 0.0
    %2207 = vmatprep.subr.mxu0 0.0
    %2208 = vmatpush1.msra.mxu0 0.0
    %2209 = vmatprep.subr.mxu0 0.0
    %2210 = vmatpush1.msra.mxu0 0.0
    %2211 = vmatprep.subr.mxu0 0.0
    %2212 = vmatpush1.msra.mxu0 0.0
    %2213 = vmatprep.subr.mxu0 0.0
    %2214 = vmatpush1.msra.mxu0 0.0
    %2215 = vmatprep.subr.mxu0 0.0
    %2216 = vmatpush1.msra.mxu0 0.0
    %2217 = vmatprep.subr.mxu0 0.0
    %2218 = vmatpush1.msra.mxu0 0.0
    %2219 = vmatprep.subr.mxu0 0.0
    %2220 = vmatpush1.msra.mxu0 0.0
    %2221 = vmatprep.subr.mxu0 0.0
    %2222 = vmatpush1.msra.mxu0 0.0
    %2223 = vmatprep.subr.mxu0 0.0
    %2224 = vmatpush1.msra.mxu0 0.0
    %2225 = vmatprep.mubr.f32.mxu0 0.0
    %2226 = vmatmul.mubr.f32.gmra.mrb[0].mxu0 %v2088
    %v2227 = vpop.f32.mrb[0].mxu0
    %v2228 = vadd.f32 %v345, %v2227
    %v2229 = vpop.f32.mrb[0].mxu0
    %2230 = vdwg.mxu0
    %v2231 = vld [vmem:[%s493] sm:$0xff]
    %v2232 = vld [vmem:[%s493 + $0x8] sm:$0xff]
    %v2233 = vld [vmem:[%s493 + $0x10] sm:$0xff]
    %v2234 = vld [vmem:[%s493 + $0x18] sm:$0xff]
    %v2235 = vld [vmem:[%s493 + $0x20] sm:$0xff]
    %v2236 = vld [vmem:[%s493 + $0x28] sm:$0xff]
    %v2237 = vld [vmem:[%s493 + $0x30] sm:$0xff]
    %v2238 = vld [vmem:[%s493 + $0x38] sm:$0xff]
    %v2239 = vld [vmem:[%s493 + $0x40] sm:$0xff]
    %v2240 = vld [vmem:[%s493 + $0x48] sm:$0xff]
    %v2241 = vld [vmem:[%s493 + $0x50] sm:$0xff]
    %v2242 = vld [vmem:[%s493 + $0x58] sm:$0xff]
    %2243 = vmatprep.subr.mxu0 %v2232
    %2244 = vmatpush1.msra.mxu0 %v2231
    %2245 = vmatprep.subr.mxu0 %v2235
    %2246 = vmatpush1.msra.mxu0 %v2234
    %2247 = vmatprep.subr.mxu0 %v2238
    %2248 = vmatpush1.msra.mxu0 %v2237
    %2249 = vmatprep.subr.mxu0 %v2241
    %2250 = vmatpush1.msra.mxu0 %v2240
    %2251 = vmatprep.subr.mxu0 0.0
    %2252 = vmatpush1.msra.mxu0 0.0
    %2253 = vmatprep.subr.mxu0 0.0
    %2254 = vmatpush1.msra.mxu0 0.0
    %2255 = vmatprep.subr.mxu0 0.0
    %2256 = vmatpush1.msra.mxu0 0.0
    %2257 = vmatprep.subr.mxu0 0.0
    %2258 = vmatpush1.msra.mxu0 0.0
    %2259 = vmatprep.subr.mxu0 0.0
    %2260 = vmatpush1.msra.mxu0 0.0
    %2261 = vmatprep.subr.mxu0 0.0
    %2262 = vmatpush1.msra.mxu0 0.0
    %2263 = vmatprep.subr.mxu0 0.0
    %2264 = vmatpush1.msra.mxu0 0.0
    %2265 = vmatprep.subr.mxu0 0.0
    %2266 = vmatpush1.msra.mxu0 0.0
    %2267 = vmatprep.subr.mxu0 0.0
    %2268 = vmatpush1.msra.mxu0 0.0
    %2269 = vmatprep.subr.mxu0 0.0
    %2270 = vmatpush1.msra.mxu0 0.0
    %2271 = vmatprep.subr.mxu0 0.0
    %2272 = vmatpush1.msra.mxu0 0.0
    %2273 = vmatprep.subr.mxu0 0.0
    %2274 = vmatpush1.msra.mxu0 0.0
    %2275 = vmatprep.subr.mxu0 0.0
    %2276 = vmatpush1.msra.mxu0 0.0
    %2277 = vmatprep.subr.mxu0 0.0
    %2278 = vmatpush1.msra.mxu0 0.0
    %2279 = vmatprep.subr.mxu0 0.0
    %2280 = vmatpush1.msra.mxu0 0.0
    %2281 = vmatprep.subr.mxu0 0.0
    %2282 = vmatpush1.msra.mxu0 0.0
    %2283 = vmatprep.subr.mxu0 0.0
    %2284 = vmatpush1.msra.mxu0 0.0
    %2285 = vmatprep.subr.mxu0 0.0
    %2286 = vmatpush1.msra.mxu0 0.0
    %2287 = vmatprep.subr.mxu0 0.0
    %2288 = vmatpush1.msra.mxu0 0.0
    %2289 = vmatprep.subr.mxu0 0.0
    %2290 = vmatpush1.msra.mxu0 0.0
    %2291 = vmatprep.subr.mxu0 0.0
    %2292 = vmatpush1.msra.mxu0 0.0
    %2293 = vmatprep.subr.mxu0 0.0
    %2294 = vmatpush1.msra.mxu0 0.0
    %2295 = vmatprep.subr.mxu0 0.0
    %2296 = vmatpush1.msra.mxu0 0.0
    %2297 = vmatprep.subr.mxu0 0.0
    %2298 = vmatpush1.msra.mxu0 0.0
    %2299 = vmatprep.subr.mxu0 0.0
    %2300 = vmatpush1.msra.mxu0 0.0
    %2301 = vmatprep.subr.mxu0 0.0
    %2302 = vmatpush1.msra.mxu0 0.0
    %2303 = vmatprep.subr.mxu0 0.0
    %2304 = vmatpush1.msra.mxu0 0.0
    %2305 = vmatprep.subr.mxu0 0.0
    %2306 = vmatpush1.msra.mxu0 0.0
    %2307 = vmatprep.mubr.f32.mxu0 0.0
    %2308 = vmatmul.mubr.f32.gmra.mrb[0].mxu0 %v1976
    %v2309 = vpop.f32.mrb[0].mxu0
    %v2310 = vadd.f32 %v510, %v2309
    %v2311 = vpop.f32.mrb[0].mxu0
    %v2312 = vadd.f32 %v514, %v2311
    %2313 = vdwg.mxu0
    %2314 = vmatprep.subr.mxu0 0.0
    %2315 = vmatpush1.msra.mxu0 %v2233
    %2316 = vmatprep.subr.mxu0 0.0
    %2317 = vmatpush1.msra.mxu0 %v2236
    %2318 = vmatprep.subr.mxu0 0.0
    %2319 = vmatpush1.msra.mxu0 %v2239
    %2320 = vmatprep.subr.mxu0 0.0
    %2321 = vmatpush1.msra.mxu0 %v2242
    %2322 = vmatprep.subr.mxu0 0.0
    %2323 = vmatpush1.msra.mxu0 0.0
    %2324 = vmatprep.subr.mxu0 0.0
    %2325 = vmatpush1.msra.mxu0 0.0
    %2326 = vmatprep.subr.mxu0 0.0
    %2327 = vmatpush1.msra.mxu0 0.0
    %2328 = vmatprep.subr.mxu0 0.0
    %2329 = vmatpush1.msra.mxu0 0.0
    %2330 = vmatprep.subr.mxu0 0.0
    %2331 = vmatpush1.msra.mxu0 0.0
    %2332 = vmatprep.subr.mxu0 0.0
    %2333 = vmatpush1.msra.mxu0 0.0
    %2334 = vmatprep.subr.mxu0 0.0
    %2335 = vmatpush1.msra.mxu0 0.0
    %2336 = vmatprep.subr.mxu0 0.0
    %2337 = vmatpush1.msra.mxu0 0.0
    %2338 = vmatprep.subr.mxu0 0.0
    %2339 = vmatpush1.msra.mxu0 0.0
    %2340 = vmatprep.subr.mxu0 0.0
    %2341 = vmatpush1.msra.mxu0 0.0
    %2342 = vmatprep.subr.mxu0 0.0
    %2343 = vmatpush1.msra.mxu0 0.0
    %2344 = vmatprep.subr.mxu0 0.0
    %2345 = vmatpush1.msra.mxu0 0.0
    %2346 = vmatprep.subr.mxu0 0.0
    %2347 = vmatpush1.msra.mxu0 0.0
    %2348 = vmatprep.subr.mxu0 0.0
    %2349 = vmatpush1.msra.mxu0 0.0
    %2350 = vmatprep.subr.mxu0 0.0
    %2351 = vmatpush1.msra.mxu0 0.0
    %2352 = vmatprep.subr.mxu0 0.0
    %2353 = vmatpush1.msra.mxu0 0.0
    %2354 = vmatprep.subr.mxu0 0.0
    %2355 = vmatpush1.msra.mxu0 0.0
    %2356 = vmatprep.subr.mxu0 0.0
    %2357 = vmatpush1.msra.mxu0 0.0
    %2358 = vmatprep.subr.mxu0 0.0
    %2359 = vmatpush1.msra.mxu0 0.0
    %2360 = vmatprep.subr.mxu0 0.0
    %2361 = vmatpush1.msra.mxu0 0.0
    %2362 = vmatprep.subr.mxu0 0.0
    %2363 = vmatpush1.msra.mxu0 0.0
    %2364 = vmatprep.subr.mxu0 0.0
    %2365 = vmatpush1.msra.mxu0 0.0
    %2366 = vmatprep.subr.mxu0 0.0
    %2367 = vmatpush1.msra.mxu0 0.0
    %2368 = vmatprep.subr.mxu0 0.0
    %2369 = vmatpush1.msra.mxu0 0.0
    %2370 = vmatprep.subr.mxu0 0.0
    %2371 = vmatpush1.msra.mxu0 0.0
    %2372 = vmatprep.subr.mxu0 0.0
    %2373 = vmatpush1.msra.mxu0 0.0
    %2374 = vmatprep.subr.mxu0 0.0
    %2375 = vmatpush1.msra.mxu0 0.0
    %2376 = vmatprep.subr.mxu0 0.0
    %2377 = vmatpush1.msra.mxu0 0.0
    %2378 = vmatprep.mubr.f32.mxu0 0.0
    %2379 = vmatmul.mubr.f32.gmra.mrb[0].mxu0 %v1976
    %v2380 = vpop.f32.mrb[0].mxu0
    %v2381 = vadd.f32 %v518, %v2380
    %v2382 = vpop.f32.mrb[0].mxu0
    %2383 = vdwg.mxu0
    %v2384 = vadd.f32 %v2157, %v2310
    %v2385 = vxor.u32 %v2384, 2147483648
    %v2386 = vmul.f32 %v2385, 1.442695
    %v2387 = vpow.pop %v2386
    %v2388 = vadd.f32 %v2387, 1.0
    %v2389 = vrcp.pop %v2388
    %v2390 = vmul.f32 1.0, %v2389
    %v2391 = vadd.f32 %v2159, %v2312
    %v2392 = vxor.u32 %v2391, 2147483648
    %v2393 = vmul.f32 %v2392, 1.442695
    %v2394 = vpow.pop %v2393
    %v2395 = vadd.f32 %v2394, 1.0
    %v2396 = vrcp.pop %v2395
    %v2397 = vmul.f32 1.0, %v2396
    %v2398 = vmul.f32 %v2390, %v2381
    %v2399 = vadd.f32 %v2228, %v2398
    %v2400 = vtanh.pop %v2399
    %v2401 = vsub.f32 1.0, %v2397
    %v2402 = vmul.f32 %v2401, %v2400
    %v2403 = vmul.f32 %v2397, %v1974
    %v2404 = vadd.f32 %v2402, %v2403
    %v2406 = vsel %vm138, %v2404, 0
    %2408 = vmatprep.subr.mxu0 0.0
    %2409 = vmatpush1.msra.mxu0 %v95
    %2410 = vmatprep.subr.mxu0 0.0
    %2411 = vmatpush1.msra.mxu0 %v96
    %2412 = vmatprep.subr.mxu0 0.0
    %2413 = vmatpush1.msra.mxu0 %v97
    %2414 = vmatprep.subr.mxu0 0.0
    %2415 = vmatpush1.msra.mxu0 %v98
    %2416 = vmatprep.subr.mxu0 0.0
    %2417 = vmatpush1.msra.mxu0 0.0
    %2418 = vmatprep.subr.mxu0 0.0
    %2419 = vmatpush1.msra.mxu0 0.0
    %2420 = vmatprep.subr.mxu0 0.0
    %2421 = vmatpush1.msra.mxu0 0.0
    %2422 = vmatprep.subr.mxu0 0.0
    %2423 = vmatpush1.msra.mxu0 0.0
    %2424 = vmatprep.subr.mxu0 0.0
    %2425 = vmatpush1.msra.mxu0 0.0
    %2426 = vmatprep.subr.mxu0 0.0
    %2427 = vmatpush1.msra.mxu0 0.0
    %2428 = vmatprep.subr.mxu0 0.0
    %2429 = vmatpush1.msra.mxu0 0.0
    %2430 = vmatprep.subr.mxu0 0.0
    %2431 = vmatpush1.msra.mxu0 0.0
    %2432 = vmatprep.subr.mxu0 0.0
    %2433 = vmatpush1.msra.mxu0 0.0
    %2434 = vmatprep.subr.mxu0 0.0
    %2435 = vmatpush1.msra.mxu0 0.0
    %2436 = vmatprep.subr.mxu0 0.0
    %2437 = vmatpush1.msra.mxu0 0.0
    %2438 = vmatprep.subr.mxu0 0.0
    %2439 = vmatpush1.msra.mxu0 0.0
    %2440 = vmatprep.subr.mxu0 0.0
    %2441 = vmatpush1.msra.mxu0 0.0
    %2442 = vmatprep.subr.mxu0 0.0
    %2443 = vmatpush1.msra.mxu0 0.0
    %2444 = vmatprep.subr.mxu0 0.0
    %2445 = vmatpush1.msra.mxu0 0.0
    %2446 = vmatprep.subr.mxu0 0.0
    %2447 = vmatpush1.msra.mxu0 0.0
    %2448 = vmatprep.subr.mxu0 0.0
    %2449 = vmatpush1.msra.mxu0 0.0
    %2450 = vmatprep.subr.mxu0 0.0
    %2451 = vmatpush1.msra.mxu0 0.0
    %2452 = vmatprep.subr.mxu0 0.0
    %2453 = vmatpush1.msra.mxu0 0.0
    %2454 = vmatprep.subr.mxu0 0.0
    %2455 = vmatpush1.msra.mxu0 0.0
    %2456 = vmatprep.subr.mxu0 0.0
    %2457 = vmatpush1.msra.mxu0 0.0
    %2458 = vmatprep.subr.mxu0 0.0
    %2459 = vmatpush1.msra.mxu0 0.0
    %2460 = vmatprep.subr.mxu0 0.0
    %2461 = vmatpush1.msra.mxu0 0.0
    %2462 = vmatprep.subr.mxu0 0.0
    %2463 = vmatpush1.msra.mxu0 0.0
    %2464 = vmatprep.subr.mxu0 0.0
    %2465 = vmatpush1.msra.mxu0 0.0
    %2466 = vmatprep.subr.mxu0 0.0
    %2467 = vmatpush1.msra.mxu0 0.0
    %2468 = vmatprep.subr.mxu0 0.0
    %2469 = vmatpush1.msra.mxu0 0.0
    %2470 = vmatprep.subr.mxu0 0.0
    %2471 = vmatpush1.msra.mxu0 0.0
    %2472 = vmatprep.mubr.f32.mxu0 0.0
    %2473 = vmatmul.mubr.f32.gmra.mrb[0].mxu0 %v2406
    %v2474 = vpop.f32.mrb[0].mxu0
    %v2475 = vadd.f32 %v99, %v2474
    %v2476 = vpop.f32.mrb[0].mxu0
    %2477 = vdwg.mxu0
    %2478 = vst [vmem:[#allocation12 + $0x4] sm:$0x1] %v2475
    %v2479 = vsel %vm761, %v2475, -inf
    %2480 = vmax.xlane.f32.xlu0 %v2479
    %v2481 = vpop.xlane.xlu0 %2480
    %vm2482 = vcmp.ge.f32.partialorder %v2475, %v2481
    %v2483 = vsel %vm2482, %v107, -128.0
    %v2484 = vsel %vm761, %v2483, -inf
    %2485 = vmax.xlane.f32.xlu0 %v2484
    %v2486 = vpop.xlane.xlu0 %2485
    %s2487 = vtos %v2486
    %s2488 = ssub.f32 0.0, %s2487
    %s2489 = scvt.f32.s32.to.zero.pseudo %s2488
    %s2490 = sld [smem:[#allocation2 + $0xc]]
    %s2491 = sld [smem:[#allocation2 + $0x6]]
    %p2492 = scmp.eq.s32.totalorder %s2490, 1
    %s2493 = scalar_select %p2492, %s2491, %s2489
    %p2494 = scmp.eq.s32.totalorder %s2071, 0
    %s2495 = scalar_select %p2494, 1, 0
    %s2496 = sadd.s32 %s2066, %s2495
    %p2497 = scmp.eq.s32.totalorder %s2490, 0
    %p2498 = scmp.eq.s32.totalorder %s2489, %s94
    %p2499 = pnand %p2497, %p2498
    %p2500 = pneg %p2499
    %s2501 = scalar_select %p2500, 1, %s2071
    %s2502 = scalar_lea.vmem [#allocation9], %s2493
    %v2503 = vld [vmem:[%s2502] sm:$0x1]
    %v2504 = vmax.f32 %v2503, 0.0
    %v2505 = vld [vmem:[#allocation7] sm:$0xff]
    %v2506 = vld [vmem:[#allocation7 + $0x8] sm:$0xff]
    %v2507 = vld [vmem:[#allocation7 + $0x10] sm:$0xff]
    %v2508 = vld [vmem:[#allocation7 + $0x18] sm:$0xff]
    %v2509 = vld [vmem:[#allocation7 + $0x20] sm:$0xff]
    %v2510 = vld [vmem:[#allocation7 + $0x28] sm:$0xff]
    %v2511 = vld [vmem:[#allocation7 + $0x30] sm:$0xff]
    %v2512 = vld [vmem:[#allocation7 + $0x38] sm:$0xff]
    %v2513 = vld [vmem:[#allocation7 + $0x40] sm:$0xff]
    %v2514 = vld [vmem:[#allocation7 + $0x48] sm:$0xff]
    %v2515 = vld [vmem:[#allocation7 + $0x50] sm:$0xff]
    %v2516 = vld [vmem:[#allocation7 + $0x58] sm:$0xff]
    %v2518 = vsel %vm138, %v2504, 0
    %2520 = vmatprep.subr.mxu0 %v2506
    %2521 = vmatpush1.msra.mxu0 %v2505
    %2522 = vmatprep.subr.mxu0 %v2509
    %2523 = vmatpush1.msra.mxu0 %v2508
    %2524 = vmatprep.subr.mxu0 %v2512
    %2525 = vmatpush1.msra.mxu0 %v2511
    %2526 = vmatprep.subr.mxu0 %v2515
    %2527 = vmatpush1.msra.mxu0 %v2514
    %2528 = vmatprep.subr.mxu0 0.0
    %2529 = vmatpush1.msra.mxu0 0.0
    %2530 = vmatprep.subr.mxu0 0.0
    %2531 = vmatpush1.msra.mxu0 0.0
    %2532 = vmatprep.subr.mxu0 0.0
    %2533 = vmatpush1.msra.mxu0 0.0
    %2534 = vmatprep.subr.mxu0 0.0
    %2535 = vmatpush1.msra.mxu0 0.0
    %2536 = vmatprep.subr.mxu0 0.0
    %2537 = vmatpush1.msra.mxu0 0.0
    %2538 = vmatprep.subr.mxu0 0.0
    %2539 = vmatpush1.msra.mxu0 0.0
    %2540 = vmatprep.subr.mxu0 0.0
    %2541 = vmatpush1.msra.mxu0 0.0
    %2542 = vmatprep.subr.mxu0 0.0
    %2543 = vmatpush1.msra.mxu0 0.0
    %2544 = vmatprep.subr.mxu0 0.0
    %2545 = vmatpush1.msra.mxu0 0.0
    %2546 = vmatprep.subr.mxu0 0.0
    %2547 = vmatpush1.msra.mxu0 0.0
    %2548 = vmatprep.subr.mxu0 0.0
    %2549 = vmatpush1.msra.mxu0 0.0
    %2550 = vmatprep.subr.mxu0 0.0
    %2551 = vmatpush1.msra.mxu0 0.0
    %2552 = vmatprep.subr.mxu0 0.0
    %2553 = vmatpush1.msra.mxu0 0.0
    %2554 = vmatprep.subr.mxu0 0.0
    %2555 = vmatpush1.msra.mxu0 0.0
    %2556 = vmatprep.subr.mxu0 0.0
    %2557 = vmatpush1.msra.mxu0 0.0
    %2558 = vmatprep.subr.mxu0 0.0
    %2559 = vmatpush1.msra.mxu0 0.0
    %2560 = vmatprep.subr.mxu0 0.0
    %2561 = vmatpush1.msra.mxu0 0.0
    %2562 = vmatprep.subr.mxu0 0.0
    %2563 = vmatpush1.msra.mxu0 0.0
    %2564 = vmatprep.subr.mxu0 0.0
    %2565 = vmatpush1.msra.mxu0 0.0
    %2566 = vmatprep.subr.mxu0 0.0
    %2567 = vmatpush1.msra.mxu0 0.0
    %2568 = vmatprep.subr.mxu0 0.0
    %2569 = vmatpush1.msra.mxu0 0.0
    %2570 = vmatprep.subr.mxu0 0.0
    %2571 = vmatpush1.msra.mxu0 0.0
    %2572 = vmatprep.subr.mxu0 0.0
    %2573 = vmatpush1.msra.mxu0 0.0
    %2574 = vmatprep.subr.mxu0 0.0
    %2575 = vmatpush1.msra.mxu0 0.0
    %2576 = vmatprep.subr.mxu0 0.0
    %2577 = vmatpush1.msra.mxu0 0.0
    %2578 = vmatprep.subr.mxu0 0.0
    %2579 = vmatpush1.msra.mxu0 0.0
    %2580 = vmatprep.subr.mxu0 0.0
    %2581 = vmatpush1.msra.mxu0 0.0
    %2582 = vmatprep.subr.mxu0 0.0
    %2583 = vmatpush1.msra.mxu0 0.0
    %2584 = vmatprep.mubr.f32.mxu0 0.0
    %2585 = vmatmul.mubr.f32.gmra.mrb[0].mxu0 %v2518
    %v2586 = vpop.f32.mrb[0].mxu0
    %v2587 = vadd.f32 %v337, %v2586
    %v2588 = vpop.f32.mrb[0].mxu0
    %v2589 = vadd.f32 %v341, %v2588
    %2590 = vdwg.mxu0
    %2591 = vmatprep.subr.mxu0 0.0
    %2592 = vmatpush1.msra.mxu0 %v2507
    %2593 = vmatprep.subr.mxu0 0.0
    %2594 = vmatpush1.msra.mxu0 %v2510
    %2595 = vmatprep.subr.mxu0 0.0
    %2596 = vmatpush1.msra.mxu0 %v2513
    %2597 = vmatprep.subr.mxu0 0.0
    %2598 = vmatpush1.msra.mxu0 %v2516
    %2599 = vmatprep.subr.mxu0 0.0
    %2600 = vmatpush1.msra.mxu0 0.0
    %2601 = vmatprep.subr.mxu0 0.0
    %2602 = vmatpush1.msra.mxu0 0.0
    %2603 = vmatprep.subr.mxu0 0.0
    %2604 = vmatpush1.msra.mxu0 0.0
    %2605 = vmatprep.subr.mxu0 0.0
    %2606 = vmatpush1.msra.mxu0 0.0
    %2607 = vmatprep.subr.mxu0 0.0
    %2608 = vmatpush1.msra.mxu0 0.0
    %2609 = vmatprep.subr.mxu0 0.0
    %2610 = vmatpush1.msra.mxu0 0.0
    %2611 = vmatprep.subr.mxu0 0.0
    %2612 = vmatpush1.msra.mxu0 0.0
    %2613 = vmatprep.subr.mxu0 0.0
    %2614 = vmatpush1.msra.mxu0 0.0
    %2615 = vmatprep.subr.mxu0 0.0
    %2616 = vmatpush1.msra.mxu0 0.0
    %2617 = vmatprep.subr.mxu0 0.0
    %2618 = vmatpush1.msra.mxu0 0.0
    %2619 = vmatprep.subr.mxu0 0.0
    %2620 = vmatpush1.msra.mxu0 0.0
    %2621 = vmatprep.subr.mxu0 0.0
    %2622 = vmatpush1.msra.mxu0 0.0
    %2623 = vmatprep.subr.mxu0 0.0
    %2624 = vmatpush1.msra.mxu0 0.0
    %2625 = vmatprep.subr.mxu0 0.0
    %2626 = vmatpush1.msra.mxu0 0.0
    %2627 = vmatprep.subr.mxu0 0.0
    %2628 = vmatpush1.msra.mxu0 0.0
    %2629 = vmatprep.subr.mxu0 0.0
    %2630 = vmatpush1.msra.mxu0 0.0
    %2631 = vmatprep.subr.mxu0 0.0
    %2632 = vmatpush1.msra.mxu0 0.0
    %2633 = vmatprep.subr.mxu0 0.0
    %2634 = vmatpush1.msra.mxu0 0.0
    %2635 = vmatprep.subr.mxu0 0.0
    %2636 = vmatpush1.msra.mxu0 0.0
    %2637 = vmatprep.subr.mxu0 0.0
    %2638 = vmatpush1.msra.mxu0 0.0
    %2639 = vmatprep.subr.mxu0 0.0
    %2640 = vmatpush1.msra.mxu0 0.0
    %2641 = vmatprep.subr.mxu0 0.0
    %2642 = vmatpush1.msra.mxu0 0.0
    %2643 = vmatprep.subr.mxu0 0.0
    %2644 = vmatpush1.msra.mxu0 0.0
    %2645 = vmatprep.subr.mxu0 0.0
    %2646 = vmatpush1.msra.mxu0 0.0
    %2647 = vmatprep.subr.mxu0 0.0
    %2648 = vmatpush1.msra.mxu0 0.0
    %2649 = vmatprep.subr.mxu0 0.0
    %2650 = vmatpush1.msra.mxu0 0.0
    %2651 = vmatprep.subr.mxu0 0.0
    %2652 = vmatpush1.msra.mxu0 0.0
    %2653 = vmatprep.subr.mxu0 0.0
    %2654 = vmatpush1.msra.mxu0 0.0
    %2655 = vmatprep.mubr.f32.mxu0 0.0
    %2656 = vmatmul.mubr.f32.gmra.mrb[0].mxu0 %v2518
    %v2657 = vpop.f32.mrb[0].mxu0
    %v2658 = vadd.f32 %v345, %v2657
    %v2659 = vpop.f32.mrb[0].mxu0
    %2660 = vdwg.mxu0
    %v2661 = vld [vmem:[%s493] sm:$0xff]
    %v2662 = vld [vmem:[%s493 + $0x8] sm:$0xff]
    %v2663 = vld [vmem:[%s493 + $0x10] sm:$0xff]
    %v2664 = vld [vmem:[%s493 + $0x18] sm:$0xff]
    %v2665 = vld [vmem:[%s493 + $0x20] sm:$0xff]
    %v2666 = vld [vmem:[%s493 + $0x28] sm:$0xff]
    %v2667 = vld [vmem:[%s493 + $0x30] sm:$0xff]
    %v2668 = vld [vmem:[%s493 + $0x38] sm:$0xff]
    %v2669 = vld [vmem:[%s493 + $0x40] sm:$0xff]
    %v2670 = vld [vmem:[%s493 + $0x48] sm:$0xff]
    %v2671 = vld [vmem:[%s493 + $0x50] sm:$0xff]
    %v2672 = vld [vmem:[%s493 + $0x58] sm:$0xff]
    %2673 = vmatprep.subr.mxu0 %v2662
    %2674 = vmatpush1.msra.mxu0 %v2661
    %2675 = vmatprep.subr.mxu0 %v2665
    %2676 = vmatpush1.msra.mxu0 %v2664
    %2677 = vmatprep.subr.mxu0 %v2668
    %2678 = vmatpush1.msra.mxu0 %v2667
    %2679 = vmatprep.subr.mxu0 %v2671
    %2680 = vmatpush1.msra.mxu0 %v2670
    %2681 = vmatprep.subr.mxu0 0.0
    %2682 = vmatpush1.msra.mxu0 0.0
    %2683 = vmatprep.subr.mxu0 0.0
    %2684 = vmatpush1.msra.mxu0 0.0
    %2685 = vmatprep.subr.mxu0 0.0
    %2686 = vmatpush1.msra.mxu0 0.0
    %2687 = vmatprep.subr.mxu0 0.0
    %2688 = vmatpush1.msra.mxu0 0.0
    %2689 = vmatprep.subr.mxu0 0.0
    %2690 = vmatpush1.msra.mxu0 0.0
    %2691 = vmatprep.subr.mxu0 0.0
    %2692 = vmatpush1.msra.mxu0 0.0
    %2693 = vmatprep.subr.mxu0 0.0
    %2694 = vmatpush1.msra.mxu0 0.0
    %2695 = vmatprep.subr.mxu0 0.0
    %2696 = vmatpush1.msra.mxu0 0.0
    %2697 = vmatprep.subr.mxu0 0.0
    %2698 = vmatpush1.msra.mxu0 0.0
    %2699 = vmatprep.subr.mxu0 0.0
    %2700 = vmatpush1.msra.mxu0 0.0
    %2701 = vmatprep.subr.mxu0 0.0
    %2702 = vmatpush1.msra.mxu0 0.0
    %2703 = vmatprep.subr.mxu0 0.0
    %2704 = vmatpush1.msra.mxu0 0.0
    %2705 = vmatprep.subr.mxu0 0.0
    %2706 = vmatpush1.msra.mxu0 0.0
    %2707 = vmatprep.subr.mxu0 0.0
    %2708 = vmatpush1.msra.mxu0 0.0
    %2709 = vmatprep.subr.mxu0 0.0
    %2710 = vmatpush1.msra.mxu0 0.0
    %2711 = vmatprep.subr.mxu0 0.0
    %2712 = vmatpush1.msra.mxu0 0.0
    %2713 = vmatprep.subr.mxu0 0.0
    %2714 = vmatpush1.msra.mxu0 0.0
    %2715 = vmatprep.subr.mxu0 0.0
    %2716 = vmatpush1.msra.mxu0 0.0
    %2717 = vmatprep.subr.mxu0 0.0
    %2718 = vmatpush1.msra.mxu0 0.0
    %2719 = vmatprep.subr.mxu0 0.0
    %2720 = vmatpush1.msra.mxu0 0.0
    %2721 = vmatprep.subr.mxu0 0.0
    %2722 = vmatpush1.msra.mxu0 0.0
    %2723 = vmatprep.subr.mxu0 0.0
    %2724 = vmatpush1.msra.mxu0 0.0
    %2725 = vmatprep.subr.mxu0 0.0
    %2726 = vmatpush1.msra.mxu0 0.0
    %2727 = vmatprep.subr.mxu0 0.0
    %2728 = vmatpush1.msra.mxu0 0.0
    %2729 = vmatprep.subr.mxu0 0.0
    %2730 = vmatpush1.msra.mxu0 0.0
    %2731 = vmatprep.subr.mxu0 0.0
    %2732 = vmatpush1.msra.mxu0 0.0
    %2733 = vmatprep.subr.mxu0 0.0
    %2734 = vmatpush1.msra.mxu0 0.0
    %2735 = vmatprep.subr.mxu0 0.0
    %2736 = vmatpush1.msra.mxu0 0.0
    %2737 = vmatprep.mubr.f32.mxu0 0.0
    %2738 = vmatmul.mubr.f32.gmra.mrb[0].mxu0 %v2406
    %v2739 = vpop.f32.mrb[0].mxu0
    %v2740 = vadd.f32 %v510, %v2739
    %v2741 = vpop.f32.mrb[0].mxu0
    %v2742 = vadd.f32 %v514, %v2741
    %2743 = vdwg.mxu0
    %2744 = vmatprep.subr.mxu0 0.0
    %2745 = vmatpush1.msra.mxu0 %v2663
    %2746 = vmatprep.subr.mxu0 0.0
    %2747 = vmatpush1.msra.mxu0 %v2666
    %2748 = vmatprep.subr.mxu0 0.0
    %2749 = vmatpush1.msra.mxu0 %v2669
    %2750 = vmatprep.subr.mxu0 0.0
    %2751 = vmatpush1.msra.mxu0 %v2672
    %2752 = vmatprep.subr.mxu0 0.0
    %2753 = vmatpush1.msra.mxu0 0.0
    %2754 = vmatprep.subr.mxu0 0.0
    %2755 = vmatpush1.msra.mxu0 0.0
    %2756 = vmatprep.subr.mxu0 0.0
    %2757 = vmatpush1.msra.mxu0 0.0
    %2758 = vmatprep.subr.mxu0 0.0
    %2759 = vmatpush1.msra.mxu0 0.0
    %2760 = vmatprep.subr.mxu0 0.0
    %2761 = vmatpush1.msra.mxu0 0.0
    %2762 = vmatprep.subr.mxu0 0.0
    %2763 = vmatpush1.msra.mxu0 0.0
    %2764 = vmatprep.subr.mxu0 0.0
    %2765 = vmatpush1.msra.mxu0 0.0
    %2766 = vmatprep.subr.mxu0 0.0
    %2767 = vmatpush1.msra.mxu0 0.0
    %2768 = vmatprep.subr.mxu0 0.0
    %2769 = vmatpush1.msra.mxu0 0.0
    %2770 = vmatprep.subr.mxu0 0.0
    %2771 = vmatpush1.msra.mxu0 0.0
    %2772 = vmatprep.subr.mxu0 0.0
    %2773 = vmatpush1.msra.mxu0 0.0
    %2774 = vmatprep.subr.mxu0 0.0
    %2775 = vmatpush1.msra.mxu0 0.0
    %2776 = vmatprep.subr.mxu0 0.0
    %2777 = vmatpush1.msra.mxu0 0.0
    %2778 = vmatprep.subr.mxu0 0.0
    %2779 = vmatpush1.msra.mxu0 0.0
    %2780 = vmatprep.subr.mxu0 0.0
    %2781 = vmatpush1.msra.mxu0 0.0
    %2782 = vmatprep.subr.mxu0 0.0
    %2783 = vmatpush1.msra.mxu0 0.0
    %2784 = vmatprep.subr.mxu0 0.0
    %2785 = vmatpush1.msra.mxu0 0.0
    %2786 = vmatprep.subr.mxu0 0.0
    %2787 = vmatpush1.msra.mxu0 0.0
    %2788 = vmatprep.subr.mxu0 0.0
    %2789 = vmatpush1.msra.mxu0 0.0
    %2790 = vmatprep.subr.mxu0 0.0
    %2791 = vmatpush1.msra.mxu0 0.0
    %2792 = vmatprep.subr.mxu0 0.0
    %2793 = vmatpush1.msra.mxu0 0.0
    %2794 = vmatprep.subr.mxu0 0.0
    %2795 = vmatpush1.msra.mxu0 0.0
    %2796 = vmatprep.subr.mxu0 0.0
    %2797 = vmatpush1.msra.mxu0 0.0
    %2798 = vmatprep.subr.mxu0 0.0
    %2799 = vmatpush1.msra.mxu0 0.0
    %2800 = vmatprep.subr.mxu0 0.0
    %2801 = vmatpush1.msra.mxu0 0.0
    %2802 = vmatprep.subr.mxu0 0.0
    %2803 = vmatpush1.msra.mxu0 0.0
    %2804 = vmatprep.subr.mxu0 0.0
    %2805 = vmatpush1.msra.mxu0 0.0
    %2806 = vmatprep.subr.mxu0 0.0
    %2807 = vmatpush1.msra.mxu0 0.0
    %2808 = vmatprep.mubr.f32.mxu0 0.0
    %2809 = vmatmul.mubr.f32.gmra.mrb[0].mxu0 %v2406
    %v2810 = vpop.f32.mrb[0].mxu0
    %v2811 = vadd.f32 %v518, %v2810
    %v2812 = vpop.f32.mrb[0].mxu0
    %2813 = vdwg.mxu0
    %v2814 = vadd.f32 %v2587, %v2740
    %v2815 = vxor.u32 %v2814, 2147483648
    %v2816 = vmul.f32 %v2815, 1.442695
    %v2817 = vpow.pop %v2816
    %v2818 = vadd.f32 %v2817, 1.0
    %v2819 = vrcp.pop %v2818
    %v2820 = vmul.f32 1.0, %v2819
    %v2821 = vadd.f32 %v2589, %v2742
    %v2822 = vxor.u32 %v2821, 2147483648
    %v2823 = vmul.f32 %v2822, 1.442695
    %v2824 = vpow.pop %v2823
    %v2825 = vadd.f32 %v2824, 1.0
    %v2826 = vrcp.pop %v2825
    %v2827 = vmul.f32 1.0, %v2826
    %v2828 = vmul.f32 %v2820, %v2811
    %v2829 = vadd.f32 %v2658, %v2828
    %v2830 = vtanh.pop %v2829
    %v2831 = vsub.f32 1.0, %v2827
    %v2832 = vmul.f32 %v2831, %v2830
    %v2833 = vmul.f32 %v2827, %v2404
    %v2834 = vadd.f32 %v2832, %v2833
    %v2836 = vsel %vm138, %v2834, 0
    %2838 = vmatprep.subr.mxu0 0.0
    %2839 = vmatpush1.msra.mxu0 %v95
    %2840 = vmatprep.subr.mxu0 0.0
    %2841 = vmatpush1.msra.mxu0 %v96
    %2842 = vmatprep.subr.mxu0 0.0
    %2843 = vmatpush1.msra.mxu0 %v97
    %2844 = vmatprep.subr.mxu0 0.0
    %2845 = vmatpush1.msra.mxu0 %v98
    %2846 = vmatprep.subr.mxu0 0.0
    %2847 = vmatpush1.msra.mxu0 0.0
    %2848 = vmatprep.subr.mxu0 0.0
    %2849 = vmatpush1.msra.mxu0 0.0
    %2850 = vmatprep.subr.mxu0 0.0
    %2851 = vmatpush1.msra.mxu0 0.0
    %2852 = vmatprep.subr.mxu0 0.0
    %2853 = vmatpush1.msra.mxu0 0.0
    %2854 = vmatprep.subr.mxu0 0.0
    %2855 = vmatpush1.msra.mxu0 0.0
    %2856 = vmatprep.subr.mxu0 0.0
    %2857 = vmatpush1.msra.mxu0 0.0
    %2858 = vmatprep.subr.mxu0 0.0
    %2859 = vmatpush1.msra.mxu0 0.0
    %2860 = vmatprep.subr.mxu0 0.0
    %2861 = vmatpush1.msra.mxu0 0.0
    %2862 = vmatprep.subr.mxu0 0.0
    %2863 = vmatpush1.msra.mxu0 0.0
    %2864 = vmatprep.subr.mxu0 0.0
    %2865 = vmatpush1.msra.mxu0 0.0
    %2866 = vmatprep.subr.mxu0 0.0
    %2867 = vmatpush1.msra.mxu0 0.0
    %2868 = vmatprep.subr.mxu0 0.0
    %2869 = vmatpush1.msra.mxu0 0.0
    %2870 = vmatprep.subr.mxu0 0.0
    %2871 = vmatpush1.msra.mxu0 0.0
    %2872 = vmatprep.subr.mxu0 0.0
    %2873 = vmatpush1.msra.mxu0 0.0
    %2874 = vmatprep.subr.mxu0 0.0
    %2875 = vmatpush1.msra.mxu0 0.0
    %2876 = vmatprep.subr.mxu0 0.0
    %2877 = vmatpush1.msra.mxu0 0.0
    %2878 = vmatprep.subr.mxu0 0.0
    %2879 = vmatpush1.msra.mxu0 0.0
    %2880 = vmatprep.subr.mxu0 0.0
    %2881 = vmatpush1.msra.mxu0 0.0
    %2882 = vmatprep.subr.mxu0 0.0
    %2883 = vmatpush1.msra.mxu0 0.0
    %2884 = vmatprep.subr.mxu0 0.0
    %2885 = vmatpush1.msra.mxu0 0.0
    %2886 = vmatprep.subr.mxu0 0.0
    %2887 = vmatpush1.msra.mxu0 0.0
    %2888 = vmatprep.subr.mxu0 0.0
    %2889 = vmatpush1.msra.mxu0 0.0
    %2890 = vmatprep.subr.mxu0 0.0
    %2891 = vmatpush1.msra.mxu0 0.0
    %2892 = vmatprep.subr.mxu0 0.0
    %2893 = vmatpush1.msra.mxu0 0.0
    %2894 = vmatprep.subr.mxu0 0.0
    %2895 = vmatpush1.msra.mxu0 0.0
    %2896 = vmatprep.subr.mxu0 0.0
    %2897 = vmatpush1.msra.mxu0 0.0
    %2898 = vmatprep.subr.mxu0 0.0
    %2899 = vmatpush1.msra.mxu0 0.0
    %2900 = vmatprep.subr.mxu0 0.0
    %2901 = vmatpush1.msra.mxu0 0.0
    %2902 = vmatprep.mubr.f32.mxu0 0.0
    %2903 = vmatmul.mubr.f32.gmra.mrb[0].mxu0 %v2836
    %v2904 = vpop.f32.mrb[0].mxu0
    %v2905 = vadd.f32 %v99, %v2904
    %v2906 = vpop.f32.mrb[0].mxu0
    %2907 = vdwg.mxu0
    %2908 = vst [vmem:[#allocation12 + $0x5] sm:$0x1] %v2905
    %p2909 = scmp.eq.s32.totalorder %s2501, 0
    %s2910 = scalar_select %p2909, 1, 0
    %s2911 = sadd.s32 %s2496, %s2910
    %v2912 = vld [vmem:[#allocation12] sm:$0xff]
    %2913 = vmax.xlane.f32.xlu0 %v2912
    %v2914 = vpop.xlane.xlu0 %2913
    %v2915 = vsub.f32 %v2912, %v2914
    %v2916 = vmul.f32 %v2915, 1.442695
    %v2917 = vpow.pop %v2916
    %2918 = vadd.xlane.f32.xlu0 %v2917
    %v2919 = vpop.xlane.xlu0 %2918
    %v2920 = vlog2.pop %v2919
    %v2921 = vmul.f32 %v2920, 0.6931472
    %v2922 = vadd.f32 %v2914, %v2921
    %v2923 = vlaneseq
    %v2924 = vshrl.u32 %v2923, 7
    %v2925 = vstv %s2911
    %vm2926 = vcmp.lt.s32.totalorder %v2924, %v2925
    %v2927 = vsub.f32 %v2912, %v2922
    %v2928 = vsel %vm2926, %v2927, 0.0
    %2929 = vst [vmem:[#allocation12] sm:$0xff] %v2928
    // Predicated region
    $region50: #{tpu_custom_call.1} parent=1 // pred_check
      _
    $region51: #{tpu_custom_call.1} parent=1 // pred_check_branch
      %2931 = sbr.rel (0) target = $region53
    $region52: #{tpu_custom_call.1} parent=1 // pred_region
      %s2933 = ssub.s32 128, 128
      %2934 = vsyncadd [#allocation4], %s2933
      %s2936 = sshll.u32 [#allocation12], 4
      %s2937 = int_to_ptr.vmem [resolvable:$true] %s2936
      %2939 = dma.vmem_to_hbm [thread:$0]  %s2937, 128, %s7, [#allocation4]
    $region53: #{tpu_custom_call.1} parent=1 // pred_fallthru
      _
    // Predicated region
    $region54: #{tpu_custom_call.1} parent=1 // pred_check
      _
    $region55: #{tpu_custom_call.1} parent=1 // pred_check_branch
      %2941 = sbr.rel (0) target = $region57
    $region56: #{tpu_custom_call.1} parent=1 // pred_region
      %2942 = dma.done [#allocation4], 128
    $region57: #{tpu_custom_call.1} parent=1 // pred_fallthru
      _
    %2943 = vsyncpa [#allocation3], 1
    %2944 = vsyncpa [#allocation8], 1
    %2945 = vsyncpa [#allocation11], 1
    %2946 = vsyncpa [#allocation4], 1
    %2947 = vsyncpa [#allocation5], 1

</llo_original>
